<compile_context>
chip_gen: v7x
topology: tpu7x:2x2x1
jax: 0.10.0
libtpu: 0.0.40
codegen_flags: <defaults>
</compile_context>

<pallas_src>
import functools
import math

import jax
import jax.numpy as jnp
from jax import lax
from jax.experimental import pallas as pl
from jax.experimental.pallas import tpu as pltpu


# ---------------------------------------------------------------------------
# Fused kernel
# ---------------------------------------------------------------------------

def _softmax_last(x):
    """Numerically-stable softmax over the last axis, EUP reciprocal for the denom."""
    x = x - jnp.max(x, axis=-1, keepdims=True)
    e = jnp.exp(x)
    return e * pl.reciprocal(jnp.sum(e, axis=-1, keepdims=True), approx=True)


def _tatlmp_fused_kernel(
    # data (per-batch blocks)
    af_ref, at_ref, poly_ref, h_ref, gum_ref,
    # weight_mlp (W1 split into ef / agent halves, W2 as a row, scalar biases as (1,1))
    wm_w1e_ref, wm_w1a_ref, wm_b1_ref, wm_w2_ref, wm_b2_ref,
    # merged distribution/factor first layer (split into edge-feature / edge-type rows)
    df_w1ef_ref, df_w1et_ref, df_b1_ref,
    # distribution second layer, factor second layer
    d_w2_ref, d_b2_ref, f_w2_ref, f_b2_ref,
    # learned type embeddings
    temb_ref,
    # folded MHA projections
    wq_ref, bq_ref, wkv_ref, bkv_ref, wo_ref, bo_ref,
    # output MLP (W1 split into agent-cat / polyline-new halves)
    o_w1a_ref, o_w1p_ref, o_b1_ref, o_w2_ref, o_b2_ref,
    # outputs
    agent_out_ref, poly_out_ref,
    # scratch
    attn_scr,
    *, num_heads,
):
    af = af_ref[0]          # (A, D)
    at = at_ref[0]          # (A, T)
    poly = poly_ref[0]      # (P, n_in)
    H = h_ref[0]            # (E, A)
    gum = gum_ref[0]        # (E, edge_types)

    w1e = wm_w1e_ref[...]   # (D, dh)
    w1a = wm_w1a_ref[...]   # (D, dh)
    b1 = wm_b1_ref[...]     # (1, dh)
    w2row = wm_w2_ref[...]  # (1, dh)
    b2 = wm_b2_ref[...]     # (1, 1)
    dh = d_w2_ref.shape[0]
    n_out = wo_ref.shape[0]

    # ---- level 1: agent -> edge aggregation --------------------------------
    ef0 = jnp.dot(H, af, preferred_element_type=jnp.float32)        # (E, D)
    etype = jnp.dot(H, at, preferred_element_type=jnp.float32)      # (E, T)

    # weight_mlp(concat(edge_feat_init_rep, agent_feat_rep)) decomposed through W1:
    ga = jnp.dot(af, w1a, preferred_element_type=jnp.float32)       # (A, dh)
    he1 = jnp.dot(ef0, w1e, preferred_element_type=jnp.float32)     # (E, dh)
    hid1 = jnp.maximum(he1[:, None, :] + ga[None, :, :] + b1[:, None, :], 0.0)  # (E, A, dh)
    ew1 = jnp.sum(hid1 * w2row[:, None, :], axis=-1) + b2           # (E, A)

    # softmax(edges_weight * H, dim=agents) * H
    Hw1 = _softmax_last(ew1 * H) * H
    # TODO(synk): reference matmuls against the clobbered 4-D agent_features; intended
    # (E,A)@(A,D) contraction with the original agent features is used.
    edge_features = jnp.dot(Hw1, af, preferred_element_type=jnp.float32)  # (E, D)

    # ---- edge type embedding (merged distribution/factor MLPs) --------------
    # TODO(synk): reference calls torch.concatenate without dim; dim=-1 intended.
    hdf = jnp.maximum(
        jnp.dot(edge_features, df_w1ef_ref[...], preferred_element_type=jnp.float32)
        + jnp.dot(etype, df_w1et_ref[...], preferred_element_type=jnp.float32)
        + df_b1_ref[...], 0.0)                                       # (E, 2*dh)
    hd_ = hdf[:, :dh]
    hf_ = hdf[:, dh:]
    dist_logits = (jnp.dot(hd_, d_w2_ref[...], preferred_element_type=jnp.float32)
                   + d_b2_ref[...])                                  # (E, edge_types)
    # gumbel_softmax, tau = 1/2, hard=False
    distribution = _softmax_last((dist_logits + gum) * 2.0)
    factor_logit = jnp.sum(hf_ * f_w2_ref[...], axis=-1, keepdims=True) + f_b2_ref[...]
    factor = 1.0 / (1.0 + jnp.exp(-factor_logit))                    # (E, 1)
    # TODO(synk): reference multiplies distribution elementwise by the (edge_types, h_dim)
    # table (shape bug); intended mixture distribution @ table is used.
    ete = factor * jnp.dot(distribution, temb_ref[...],
                           preferred_element_type=jnp.float32)       # (E, D)

    # ---- level 2: edge -> agent message passing -----------------------------
    # TODO(synk): `edge_type_feature_embedding` is used before assignment in the
    # reference; interpreted as the edge_type_embedding computed above.
    # TODO(synk): reference uses `self.weight_mlp` (missing underscore); _weight_mlp used.
    ge2 = jnp.dot(ete, w1e, preferred_element_type=jnp.float32)      # (E, dh)
    pre2 = H[:, :, None] * (ge2[:, None, :] + ga[None, :, :]) + b1[:, None, :]
    hid2 = jnp.maximum(pre2, 0.0)                                    # (E, A, dh)
    w2out = jnp.sum(hid2 * w2row[:, None, :], axis=-1) + b2          # (E, A)
    w2act = jnp.where(w2out >= 0.0, w2out, 0.01 * w2out)             # leaky_relu
    Hw2 = _softmax_last(w2act) * H                                   # (E, A)

    ef_cat = jnp.concatenate([edge_features, ete], axis=-1)          # (E, 2D)
    # contract over E (no explicit transpose): (E,A)^T @ (E,2D) -> (A, 2D)
    agent_agg = lax.dot_general(Hw2, ef_cat, (((0,), (0,)), ((), ())),
                                preferred_element_type=jnp.float32)
    afc = jnp.concatenate([agent_agg, af], axis=-1)                  # (A, 3D)

    # ---- MHA block (projections pre-folded at trace time) -------------------
    Q2 = jnp.dot(afc, wq_ref[...], preferred_element_type=jnp.float32) + bq_ref[...]
    KV = jnp.dot(poly, wkv_ref[...], preferred_element_type=jnp.float32) + bkv_ref[...]
    K2 = KV[:, :n_out]
    V2 = KV[:, n_out:]
    hd_sz = n_out // num_heads
    scale = 1.0 / math.sqrt(hd_sz)
    for h in range(num_heads):                      # static unroll over heads
        qh = Q2[:, h * hd_sz:(h + 1) * hd_sz]
        kh = K2[:, h * hd_sz:(h + 1) * hd_sz]
        vh = V2[:, h * hd_sz:(h + 1) * hd_sz]
        s = lax.dot_general(qh, kh, (((1,), (1,)), ((), ())),
                            preferred_element_type=jnp.float32) * scale
        p = _softmax_last(s)
        attn_scr[:, h * hd_sz:(h + 1) * hd_sz] = jnp.dot(
            p, vh, preferred_element_type=jnp.float32)
    attn = attn_scr[...]                                             # (A, n_out)
    pnew = jnp.dot(attn, wo_ref[...], preferred_element_type=jnp.float32) + bo_ref[...]
    poly_out_ref[0] = pnew.astype(poly_out_ref.dtype)

    # ---- output MLP ----------------------------------------------------------
    ho = jnp.maximum(
        jnp.dot(afc, o_w1a_ref[...], preferred_element_type=jnp.float32)
        + jnp.dot(pnew, o_w1p_ref[...], preferred_element_type=jnp.float32)
        + o_b1_ref[...], 0.0)
    aout = jnp.dot(ho, o_w2_ref[...], preferred_element_type=jnp.float32) + o_b2_ref[...]
    agent_out_ref[0] = aout.astype(agent_out_ref.dtype)


# ---------------------------------------------------------------------------
# Parameter init (deterministic, synthetic)
# ---------------------------------------------------------------------------

def _mlp_params(key, din, dhid, dout):
    k1, k2 = jax.random.split(key)
    return {
        "w1": jax.random.normal(k1, (din, dhid), jnp.float32) / math.sqrt(din),
        "b1": jnp.zeros((dhid,), jnp.float32),
        "w2": jax.random.normal(k2, (dhid, dout), jnp.float32) / math.sqrt(dhid),
        "b2": jnp.zeros((dout,), jnp.float32),
    }


def _lin_params(key, din, dout):
    return {"w": jax.random.normal(key, (din, dout), jnp.float32) / math.sqrt(din),
            "b": jnp.zeros((dout,), jnp.float32)}


def init_params(key, D, T, edge_types, n_in_mha, n_out_mha, mlp_hidden=64):
    keys = jax.random.split(key, 12)
    p = {
        "weight_mlp": _mlp_params(keys[0], 2 * D, mlp_hidden, 1),
        "distribution_mlp": _mlp_params(keys[1], D + T, mlp_hidden, edge_types),
        "factor_mlp": _mlp_params(keys[2], D + T, mlp_hidden, 1),
        "output_mlp": _mlp_params(keys[3], 3 * D + n_out_mha, 2 * D, D),
        # MHA module's _q/_k/_v Linears (weights stored (in, out))
        "q_proj": _lin_params(keys[4], n_in_mha, n_out_mha),
        "k_proj": _lin_params(keys[5], n_in_mha, n_out_mha),
        "v_proj": _lin_params(keys[6], n_in_mha, n_out_mha),
        # nn.MultiheadAttention in-proj (per Q/K/V) and out-proj
        "in_q": _lin_params(keys[7], n_out_mha, n_out_mha),
        "in_k": _lin_params(keys[8], n_out_mha, n_out_mha),
        "in_v": _lin_params(keys[9], n_out_mha, n_out_mha),
        "out_proj": _lin_params(keys[10], n_out_mha, n_out_mha),
    }
    limit = math.sqrt(6.0 / (edge_types + D))  # xavier_uniform for type embeddings
    p["type_emb"] = jax.random.uniform(keys[11], (edge_types, D), jnp.float32, -limit, limit)
    return p


# ---------------------------------------------------------------------------
# TATLMPLayer forward (single fused pallas_call)
# ---------------------------------------------------------------------------

def tatlmp_forward(params, agent_features, agent_types, polyline_features, H,
                   gumbel_key, num_heads=4):
    B, A, D = agent_features.shape
    E = H.shape[1]
    n_out = params["q_proj"]["w"].shape[1]
    edge_types = params["type_emb"].shape[0]
    dh = params["weight_mlp"]["w1"].shape[1]

    # TODO(synk): gumbel noise could be generated in-kernel with pltpu.prng_seed /
    # pltpu.prng_random_bits; kept as a tiny prefetched input for deterministic RNG.
    gumbel = jax.random.gumbel(gumbel_key, (B, E, edge_types), jnp.float32)

    # ---- trace-time weight folding / splitting (free, runs once under jit) ----
    wm = params["weight_mlp"]
    dist = params["distribution_mlp"]
    fac = params["factor_mlp"]
    om = params["output_mlp"]

    wq_eff = params["q_proj"]["w"] @ params["in_q"]["w"]
    bq_eff = params["q_proj"]["b"] @ params["in_q"]["w"] + params["in_q"]["b"]
    wk_eff = params["k_proj"]["w"] @ params["in_k"]["w"]
    bk_eff = params["k_proj"]["b"] @ params["in_k"]["w"] + params["in_k"]["b"]
    wv_eff = params["v_proj"]["w"] @ params["in_v"]["w"]
    bv_eff = params["v_proj"]["b"] @ params["in_v"]["w"] + params["in_v"]["b"]

    df_w1 = jnp.concatenate([dist["w1"], fac["w1"]], axis=1)    # (D+T, 2*dh)
    df_b1 = jnp.concatenate([dist["b1"], fac["b1"]], axis=0)    # (2*dh,)

    weights = [
        # weight_mlp
        wm["w1"][:D], wm["w1"][D:], wm["b1"].reshape(1, dh),
        wm["w2"].reshape(1, dh), wm["b2"].reshape(1, 1),
        # merged dist/factor first layer
        df_w1[:D], df_w1[D:], df_b1.reshape(1, 2 * dh),
        # dist / factor second layers
        dist["w2"], dist["b2"].reshape(1, edge_types),
        fac["w2"].reshape(1, dh), fac["b2"].reshape(1, 1),
        # type embedding
        params["type_emb"],
        # folded MHA
        wq_eff, bq_eff.reshape(1, n_out),
        jnp.concatenate([wk_eff, wv_eff], axis=1),
        jnp.concatenate([bk_eff, bv_eff], axis=0).reshape(1, 2 * n_out),
        params["out_proj"]["w"], params["out_proj"]["b"].reshape(1, n_out),
        # output MLP (W1 split)
        om["w1"][:3 * D], om["w1"][3 * D:], om["b1"].reshape(1, 2 * D),
        om["w2"], om["b2"].reshape(1, D),
    ]
    data = [agent_features, agent_types, polyline_features, H, gumbel]

    def dspec(arr):
        nd = arr.ndim
        return pl.BlockSpec((1,) + arr.shape[1:], lambda b: (b,) + (0,) * (nd - 1))

    def wspec(arr):
        nd = arr.ndim
        return pl.BlockSpec(arr.shape, lambda b: (0,) * nd)

    in_specs = [dspec(x) for x in data] + [wspec(w) for w in weights]
    out_shape = (jax.ShapeDtypeStruct((B, A, D), agent_features.dtype),
                 jax.ShapeDtypeStruct((B, A, n_out), agent_features.dtype))
    out_specs = (pl.BlockSpec((1, A, D), lambda b: (b, 0, 0)),
                 pl.BlockSpec((1, A, n_out), lambda b: (b, 0, 0)))

    agent_new, poly_new = pl.pallas_call(
        functools.partial(_tatlmp_fused_kernel, num_heads=num_heads),
        out_shape=out_shape,
        grid=(B,),
        in_specs=in_specs,
        out_specs=out_specs,
        scratch_shapes=[pltpu.VMEM((A, n_out), jnp.float32)],
        compiler_params=pltpu.CompilerParams(
            dimension_semantics=("parallel",),       # megacore batch split on v7x
            vmem_limit_bytes=32 * 1024 * 1024),
    )(*data, *weights)
    return agent_new, poly_new


# ---------------------------------------------------------------------------
# Example run
# ---------------------------------------------------------------------------

if __name__ == "__main__":
    B, A, E, D, T, P = 2, 8, 8, 32, 4, 8           # batch, agents, edges, h_dim, types, polylines
    EDGE_TYPES = T
    N_IN_MHA, N_OUT_MHA = 3 * D, 32                # MHA n_in / n_out (4 heads -> head_dim 8)

    root = jax.random.PRNGKey(0)
    k_par, k_af, k_at, k_pf, k_h, k_g = jax.random.split(root, 6)

    params = init_params(k_par, D, T, EDGE_TYPES, N_IN_MHA, N_OUT_MHA)
    agent_features = jax.random.normal(k_af, (B, A, D), jnp.float32)
    agent_types = jax.nn.one_hot(jax.random.randint(k_at, (B, A), 0, T), T, dtype=jnp.float32)
    polyline_features = jax.random.normal(k_pf, (B, P, N_IN_MHA), jnp.float32)
    H = jax.random.bernoulli(k_h, 0.5, (B, E, A)).astype(jnp.float32)

    fwd = jax.jit(tatlmp_forward)
    agent_new, poly_new = fwd(params, agent_features, agent_types,
                              polyline_features, H, k_g)
    jax.block_until_ready((agent_new, poly_new))
    assert agent_new.shape == (B, A, D)
    assert poly_new.shape == (B, A, N_OUT_MHA)
    assert bool(jnp.all(jnp.isfinite(agent_new))) and bool(jnp.all(jnp.isfinite(poly_new)))
    print("KERNEL_OK")
</pallas_src>

<mosaic_0001>
module attributes {stable_mosaic.version = 11 : i64} {
  func.func @_tatlmp_fused_kernel(%arg0: i32, %arg1: memref<1x8x32xf32, #tpu.memory_space<vmem>>, %arg2: memref<1x8x4xf32, #tpu.memory_space<vmem>>, %arg3: memref<1x8x96xf32, #tpu.memory_space<vmem>>, %arg4: memref<1x8x8xf32, #tpu.memory_space<vmem>>, %arg5: memref<1x8x4xf32, #tpu.memory_space<vmem>>, %arg6: memref<32x64xf32, #tpu.memory_space<vmem>>, %arg7: memref<32x64xf32, #tpu.memory_space<vmem>>, %arg8: memref<1x64xf32, #tpu.memory_space<vmem>>, %arg9: memref<1x64xf32, #tpu.memory_space<vmem>>, %arg10: memref<1x1xf32, #tpu.memory_space<vmem>>, %arg11: memref<32x128xf32, #tpu.memory_space<vmem>>, %arg12: memref<4x128xf32, #tpu.memory_space<vmem>>, %arg13: memref<1x128xf32, #tpu.memory_space<vmem>>, %arg14: memref<64x4xf32, #tpu.memory_space<vmem>>, %arg15: memref<1x4xf32, #tpu.memory_space<vmem>>, %arg16: memref<1x64xf32, #tpu.memory_space<vmem>>, %arg17: memref<1x1xf32, #tpu.memory_space<vmem>>, %arg18: memref<4x32xf32, #tpu.memory_space<vmem>>, %arg19: memref<96x32xf32, #tpu.memory_space<vmem>>, %arg20: memref<1x32xf32, #tpu.memory_space<vmem>>, %arg21: memref<96x64xf32, #tpu.memory_space<vmem>>, %arg22: memref<1x64xf32, #tpu.memory_space<vmem>>, %arg23: memref<32x32xf32, #tpu.memory_space<vmem>>, %arg24: memref<1x32xf32, #tpu.memory_space<vmem>>, %arg25: memref<96x64xf32, #tpu.memory_space<vmem>>, %arg26: memref<32x64xf32, #tpu.memory_space<vmem>>, %arg27: memref<1x64xf32, #tpu.memory_space<vmem>>, %arg28: memref<64x32xf32, #tpu.memory_space<vmem>>, %arg29: memref<1x32xf32, #tpu.memory_space<vmem>>, %arg30: memref<1x8x32xf32, #tpu.memory_space<vmem>>, %arg31: memref<1x8x32xf32, #tpu.memory_space<vmem>>, %arg32: memref<8x32xf32, #tpu.memory_space<vmem>>) attributes {dimension_semantics = [#tpu.dimension_semantics<parallel>], iteration_bounds = array<i64: 2>, scalar_prefetch = 0 : i64, scratch_operands = 1 : i64, tpu.core_type = #tpu.core_type<tc>, window_params = [{transform_indices = @transform_0, window_bounds = array<i64: 1, 8, 32>}, {transform_indices = @transform_1, window_bounds = array<i64: 1, 8, 4>}, {transform_indices = @transform_2, window_bounds = array<i64: 1, 8, 96>}, {transform_indices = @transform_3, window_bounds = array<i64: 1, 8, 8>}, {transform_indices = @transform_4, window_bounds = array<i64: 1, 8, 4>}, {pipeline_mode = #tpu.pipeline_mode<synchronous>, transform_indices = @transform_5, window_bounds = array<i64: 32, 64>}, {pipeline_mode = #tpu.pipeline_mode<synchronous>, transform_indices = @transform_6, window_bounds = array<i64: 32, 64>}, {pipeline_mode = #tpu.pipeline_mode<synchronous>, transform_indices = @transform_7, window_bounds = array<i64: 1, 64>}, {pipeline_mode = #tpu.pipeline_mode<synchronous>, transform_indices = @transform_8, window_bounds = array<i64: 1, 64>}, {pipeline_mode = #tpu.pipeline_mode<synchronous>, transform_indices = @transform_9, window_bounds = array<i64: 1, 1>}, {pipeline_mode = #tpu.pipeline_mode<synchronous>, transform_indices = @transform_10, window_bounds = array<i64: 32, 128>}, {pipeline_mode = #tpu.pipeline_mode<synchronous>, transform_indices = @transform_11, window_bounds = array<i64: 4, 128>}, {pipeline_mode = #tpu.pipeline_mode<synchronous>, transform_indices = @transform_12, window_bounds = array<i64: 1, 128>}, {pipeline_mode = #tpu.pipeline_mode<synchronous>, transform_indices = @transform_13, window_bounds = array<i64: 64, 4>}, {pipeline_mode = #tpu.pipeline_mode<synchronous>, transform_indices = @transform_14, window_bounds = array<i64: 1, 4>}, {pipeline_mode = #tpu.pipeline_mode<synchronous>, transform_indices = @transform_15, window_bounds = array<i64: 1, 64>}, {pipeline_mode = #tpu.pipeline_mode<synchronous>, transform_indices = @transform_16, window_bounds = array<i64: 1, 1>}, {pipeline_mode = #tpu.pipeline_mode<synchronous>, transform_indices = @transform_17, window_bounds = array<i64: 4, 32>}, {pipeline_mode = #tpu.pipeline_mode<synchronous>, transform_indices = @transform_18, window_bounds = array<i64: 96, 32>}, {pipeline_mode = #tpu.pipeline_mode<synchronous>, transform_indices = @transform_19, window_bounds = array<i64: 1, 32>}, {pipeline_mode = #tpu.pipeline_mode<synchronous>, transform_indices = @transform_20, window_bounds = array<i64: 96, 64>}, {pipeline_mode = #tpu.pipeline_mode<synchronous>, transform_indices = @transform_21, window_bounds = array<i64: 1, 64>}, {pipeline_mode = #tpu.pipeline_mode<synchronous>, transform_indices = @transform_22, window_bounds = array<i64: 32, 32>}, {pipeline_mode = #tpu.pipeline_mode<synchronous>, transform_indices = @transform_23, window_bounds = array<i64: 1, 32>}, {pipeline_mode = #tpu.pipeline_mode<synchronous>, transform_indices = @transform_24, window_bounds = array<i64: 96, 64>}, {pipeline_mode = #tpu.pipeline_mode<synchronous>, transform_indices = @transform_25, window_bounds = array<i64: 32, 64>}, {pipeline_mode = #tpu.pipeline_mode<synchronous>, transform_indices = @transform_26, window_bounds = array<i64: 1, 64>}, {pipeline_mode = #tpu.pipeline_mode<synchronous>, transform_indices = @transform_27, window_bounds = array<i64: 64, 32>}, {pipeline_mode = #tpu.pipeline_mode<synchronous>, transform_indices = @transform_28, window_bounds = array<i64: 1, 32>}, {transform_indices = @transform_29, window_bounds = array<i64: 1, 8, 32>}, {transform_indices = @transform_30, window_bounds = array<i64: 1, 8, 32>}]} {
    %c0 = arith.constant 0 : index
    %c0_0 = arith.constant 0 : index
    %c0_1 = arith.constant 0 : index
    %0 = vector.load %arg1[%c0, %c0_0, %c0_1] : memref<1x8x32xf32, #tpu.memory_space<vmem>>, vector<1x8x32xf32>
    %1 = vector.shape_cast %0 : vector<1x8x32xf32> to vector<8x32xf32>
    %c0_2 = arith.constant 0 : index
    %c0_3 = arith.constant 0 : index
    %c0_4 = arith.constant 0 : index
    %2 = vector.load %arg2[%c0_2, %c0_3, %c0_4] : memref<1x8x4xf32, #tpu.memory_space<vmem>>, vector<1x8x4xf32>
    %3 = vector.shape_cast %2 : vector<1x8x4xf32> to vector<8x4xf32>
    %c0_5 = arith.constant 0 : index
    %c0_6 = arith.constant 0 : index
    %c0_7 = arith.constant 0 : index
    %4 = vector.load %arg3[%c0_5, %c0_6, %c0_7] : memref<1x8x96xf32, #tpu.memory_space<vmem>>, vector<1x8x96xf32>
    %5 = vector.shape_cast %4 : vector<1x8x96xf32> to vector<8x96xf32>
    %c0_8 = arith.constant 0 : index
    %c0_9 = arith.constant 0 : index
    %c0_10 = arith.constant 0 : index
    %6 = vector.load %arg4[%c0_8, %c0_9, %c0_10] : memref<1x8x8xf32, #tpu.memory_space<vmem>>, vector<1x8x8xf32>
    %7 = vector.shape_cast %6 : vector<1x8x8xf32> to vector<8x8xf32>
    %c0_11 = arith.constant 0 : index
    %c0_12 = arith.constant 0 : index
    %c0_13 = arith.constant 0 : index
    %8 = vector.load %arg5[%c0_11, %c0_12, %c0_13] : memref<1x8x4xf32, #tpu.memory_space<vmem>>, vector<1x8x4xf32>
    %9 = vector.shape_cast %8 : vector<1x8x4xf32> to vector<8x4xf32>
    %c0_14 = arith.constant 0 : index
    %c0_15 = arith.constant 0 : index
    %10 = vector.load %arg6[%c0_14, %c0_15] : memref<32x64xf32, #tpu.memory_space<vmem>>, vector<32x64xf32>
    %c0_16 = arith.constant 0 : index
    %c0_17 = arith.constant 0 : index
    %11 = vector.load %arg7[%c0_16, %c0_17] : memref<32x64xf32, #tpu.memory_space<vmem>>, vector<32x64xf32>
    %c0_18 = arith.constant 0 : index
    %c0_19 = arith.constant 0 : index
    %12 = vector.load %arg8[%c0_18, %c0_19] : memref<1x64xf32, #tpu.memory_space<vmem>>, vector<1x64xf32>
    %c0_20 = arith.constant 0 : index
    %c0_21 = arith.constant 0 : index
    %13 = vector.load %arg9[%c0_20, %c0_21] : memref<1x64xf32, #tpu.memory_space<vmem>>, vector<1x64xf32>
    %c0_22 = arith.constant 0 : index
    %c0_23 = arith.constant 0 : index
    %14 = vector.load %arg10[%c0_22, %c0_23] : memref<1x1xf32, #tpu.memory_space<vmem>>, vector<1x1xf32>
    %cst = arith.constant dense<0.000000e+00> : vector<8x32xf32>
    %15 = tpu.matmul %7, %1, %cst {dimension_numbers = #tpu.dot_dimension_numbers<[1], [0], [0], [1], [0, 0, 1, 1], [], []>} : vector<8x8xf32>, vector<8x32xf32>, vector<8x32xf32> -> vector<8x32xf32>
    %cst_24 = arith.constant dense<0.000000e+00> : vector<8x4xf32>
    %16 = tpu.matmul %7, %3, %cst_24 {dimension_numbers = #tpu.dot_dimension_numbers<[1], [0], [0], [1], [0, 0, 1, 1], [], []>} : vector<8x8xf32>, vector<8x4xf32>, vector<8x4xf32> -> vector<8x4xf32>
    %cst_25 = arith.constant dense<0.000000e+00> : vector<8x64xf32>
    %17 = tpu.matmul %1, %11, %cst_25 {dimension_numbers = #tpu.dot_dimension_numbers<[1], [0], [0], [1], [0, 0, 1, 1], [], []>} : vector<8x32xf32>, vector<32x64xf32>, vector<8x64xf32> -> vector<8x64xf32>
    %cst_26 = arith.constant dense<0.000000e+00> : vector<8x64xf32>
    %18 = tpu.matmul %15, %10, %cst_26 {dimension_numbers = #tpu.dot_dimension_numbers<[1], [0], [0], [1], [0, 0, 1, 1], [], []>} : vector<8x32xf32>, vector<32x64xf32>, vector<8x64xf32> -> vector<8x64xf32>
    %19 = vector.shape_cast %18 : vector<8x64xf32> to vector<8x1x64xf32>
    %20 = vector.shape_cast %17 : vector<8x64xf32> to vector<1x8x64xf32>
    %21 = vector.broadcast %19 : vector<8x1x64xf32> to vector<8x8x64xf32>
    %22 = vector.broadcast %20 : vector<1x8x64xf32> to vector<8x8x64xf32>
    %23 = arith.addf %21, %22 : vector<8x8x64xf32>
    %24 = vector.shape_cast %12 : vector<1x64xf32> to vector<1x1x64xf32>
    %25 = vector.broadcast %24 : vector<1x1x64xf32> to vector<8x8x64xf32>
    %26 = arith.addf %23, %25 : vector<8x8x64xf32>
    %cst_27 = arith.constant 0.000000e+00 : f32
    %27 = vector.broadcast %cst_27 : f32 to vector<8x8x64xf32>
    %28 = arith.maximumf %26, %27 : vector<8x8x64xf32>
    %29 = vector.shape_cast %13 : vector<1x64xf32> to vector<1x1x64xf32>
    %30 = vector.broadcast %29 : vector<1x1x64xf32> to vector<8x8x64xf32>
    %31 = arith.mulf %28, %30 : vector<8x8x64xf32>
    %cst_28 = arith.constant dense<0.000000e+00> : vector<8x8xf32>
    %32 = vector.multi_reduction <add>, %31, %cst_28 [2] : vector<8x8x64xf32> to vector<8x8xf32>
    %33 = vector.broadcast %14 : vector<1x1xf32> to vector<8x8xf32>
    %34 = arith.addf %32, %33 : vector<8x8xf32>
    %35 = arith.mulf %34, %7 : vector<8x8xf32>
    %cst_29 = arith.constant dense<0xFF800000> : vector<8xf32>
    %36 = vector.multi_reduction <maximumf>, %35, %cst_29 [1] : vector<8x8xf32> to vector<8xf32>
    %37 = vector.shape_cast %36 : vector<8xf32> to vector<8x1xf32>
    %38 = vector.broadcast %37 : vector<8x1xf32> to vector<8x8xf32>
    %39 = arith.subf %35, %38 : vector<8x8xf32>
    %40 = math.exp %39 : vector<8x8xf32>
    %cst_30 = arith.constant dense<0.000000e+00> : vector<8xf32>
    %41 = vector.multi_reduction <add>, %40, %cst_30 [1] : vector<8x8xf32> to vector<8xf32>
    %42 = vector.shape_cast %41 : vector<8xf32> to vector<8x1xf32>
    %43 = tpu.reciprocal %42 {approx = true} : vector<8x1xf32> -> vector<8x1xf32>
    %44 = vector.broadcast %43 : vector<8x1xf32> to vector<8x8xf32>
    %45 = arith.mulf %40, %44 : vector<8x8xf32>
    %46 = arith.mulf %45, %7 : vector<8x8xf32>
    %cst_31 = arith.constant dense<0.000000e+00> : vector<8x32xf32>
    %47 = tpu.matmul %46, %1, %cst_31 {dimension_numbers = #tpu.dot_dimension_numbers<[1], [0], [0], [1], [0, 0, 1, 1], [], []>} : vector<8x8xf32>, vector<8x32xf32>, vector<8x32xf32> -> vector<8x32xf32>
    %c0_32 = arith.constant 0 : index
    %c0_33 = arith.constant 0 : index
    %48 = vector.load %arg11[%c0_32, %c0_33] : memref<32x128xf32, #tpu.memory_space<vmem>>, vector<32x128xf32>
    %cst_34 = arith.constant dense<0.000000e+00> : vector<8x128xf32>
    %49 = tpu.matmul %47, %48, %cst_34 {dimension_numbers = #tpu.dot_dimension_numbers<[1], [0], [0], [1], [0, 0, 1, 1], [], []>} : vector<8x32xf32>, vector<32x128xf32>, vector<8x128xf32> -> vector<8x128xf32>
    %c0_35 = arith.constant 0 : index
    %c0_36 = arith.constant 0 : index
    %50 = vector.load %arg12[%c0_35, %c0_36] : memref<4x128xf32, #tpu.memory_space<vmem>>, vector<4x128xf32>
    %cst_37 = arith.constant dense<0.000000e+00> : vector<8x128xf32>
    %51 = tpu.matmul %16, %50, %cst_37 {dimension_numbers = #tpu.dot_dimension_numbers<[1], [0], [0], [1], [0, 0, 1, 1], [], []>} : vector<8x4xf32>, vector<4x128xf32>, vector<8x128xf32> -> vector<8x128xf32>
    %52 = arith.addf %49, %51 : vector<8x128xf32>
    %c0_38 = arith.constant 0 : index
    %c0_39 = arith.constant 0 : index
    %53 = vector.load %arg13[%c0_38, %c0_39] : memref<1x128xf32, #tpu.memory_space<vmem>>, vector<1x128xf32>
    %54 = vector.broadcast %53 : vector<1x128xf32> to vector<8x128xf32>
    %55 = arith.addf %52, %54 : vector<8x128xf32>
    %cst_40 = arith.constant 0.000000e+00 : f32
    %56 = vector.broadcast %cst_40 : f32 to vector<8x128xf32>
    %57 = arith.maximumf %55, %56 : vector<8x128xf32>
    %58 = vector.extract_strided_slice %57 {offsets = [0, 0], sizes = [8, 64], strides = [1, 1]} : vector<8x128xf32> to vector<8x64xf32>
    %59 = vector.extract_strided_slice %57 {offsets = [0, 64], sizes = [8, 64], strides = [1, 1]} : vector<8x128xf32> to vector<8x64xf32>
    %c0_41 = arith.constant 0 : index
    %c0_42 = arith.constant 0 : index
    %60 = vector.load %arg14[%c0_41, %c0_42] : memref<64x4xf32, #tpu.memory_space<vmem>>, vector<64x4xf32>
    %cst_43 = arith.constant dense<0.000000e+00> : vector<8x4xf32>
    %61 = tpu.matmul %58, %60, %cst_43 {dimension_numbers = #tpu.dot_dimension_numbers<[1], [0], [0], [1], [0, 0, 1, 1], [], []>} : vector<8x64xf32>, vector<64x4xf32>, vector<8x4xf32> -> vector<8x4xf32>
    %c0_44 = arith.constant 0 : index
    %c0_45 = arith.constant 0 : index
    %62 = vector.load %arg15[%c0_44, %c0_45] : memref<1x4xf32, #tpu.memory_space<vmem>>, vector<1x4xf32>
    %63 = vector.broadcast %62 : vector<1x4xf32> to vector<8x4xf32>
    %64 = arith.addf %61, %63 : vector<8x4xf32>
    %65 = arith.addf %64, %9 : vector<8x4xf32>
    %cst_46 = arith.constant 2.000000e+00 : f32
    %66 = vector.broadcast %cst_46 : f32 to vector<8x4xf32>
    %67 = arith.mulf %65, %66 : vector<8x4xf32>
    %cst_47 = arith.constant dense<0xFF800000> : vector<8xf32>
    %68 = vector.multi_reduction <maximumf>, %67, %cst_47 [1] : vector<8x4xf32> to vector<8xf32>
    %69 = vector.shape_cast %68 : vector<8xf32> to vector<8x1xf32>
    %70 = vector.broadcast %69 : vector<8x1xf32> to vector<8x4xf32>
    %71 = arith.subf %67, %70 : vector<8x4xf32>
    %72 = math.exp %71 : vector<8x4xf32>
    %cst_48 = arith.constant dense<0.000000e+00> : vector<8xf32>
    %73 = vector.multi_reduction <add>, %72, %cst_48 [1] : vector<8x4xf32> to vector<8xf32>
    %74 = vector.shape_cast %73 : vector<8xf32> to vector<8x1xf32>
    %75 = tpu.reciprocal %74 {approx = true} : vector<8x1xf32> -> vector<8x1xf32>
    %76 = vector.broadcast %75 : vector<8x1xf32> to vector<8x4xf32>
    %77 = arith.mulf %72, %76 : vector<8x4xf32>
    %c0_49 = arith.constant 0 : index
    %c0_50 = arith.constant 0 : index
    %78 = vector.load %arg16[%c0_49, %c0_50] : memref<1x64xf32, #tpu.memory_space<vmem>>, vector<1x64xf32>
    %79 = vector.broadcast %78 : vector<1x64xf32> to vector<8x64xf32>
    %80 = arith.mulf %59, %79 : vector<8x64xf32>
    %cst_51 = arith.constant dense<0.000000e+00> : vector<8xf32>
    %81 = vector.multi_reduction <add>, %80, %cst_51 [1] : vector<8x64xf32> to vector<8xf32>
    %82 = vector.shape_cast %81 : vector<8xf32> to vector<8x1xf32>
    %c0_52 = arith.constant 0 : index
    %c0_53 = arith.constant 0 : index
    %83 = vector.load %arg17[%c0_52, %c0_53] : memref<1x1xf32, #tpu.memory_space<vmem>>, vector<1x1xf32>
    %84 = vector.broadcast %83 : vector<1x1xf32> to vector<8x1xf32>
    %85 = arith.addf %82, %84 : vector<8x1xf32>
    %cst_54 = arith.constant 0.000000e+00 : f32
    %86 = vector.broadcast %cst_54 : f32 to vector<8x1xf32>
    %87 = arith.subf %86, %85 : vector<8x1xf32>
    %88 = math.exp %87 : vector<8x1xf32>
    %cst_55 = arith.constant 1.000000e+00 : f32
    %89 = vector.broadcast %cst_55 : f32 to vector<8x1xf32>
    %90 = arith.addf %89, %88 : vector<8x1xf32>
    %cst_56 = arith.constant 1.000000e+00 : f32
    %91 = vector.broadcast %cst_56 : f32 to vector<8x1xf32>
    %92 = arith.divf %91, %90 : vector<8x1xf32>
    %c0_57 = arith.constant 0 : index
    %c0_58 = arith.constant 0 : index
    %93 = vector.load %arg18[%c0_57, %c0_58] : memref<4x32xf32, #tpu.memory_space<vmem>>, vector<4x32xf32>
    %cst_59 = arith.constant dense<0.000000e+00> : vector<8x32xf32>
    %94 = tpu.matmul %77, %93, %cst_59 {dimension_numbers = #tpu.dot_dimension_numbers<[1], [0], [0], [1], [0, 0, 1, 1], [], []>} : vector<8x4xf32>, vector<4x32xf32>, vector<8x32xf32> -> vector<8x32xf32>
    %95 = vector.broadcast %92 : vector<8x1xf32> to vector<8x32xf32>
    %96 = arith.mulf %95, %94 : vector<8x32xf32>
    %cst_60 = arith.constant dense<0.000000e+00> : vector<8x64xf32>
    %97 = tpu.matmul %96, %10, %cst_60 {dimension_numbers = #tpu.dot_dimension_numbers<[1], [0], [0], [1], [0, 0, 1, 1], [], []>} : vector<8x32xf32>, vector<32x64xf32>, vector<8x64xf32> -> vector<8x64xf32>
    %98 = vector.shape_cast %7 : vector<8x8xf32> to vector<8x8x1xf32>
    %99 = vector.shape_cast %97 : vector<8x64xf32> to vector<8x1x64xf32>
    %100 = vector.shape_cast %17 : vector<8x64xf32> to vector<1x8x64xf32>
    %101 = vector.broadcast %99 : vector<8x1x64xf32> to vector<8x8x64xf32>
    %102 = vector.broadcast %100 : vector<1x8x64xf32> to vector<8x8x64xf32>
    %103 = arith.addf %101, %102 : vector<8x8x64xf32>
    %104 = vector.broadcast %98 : vector<8x8x1xf32> to vector<8x8x64xf32>
    %105 = arith.mulf %104, %103 : vector<8x8x64xf32>
    %106 = vector.shape_cast %12 : vector<1x64xf32> to vector<1x1x64xf32>
    %107 = vector.broadcast %106 : vector<1x1x64xf32> to vector<8x8x64xf32>
    %108 = arith.addf %105, %107 : vector<8x8x64xf32>
    %cst_61 = arith.constant 0.000000e+00 : f32
    %109 = vector.broadcast %cst_61 : f32 to vector<8x8x64xf32>
    %110 = arith.maximumf %108, %109 : vector<8x8x64xf32>
    %111 = vector.shape_cast %13 : vector<1x64xf32> to vector<1x1x64xf32>
    %112 = vector.broadcast %111 : vector<1x1x64xf32> to vector<8x8x64xf32>
    %113 = arith.mulf %110, %112 : vector<8x8x64xf32>
    %cst_62 = arith.constant dense<0.000000e+00> : vector<8x8xf32>
    %114 = vector.multi_reduction <add>, %113, %cst_62 [2] : vector<8x8x64xf32> to vector<8x8xf32>
    %115 = vector.broadcast %14 : vector<1x1xf32> to vector<8x8xf32>
    %116 = arith.addf %114, %115 : vector<8x8xf32>
    %cst_63 = arith.constant 0.000000e+00 : f32
    %117 = vector.broadcast %cst_63 : f32 to vector<8x8xf32>
    %118 = arith.cmpf oge, %116, %117 : vector<8x8xf32>
    %cst_64 = arith.constant 0.00999999977 : f32
    %119 = vector.broadcast %cst_64 : f32 to vector<8x8xf32>
    %120 = arith.mulf %119, %116 : vector<8x8xf32>
    %121 = arith.select %118, %116, %120 : vector<8x8xi1>, vector<8x8xf32>
    %cst_65 = arith.constant dense<0xFF800000> : vector<8xf32>
    %122 = vector.multi_reduction <maximumf>, %121, %cst_65 [1] : vector<8x8xf32> to vector<8xf32>
    %123 = vector.shape_cast %122 : vector<8xf32> to vector<8x1xf32>
    %124 = vector.broadcast %123 : vector<8x1xf32> to vector<8x8xf32>
    %125 = arith.subf %121, %124 : vector<8x8xf32>
    %126 = math.exp %125 : vector<8x8xf32>
    %cst_66 = arith.constant dense<0.000000e+00> : vector<8xf32>
    %127 = vector.multi_reduction <add>, %126, %cst_66 [1] : vector<8x8xf32> to vector<8xf32>
    %128 = vector.shape_cast %127 : vector<8xf32> to vector<8x1xf32>
    %129 = tpu.reciprocal %128 {approx = true} : vector<8x1xf32> -> vector<8x1xf32>
    %130 = vector.broadcast %129 : vector<8x1xf32> to vector<8x8xf32>
    %131 = arith.mulf %126, %130 : vector<8x8xf32>
    %132 = arith.mulf %131, %7 : vector<8x8xf32>
    %133 = tpu.concatenate %47, %96 in 1 : vector<8x32xf32>, vector<8x32xf32> -> vector<8x64xf32>
    %cst_67 = arith.constant dense<0.000000e+00> : vector<8x64xf32>
    %134 = tpu.matmul %132, %133, %cst_67 {dimension_numbers = #tpu.dot_dimension_numbers<[0], [0], [1], [1], [0, 1, 1, 1], [], []>} : vector<8x8xf32>, vector<8x64xf32>, vector<8x64xf32> -> vector<8x64xf32>
    %135 = tpu.concatenate %134, %1 in 1 : vector<8x64xf32>, vector<8x32xf32> -> vector<8x96xf32>
    %c0_68 = arith.constant 0 : index
    %c0_69 = arith.constant 0 : index
    %136 = vector.load %arg19[%c0_68, %c0_69] : memref<96x32xf32, #tpu.memory_space<vmem>>, vector<96x32xf32>
    %cst_70 = arith.constant dense<0.000000e+00> : vector<8x32xf32>
    %137 = tpu.matmul %135, %136, %cst_70 {dimension_numbers = #tpu.dot_dimension_numbers<[1], [0], [0], [1], [0, 0, 1, 1], [], []>} : vector<8x96xf32>, vector<96x32xf32>, vector<8x32xf32> -> vector<8x32xf32>
    %c0_71 = arith.constant 0 : index
    %c0_72 = arith.constant 0 : index
    %138 = vector.load %arg20[%c0_71, %c0_72] : memref<1x32xf32, #tpu.memory_space<vmem>>, vector<1x32xf32>
    %139 = vector.broadcast %138 : vector<1x32xf32> to vector<8x32xf32>
    %140 = arith.addf %137, %139 : vector<8x32xf32>
    %c0_73 = arith.constant 0 : index
    %c0_74 = arith.constant 0 : index
    %141 = vector.load %arg21[%c0_73, %c0_74] : memref<96x64xf32, #tpu.memory_space<vmem>>, vector<96x64xf32>
    %cst_75 = arith.constant dense<0.000000e+00> : vector<8x64xf32>
    %142 = tpu.matmul %5, %141, %cst_75 {dimension_numbers = #tpu.dot_dimension_numbers<[1], [0], [0], [1], [0, 0, 1, 1], [], []>} : vector<8x96xf32>, vector<96x64xf32>, vector<8x64xf32> -> vector<8x64xf32>
    %c0_76 = arith.constant 0 : index
    %c0_77 = arith.constant 0 : index
    %143 = vector.load %arg22[%c0_76, %c0_77] : memref<1x64xf32, #tpu.memory_space<vmem>>, vector<1x64xf32>
    %144 = vector.broadcast %143 : vector<1x64xf32> to vector<8x64xf32>
    %145 = arith.addf %142, %144 : vector<8x64xf32>
    %146 = vector.extract_strided_slice %145 {offsets = [0, 0], sizes = [8, 32], strides = [1, 1]} : vector<8x64xf32> to vector<8x32xf32>
    %147 = vector.extract_strided_slice %145 {offsets = [0, 32], sizes = [8, 32], strides = [1, 1]} : vector<8x64xf32> to vector<8x32xf32>
    %148 = vector.extract_strided_slice %140 {offsets = [0, 0], sizes = [8, 8], strides = [1, 1]} : vector<8x32xf32> to vector<8x8xf32>
    %149 = vector.extract_strided_slice %146 {offsets = [0, 0], sizes = [8, 8], strides = [1, 1]} : vector<8x32xf32> to vector<8x8xf32>
    %150 = vector.extract_strided_slice %147 {offsets = [0, 0], sizes = [8, 8], strides = [1, 1]} : vector<8x32xf32> to vector<8x8xf32>
    %cst_78 = arith.constant dense<0.000000e+00> : vector<8x8xf32>
    %151 = tpu.matmul %148, %149, %cst_78 {dimension_numbers = #tpu.dot_dimension_numbers<[1], [1], [0], [0], [0, 0, 1, 0], [], []>} : vector<8x8xf32>, vector<8x8xf32>, vector<8x8xf32> -> vector<8x8xf32>
    %cst_79 = arith.constant 0.353553385 : f32
    %152 = vector.broadcast %cst_79 : f32 to vector<8x8xf32>
    %153 = arith.mulf %151, %152 : vector<8x8xf32>
    %cst_80 = arith.constant dense<0xFF800000> : vector<8xf32>
    %154 = vector.multi_reduction <maximumf>, %153, %cst_80 [1] : vector<8x8xf32> to vector<8xf32>
    %155 = vector.shape_cast %154 : vector<8xf32> to vector<8x1xf32>
    %156 = vector.broadcast %155 : vector<8x1xf32> to vector<8x8xf32>
    %157 = arith.subf %153, %156 : vector<8x8xf32>
    %158 = math.exp %157 : vector<8x8xf32>
    %cst_81 = arith.constant dense<0.000000e+00> : vector<8xf32>
    %159 = vector.multi_reduction <add>, %158, %cst_81 [1] : vector<8x8xf32> to vector<8xf32>
    %160 = vector.shape_cast %159 : vector<8xf32> to vector<8x1xf32>
    %161 = tpu.reciprocal %160 {approx = true} : vector<8x1xf32> -> vector<8x1xf32>
    %162 = vector.broadcast %161 : vector<8x1xf32> to vector<8x8xf32>
    %163 = arith.mulf %158, %162 : vector<8x8xf32>
    %cst_82 = arith.constant dense<0.000000e+00> : vector<8x8xf32>
    %164 = tpu.matmul %163, %150, %cst_82 {dimension_numbers = #tpu.dot_dimension_numbers<[1], [0], [0], [1], [0, 0, 1, 1], [], []>} : vector<8x8xf32>, vector<8x8xf32>, vector<8x8xf32> -> vector<8x8xf32>
    %c0_83 = arith.constant 0 : index
    %c0_84 = arith.constant 0 : index
    %165 = vector.load %arg32[%c0_83, %c0_84] : memref<8x32xf32, #tpu.memory_space<vmem>>, vector<8x8xf32>
    tpu.vector_store %arg32[%c0_83, %c0_84], %164 {strides = array<i32>} : memref<8x32xf32, #tpu.memory_space<vmem>>, vector<8x8xf32>,
    %166 = vector.extract_strided_slice %140 {offsets = [0, 8], sizes = [8, 8], strides = [1, 1]} : vector<8x32xf32> to vector<8x8xf32>
    %167 = vector.extract_strided_slice %146 {offsets = [0, 8], sizes = [8, 8], strides = [1, 1]} : vector<8x32xf32> to vector<8x8xf32>
    %168 = vector.extract_strided_slice %147 {offsets = [0, 8], sizes = [8, 8], strides = [1, 1]} : vector<8x32xf32> to vector<8x8xf32>
    %cst_85 = arith.constant dense<0.000000e+00> : vector<8x8xf32>
    %169 = tpu.matmul %166, %167, %cst_85 {dimension_numbers = #tpu.dot_dimension_numbers<[1], [1], [0], [0], [0, 0, 1, 0], [], []>} : vector<8x8xf32>, vector<8x8xf32>, vector<8x8xf32> -> vector<8x8xf32>
    %cst_86 = arith.constant 0.353553385 : f32
    %170 = vector.broadcast %cst_86 : f32 to vector<8x8xf32>
    %171 = arith.mulf %169, %170 : vector<8x8xf32>
    %cst_87 = arith.constant dense<0xFF800000> : vector<8xf32>
    %172 = vector.multi_reduction <maximumf>, %171, %cst_87 [1] : vector<8x8xf32> to vector<8xf32>
    %173 = vector.shape_cast %172 : vector<8xf32> to vector<8x1xf32>
    %174 = vector.broadcast %173 : vector<8x1xf32> to vector<8x8xf32>
    %175 = arith.subf %171, %174 : vector<8x8xf32>
    %176 = math.exp %175 : vector<8x8xf32>
    %cst_88 = arith.constant dense<0.000000e+00> : vector<8xf32>
    %177 = vector.multi_reduction <add>, %176, %cst_88 [1] : vector<8x8xf32> to vector<8xf32>
    %178 = vector.shape_cast %177 : vector<8xf32> to vector<8x1xf32>
    %179 = tpu.reciprocal %178 {approx = true} : vector<8x1xf32> -> vector<8x1xf32>
    %180 = vector.broadcast %179 : vector<8x1xf32> to vector<8x8xf32>
    %181 = arith.mulf %176, %180 : vector<8x8xf32>
    %cst_89 = arith.constant dense<0.000000e+00> : vector<8x8xf32>
    %182 = tpu.matmul %181, %168, %cst_89 {dimension_numbers = #tpu.dot_dimension_numbers<[1], [0], [0], [1], [0, 0, 1, 1], [], []>} : vector<8x8xf32>, vector<8x8xf32>, vector<8x8xf32> -> vector<8x8xf32>
    %c0_90 = arith.constant 0 : index
    %c8 = arith.constant 8 : index
    %183 = vector.load %arg32[%c0_90, %c8] : memref<8x32xf32, #tpu.memory_space<vmem>>, vector<8x8xf32>
    tpu.vector_store %arg32[%c0_90, %c8], %182 {strides = array<i32>} : memref<8x32xf32, #tpu.memory_space<vmem>>, vector<8x8xf32>,
    %184 = vector.extract_strided_slice %140 {offsets = [0, 16], sizes = [8, 8], strides = [1, 1]} : vector<8x32xf32> to vector<8x8xf32>
    %185 = vector.extract_strided_slice %146 {offsets = [0, 16], sizes = [8, 8], strides = [1, 1]} : vector<8x32xf32> to vector<8x8xf32>
    %186 = vector.extract_strided_slice %147 {offsets = [0, 16], sizes = [8, 8], strides = [1, 1]} : vector<8x32xf32> to vector<8x8xf32>
    %cst_91 = arith.constant dense<0.000000e+00> : vector<8x8xf32>
    %187 = tpu.matmul %184, %185, %cst_91 {dimension_numbers = #tpu.dot_dimension_numbers<[1], [1], [0], [0], [0, 0, 1, 0], [], []>} : vector<8x8xf32>, vector<8x8xf32>, vector<8x8xf32> -> vector<8x8xf32>
    %cst_92 = arith.constant 0.353553385 : f32
    %188 = vector.broadcast %cst_92 : f32 to vector<8x8xf32>
    %189 = arith.mulf %187, %188 : vector<8x8xf32>
    %cst_93 = arith.constant dense<0xFF800000> : vector<8xf32>
    %190 = vector.multi_reduction <maximumf>, %189, %cst_93 [1] : vector<8x8xf32> to vector<8xf32>
    %191 = vector.shape_cast %190 : vector<8xf32> to vector<8x1xf32>
    %192 = vector.broadcast %191 : vector<8x1xf32> to vector<8x8xf32>
    %193 = arith.subf %189, %192 : vector<8x8xf32>
    %194 = math.exp %193 : vector<8x8xf32>
    %cst_94 = arith.constant dense<0.000000e+00> : vector<8xf32>
    %195 = vector.multi_reduction <add>, %194, %cst_94 [1] : vector<8x8xf32> to vector<8xf32>
    %196 = vector.shape_cast %195 : vector<8xf32> to vector<8x1xf32>
    %197 = tpu.reciprocal %196 {approx = true} : vector<8x1xf32> -> vector<8x1xf32>
    %198 = vector.broadcast %197 : vector<8x1xf32> to vector<8x8xf32>
    %199 = arith.mulf %194, %198 : vector<8x8xf32>
    %cst_95 = arith.constant dense<0.000000e+00> : vector<8x8xf32>
    %200 = tpu.matmul %199, %186, %cst_95 {dimension_numbers = #tpu.dot_dimension_numbers<[1], [0], [0], [1], [0, 0, 1, 1], [], []>} : vector<8x8xf32>, vector<8x8xf32>, vector<8x8xf32> -> vector<8x8xf32>
    %c0_96 = arith.constant 0 : index
    %c16 = arith.constant 16 : index
    %201 = vector.load %arg32[%c0_96, %c16] : memref<8x32xf32, #tpu.memory_space<vmem>>, vector<8x8xf32>
    tpu.vector_store %arg32[%c0_96, %c16], %200 {strides = array<i32>} : memref<8x32xf32, #tpu.memory_space<vmem>>, vector<8x8xf32>,
    %202 = vector.extract_strided_slice %140 {offsets = [0, 24], sizes = [8, 8], strides = [1, 1]} : vector<8x32xf32> to vector<8x8xf32>
    %203 = vector.extract_strided_slice %146 {offsets = [0, 24], sizes = [8, 8], strides = [1, 1]} : vector<8x32xf32> to vector<8x8xf32>
    %204 = vector.extract_strided_slice %147 {offsets = [0, 24], sizes = [8, 8], strides = [1, 1]} : vector<8x32xf32> to vector<8x8xf32>
    %cst_97 = arith.constant dense<0.000000e+00> : vector<8x8xf32>
    %205 = tpu.matmul %202, %203, %cst_97 {dimension_numbers = #tpu.dot_dimension_numbers<[1], [1], [0], [0], [0, 0, 1, 0], [], []>} : vector<8x8xf32>, vector<8x8xf32>, vector<8x8xf32> -> vector<8x8xf32>
    %cst_98 = arith.constant 0.353553385 : f32
    %206 = vector.broadcast %cst_98 : f32 to vector<8x8xf32>
    %207 = arith.mulf %205, %206 : vector<8x8xf32>
    %cst_99 = arith.constant dense<0xFF800000> : vector<8xf32>
    %208 = vector.multi_reduction <maximumf>, %207, %cst_99 [1] : vector<8x8xf32> to vector<8xf32>
    %209 = vector.shape_cast %208 : vector<8xf32> to vector<8x1xf32>
    %210 = vector.broadcast %209 : vector<8x1xf32> to vector<8x8xf32>
    %211 = arith.subf %207, %210 : vector<8x8xf32>
    %212 = math.exp %211 : vector<8x8xf32>
    %cst_100 = arith.constant dense<0.000000e+00> : vector<8xf32>
    %213 = vector.multi_reduction <add>, %212, %cst_100 [1] : vector<8x8xf32> to vector<8xf32>
    %214 = vector.shape_cast %213 : vector<8xf32> to vector<8x1xf32>
    %215 = tpu.reciprocal %214 {approx = true} : vector<8x1xf32> -> vector<8x1xf32>
    %216 = vector.broadcast %215 : vector<8x1xf32> to vector<8x8xf32>
    %217 = arith.mulf %212, %216 : vector<8x8xf32>
    %cst_101 = arith.constant dense<0.000000e+00> : vector<8x8xf32>
    %218 = tpu.matmul %217, %204, %cst_101 {dimension_numbers = #tpu.dot_dimension_numbers<[1], [0], [0], [1], [0, 0, 1, 1], [], []>} : vector<8x8xf32>, vector<8x8xf32>, vector<8x8xf32> -> vector<8x8xf32>
    %c0_102 = arith.constant 0 : index
    %c24 = arith.constant 24 : index
    %219 = vector.load %arg32[%c0_102, %c24] : memref<8x32xf32, #tpu.memory_space<vmem>>, vector<8x8xf32>
    tpu.vector_store %arg32[%c0_102, %c24], %218 {strides = array<i32>} : memref<8x32xf32, #tpu.memory_space<vmem>>, vector<8x8xf32>,
    %c0_103 = arith.constant 0 : index
    %c0_104 = arith.constant 0 : index
    %220 = vector.load %arg32[%c0_103, %c0_104] : memref<8x32xf32, #tpu.memory_space<vmem>>, vector<8x32xf32>
    %c0_105 = arith.constant 0 : index
    %c0_106 = arith.constant 0 : index
    %221 = vector.load %arg23[%c0_105, %c0_106] : memref<32x32xf32, #tpu.memory_space<vmem>>, vector<32x32xf32>
    %cst_107 = arith.constant dense<0.000000e+00> : vector<8x32xf32>
    %222 = tpu.matmul %220, %221, %cst_107 {dimension_numbers = #tpu.dot_dimension_numbers<[1], [0], [0], [1], [0, 0, 1, 1], [], []>} : vector<8x32xf32>, vector<32x32xf32>, vector<8x32xf32> -> vector<8x32xf32>
    %c0_108 = arith.constant 0 : index
    %c0_109 = arith.constant 0 : index
    %223 = vector.load %arg24[%c0_108, %c0_109] : memref<1x32xf32, #tpu.memory_space<vmem>>, vector<1x32xf32>
    %224 = vector.broadcast %223 : vector<1x32xf32> to vector<8x32xf32>
    %225 = arith.addf %222, %224 : vector<8x32xf32>
    %c0_110 = arith.constant 0 : index
    %c0_111 = arith.constant 0 : index
    %c0_112 = arith.constant 0 : index
    %226 = vector.load %arg31[%c0_110, %c0_111, %c0_112] : memref<1x8x32xf32, #tpu.memory_space<vmem>>, vector<1x8x32xf32>
    %227 = vector.shape_cast %226 : vector<1x8x32xf32> to vector<8x32xf32>
    %228 = vector.shape_cast %225 : vector<8x32xf32> to vector<1x8x32xf32>
    tpu.vector_store %arg31[%c0_110, %c0_111, %c0_112], %228 {strides = array<i32>} : memref<1x8x32xf32, #tpu.memory_space<vmem>>, vector<1x8x32xf32>,
    %c0_113 = arith.constant 0 : index
    %c0_114 = arith.constant 0 : index
    %229 = vector.load %arg25[%c0_113, %c0_114] : memref<96x64xf32, #tpu.memory_space<vmem>>, vector<96x64xf32>
    %cst_115 = arith.constant dense<0.000000e+00> : vector<8x64xf32>
    %230 = tpu.matmul %135, %229, %cst_115 {dimension_numbers = #tpu.dot_dimension_numbers<[1], [0], [0], [1], [0, 0, 1, 1], [], []>} : vector<8x96xf32>, vector<96x64xf32>, vector<8x64xf32> -> vector<8x64xf32>
    %c0_116 = arith.constant 0 : index
    %c0_117 = arith.constant 0 : index
    %231 = vector.load %arg26[%c0_116, %c0_117] : memref<32x64xf32, #tpu.memory_space<vmem>>, vector<32x64xf32>
    %cst_118 = arith.constant dense<0.000000e+00> : vector<8x64xf32>
    %232 = tpu.matmul %225, %231, %cst_118 {dimension_numbers = #tpu.dot_dimension_numbers<[1], [0], [0], [1], [0, 0, 1, 1], [], []>} : vector<8x32xf32>, vector<32x64xf32>, vector<8x64xf32> -> vector<8x64xf32>
    %233 = arith.addf %230, %232 : vector<8x64xf32>
    %c0_119 = arith.constant 0 : index
    %c0_120 = arith.constant 0 : index
    %234 = vector.load %arg27[%c0_119, %c0_120] : memref<1x64xf32, #tpu.memory_space<vmem>>, vector<1x64xf32>
    %235 = vector.broadcast %234 : vector<1x64xf32> to vector<8x64xf32>
    %236 = arith.addf %233, %235 : vector<8x64xf32>
    %cst_121 = arith.constant 0.000000e+00 : f32
    %237 = vector.broadcast %cst_121 : f32 to vector<8x64xf32>
    %238 = arith.maximumf %236, %237 : vector<8x64xf32>
    %c0_122 = arith.constant 0 : index
    %c0_123 = arith.constant 0 : index
    %239 = vector.load %arg28[%c0_122, %c0_123] : memref<64x32xf32, #tpu.memory_space<vmem>>, vector<64x32xf32>
    %cst_124 = arith.constant dense<0.000000e+00> : vector<8x32xf32>
    %240 = tpu.matmul %238, %239, %cst_124 {dimension_numbers = #tpu.dot_dimension_numbers<[1], [0], [0], [1], [0, 0, 1, 1], [], []>} : vector<8x64xf32>, vector<64x32xf32>, vector<8x32xf32> -> vector<8x32xf32>
    %c0_125 = arith.constant 0 : index
    %c0_126 = arith.constant 0 : index
    %241 = vector.load %arg29[%c0_125, %c0_126] : memref<1x32xf32, #tpu.memory_space<vmem>>, vector<1x32xf32>
    %242 = vector.broadcast %241 : vector<1x32xf32> to vector<8x32xf32>
    %243 = arith.addf %240, %242 : vector<8x32xf32>
    %c0_127 = arith.constant 0 : index
    %c0_128 = arith.constant 0 : index
    %c0_129 = arith.constant 0 : index
    %244 = vector.load %arg30[%c0_127, %c0_128, %c0_129] : memref<1x8x32xf32, #tpu.memory_space<vmem>>, vector<1x8x32xf32>
    %245 = vector.shape_cast %244 : vector<1x8x32xf32> to vector<8x32xf32>
    %246 = vector.shape_cast %243 : vector<8x32xf32> to vector<1x8x32xf32>
    tpu.vector_store %arg30[%c0_127, %c0_128, %c0_129], %246 {strides = array<i32>} : memref<1x8x32xf32, #tpu.memory_space<vmem>>, vector<1x8x32xf32>,
    return
  }
  func.func @transform_0(%arg0: i32) -> (i32, i32, i32) {
    %c0_i32 = arith.constant 0 : i32
    %c0_i32_0 = arith.constant 0 : i32
    %c0_i32_1 = arith.constant 0 : i32
    return %arg0, %c0_i32, %c0_i32_0 : i32, i32, i32
  }
  func.func @transform_1(%arg0: i32) -> (i32, i32, i32) {
    %c0_i32 = arith.constant 0 : i32
    %c0_i32_0 = arith.constant 0 : i32
    %c0_i32_1 = arith.constant 0 : i32
    return %arg0, %c0_i32, %c0_i32_0 : i32, i32, i32
  }
  func.func @transform_2(%arg0: i32) -> (i32, i32, i32) {
    %c0_i32 = arith.constant 0 : i32
    %c0_i32_0 = arith.constant 0 : i32
    %c0_i32_1 = arith.constant 0 : i32
    return %arg0, %c0_i32, %c0_i32_0 : i32, i32, i32
  }
  func.func @transform_3(%arg0: i32) -> (i32, i32, i32) {
    %c0_i32 = arith.constant 0 : i32
    %c0_i32_0 = arith.constant 0 : i32
    %c0_i32_1 = arith.constant 0 : i32
    return %arg0, %c0_i32, %c0_i32_0 : i32, i32, i32
  }
  func.func @transform_4(%arg0: i32) -> (i32, i32, i32) {
    %c0_i32 = arith.constant 0 : i32
    %c0_i32_0 = arith.constant 0 : i32
    %c0_i32_1 = arith.constant 0 : i32
    return %arg0, %c0_i32, %c0_i32_0 : i32, i32, i32
  }
  func.func @transform_5(%arg0: i32) -> (i32, i32) {
    %c0_i32 = arith.constant 0 : i32
    %c0_i32_0 = arith.constant 0 : i32
    %c0_i32_1 = arith.constant 0 : i32
    return %c0_i32, %c0_i32_0 : i32, i32
  }
  func.func @transform_6(%arg0: i32) -> (i32, i32) {
    %c0_i32 = arith.constant 0 : i32
    %c0_i32_0 = arith.constant 0 : i32
    %c0_i32_1 = arith.constant 0 : i32
    return %c0_i32, %c0_i32_0 : i32, i32
  }
  func.func @transform_7(%arg0: i32) -> (i32, i32) {
    %c0_i32 = arith.constant 0 : i32
    %c0_i32_0 = arith.constant 0 : i32
    %c0_i32_1 = arith.constant 0 : i32
    return %c0_i32, %c0_i32_0 : i32, i32
  }
  func.func @transform_8(%arg0: i32) -> (i32, i32) {
    %c0_i32 = arith.constant 0 : i32
    %c0_i32_0 = arith.constant 0 : i32
    %c0_i32_1 = arith.constant 0 : i32
    return %c0_i32, %c0_i32_0 : i32, i32
  }
  func.func @transform_9(%arg0: i32) -> (i32, i32) {
    %c0_i32 = arith.constant 0 : i32
    %c0_i32_0 = arith.constant 0 : i32
    %c0_i32_1 = arith.constant 0 : i32
    return %c0_i32, %c0_i32_0 : i32, i32
  }
  func.func @transform_10(%arg0: i32) -> (i32, i32) {
    %c0_i32 = arith.constant 0 : i32
    %c0_i32_0 = arith.constant 0 : i32
    %c0_i32_1 = arith.constant 0 : i32
    return %c0_i32, %c0_i32_0 : i32, i32
  }
  func.func @transform_11(%arg0: i32) -> (i32, i32) {
    %c0_i32 = arith.constant 0 : i32
    %c0_i32_0 = arith.constant 0 : i32
    %c0_i32_1 = arith.constant 0 : i32
    return %c0_i32, %c0_i32_0 : i32, i32
  }
  func.func @transform_12(%arg0: i32) -> (i32, i32) {
    %c0_i32 = arith.constant 0 : i32
    %c0_i32_0 = arith.constant 0 : i32
    %c0_i32_1 = arith.constant 0 : i32
    return %c0_i32, %c0_i32_0 : i32, i32
  }
  func.func @transform_13(%arg0: i32) -> (i32, i32) {
    %c0_i32 = arith.constant 0 : i32
    %c0_i32_0 = arith.constant 0 : i32
    %c0_i32_1 = arith.constant 0 : i32
    return %c0_i32, %c0_i32_0 : i32, i32
  }
  func.func @transform_14(%arg0: i32) -> (i32, i32) {
    %c0_i32 = arith.constant 0 : i32
    %c0_i32_0 = arith.constant 0 : i32
    %c0_i32_1 = arith.constant 0 : i32
    return %c0_i32, %c0_i32_0 : i32, i32
  }
  func.func @transform_15(%arg0: i32) -> (i32, i32) {
    %c0_i32 = arith.constant 0 : i32
    %c0_i32_0 = arith.constant 0 : i32
    %c0_i32_1 = arith.constant 0 : i32
    return %c0_i32, %c0_i32_0 : i32, i32
  }
  func.func @transform_16(%arg0: i32) -> (i32, i32) {
    %c0_i32 = arith.constant 0 : i32
    %c0_i32_0 = arith.constant 0 : i32
    %c0_i32_1 = arith.constant 0 : i32
    return %c0_i32, %c0_i32_0 : i32, i32
  }
  func.func @transform_17(%arg0: i32) -> (i32, i32) {
    %c0_i32 = arith.constant 0 : i32
    %c0_i32_0 = arith.constant 0 : i32
    %c0_i32_1 = arith.constant 0 : i32
    return %c0_i32, %c0_i32_0 : i32, i32
  }
  func.func @transform_18(%arg0: i32) -> (i32, i32) {
    %c0_i32 = arith.constant 0 : i32
    %c0_i32_0 = arith.constant 0 : i32
    %c0_i32_1 = arith.constant 0 : i32
    return %c0_i32, %c0_i32_0 : i32, i32
  }
  func.func @transform_19(%arg0: i32) -> (i32, i32) {
    %c0_i32 = arith.constant 0 : i32
    %c0_i32_0 = arith.constant 0 : i32
    %c0_i32_1 = arith.constant 0 : i32
    return %c0_i32, %c0_i32_0 : i32, i32
  }
  func.func @transform_20(%arg0: i32) -> (i32, i32) {
    %c0_i32 = arith.constant 0 : i32
    %c0_i32_0 = arith.constant 0 : i32
    %c0_i32_1 = arith.constant 0 : i32
    return %c0_i32, %c0_i32_0 : i32, i32
  }
  func.func @transform_21(%arg0: i32) -> (i32, i32) {
    %c0_i32 = arith.constant 0 : i32
    %c0_i32_0 = arith.constant 0 : i32
    %c0_i32_1 = arith.constant 0 : i32
    return %c0_i32, %c0_i32_0 : i32, i32
  }
  func.func @transform_22(%arg0: i32) -> (i32, i32) {
    %c0_i32 = arith.constant 0 : i32
    %c0_i32_0 = arith.constant 0 : i32
    %c0_i32_1 = arith.constant 0 : i32
    return %c0_i32, %c0_i32_0 : i32, i32
  }
  func.func @transform_23(%arg0: i32) -> (i32, i32) {
    %c0_i32 = arith.constant 0 : i32
    %c0_i32_0 = arith.constant 0 : i32
    %c0_i32_1 = arith.constant 0 : i32
    return %c0_i32, %c0_i32_0 : i32, i32
  }
  func.func @transform_24(%arg0: i32) -> (i32, i32) {
    %c0_i32 = arith.constant 0 : i32
    %c0_i32_0 = arith.constant 0 : i32
    %c0_i32_1 = arith.constant 0 : i32
    return %c0_i32, %c0_i32_0 : i32, i32
  }
  func.func @transform_25(%arg0: i32) -> (i32, i32) {
    %c0_i32 = arith.constant 0 : i32
    %c0_i32_0 = arith.constant 0 : i32
    %c0_i32_1 = arith.constant 0 : i32
    return %c0_i32, %c0_i32_0 : i32, i32
  }
  func.func @transform_26(%arg0: i32) -> (i32, i32) {
    %c0_i32 = arith.constant 0 : i32
    %c0_i32_0 = arith.constant 0 : i32
    %c0_i32_1 = arith.constant 0 : i32
    return %c0_i32, %c0_i32_0 : i32, i32
  }
  func.func @transform_27(%arg0: i32) -> (i32, i32) {
    %c0_i32 = arith.constant 0 : i32
    %c0_i32_0 = arith.constant 0 : i32
    %c0_i32_1 = arith.constant 0 : i32
    return %c0_i32, %c0_i32_0 : i32, i32
  }
  func.func @transform_28(%arg0: i32) -> (i32, i32) {
    %c0_i32 = arith.constant 0 : i32
    %c0_i32_0 = arith.constant 0 : i32
    %c0_i32_1 = arith.constant 0 : i32
    return %c0_i32, %c0_i32_0 : i32, i32
  }
  func.func @transform_29(%arg0: i32) -> (i32, i32, i32) {
    %c0_i32 = arith.constant 0 : i32
    %c0_i32_0 = arith.constant 0 : i32
    %c0_i32_1 = arith.constant 0 : i32
    return %arg0, %c0_i32, %c0_i32_0 : i32, i32, i32
  }
  func.func @transform_30(%arg0: i32) -> (i32, i32, i32) {
    %c0_i32 = arith.constant 0 : i32
    %c0_i32_0 = arith.constant 0 : i32
    %c0_i32_1 = arith.constant 0 : i32
    return %arg0, %c0_i32, %c0_i32_0 : i32, i32, i32
  }
}

</mosaic_0001>

<llo_original>
// kernel: tatlmp_forward.1
$region0: #{tatlmp_forward.1}
  #allocation0 [shape = 'u32[]', space=smem, size = 0x4, offset = 0x4, fixed_abs, tag = 'smem constant byte address 0x4 - core index']
  #allocation1 [shape = 'u32[144,128]{1,0:T(1,128)}', space=vmem, size = 0x12000, scoped, tag = 'internal scratch']
  #allocation2 [shape = 'f32[8,32]{1,0:T(8,128)}', space=vmem, size = 0x1000, scoped, tag = 'scratch operand']
  #allocation3 [shape = 'f32[1,1]{1,0:T(1,128)S(1)}', space=vmem, size = 0x200, scoped, tag = 'scoped memory for tatlmp_forward.1']
  #allocation4 [shape = 'f32[1,1]{1,0:T(1,128)S(1)}', space=vmem, size = 0x200, scoped, tag = 'scoped memory for tatlmp_forward.1']
  %s0 = inlined_call_operand.smem [shape: u32[31], index: -1, kind: input, shape index: {}]
  %s1 = sld [smem:[%s0]]
  %s2 = scalar_lea.smem %s0, 1
  %s3 = sld [smem:[%s2]]
  %s4 = scalar_lea.smem %s0, 2
  %s5 = sld [smem:[%s4]]
  %s6 = scalar_lea.smem %s0, 3
  %s7 = sld [smem:[%s6]]
  %s8 = scalar_lea.smem %s0, 4
  %s9 = sld [smem:[%s8]]
  %s10 = scalar_lea.smem %s0, 5
  %s11 = sld [smem:[%s10]]
  %s12 = scalar_lea.smem %s0, 6
  %s13 = sld [smem:[%s12]]
  %s14 = scalar_lea.smem %s0, 7
  %s15 = sld [smem:[%s14]]
  %s16 = scalar_lea.smem %s0, 8
  %s17 = sld [smem:[%s16]]
  %s18 = scalar_lea.smem %s0, 9
  %s19 = sld [smem:[%s18]]
  %s20 = scalar_lea.smem %s0, 10
  %s21 = sld [smem:[%s20]]
  %s22 = scalar_lea.smem %s0, 11
  %s23 = sld [smem:[%s22]]
  %s24 = scalar_lea.smem %s0, 12
  %s25 = sld [smem:[%s24]]
  %s26 = scalar_lea.smem %s0, 13
  %s27 = sld [smem:[%s26]]
  %s28 = scalar_lea.smem %s0, 14
  %s29 = sld [smem:[%s28]]
  %s30 = scalar_lea.smem %s0, 15
  %s31 = sld [smem:[%s30]]
  %s32 = scalar_lea.smem %s0, 16
  %s33 = sld [smem:[%s32]]
  %s34 = scalar_lea.smem %s0, 17
  %s35 = sld [smem:[%s34]]
  %s36 = scalar_lea.smem %s0, 18
  %s37 = sld [smem:[%s36]]
  %s38 = scalar_lea.smem %s0, 19
  %s39 = sld [smem:[%s38]]
  %s40 = scalar_lea.smem %s0, 20
  %s41 = sld [smem:[%s40]]
  %s42 = scalar_lea.smem %s0, 21
  %s43 = sld [smem:[%s42]]
  %s44 = scalar_lea.smem %s0, 22
  %s45 = sld [smem:[%s44]]
  %s46 = scalar_lea.smem %s0, 23
  %s47 = sld [smem:[%s46]]
  %s48 = scalar_lea.smem %s0, 24
  %s49 = sld [smem:[%s48]]
  %s50 = scalar_lea.smem %s0, 25
  %s51 = sld [smem:[%s50]]
  %s52 = scalar_lea.smem %s0, 26
  %s53 = sld [smem:[%s52]]
  %s54 = scalar_lea.smem %s0, 27
  %s55 = sld [smem:[%s54]]
  %s56 = scalar_lea.smem %s0, 28
  %s57 = sld [smem:[%s56]]
  %s58 = scalar_lea.smem %s0, 29
  %s59 = sld [smem:[%s58]]
  %s60 = scalar_lea.smem %s0, 30
  %s61 = sld [smem:[%s60]]
  %62 = xla_tuple %s59, %s61
  %s63 = sld [smem:[#allocation0]]
  $region157: #{tatlmp_forward.1} parent=0
    _
  %s65 = ssub.s32 1, %s63
  %s66 = scalar_select 0, %s65, %s63
  %v67 = vstv %s19
  %68 = vst [vmem:[#allocation3] sm:$0x1] %v67
  %v69 = vstv %s33
  %70 = vst [vmem:[#allocation4] sm:$0x1] %v69
  $region1: #{tatlmp_forward.1} parent=0
    #allocation5 [shape = 'u8[8192]{0}', space=vmem, size = 0x2000, scoped, tag = 'output window, operand 0']
    #allocation6 [shape = 's32[2]{0}', space=sflag, size = 0x8, scoped, tag = 'scoped memory for tatlmp_forward.1']
    #allocation7 [shape = 'u8[8192]{0}', space=vmem, size = 0x2000, scoped, tag = 'output window, operand 1']
    #allocation8 [shape = 's32[2]{0}', space=sflag, size = 0x8, scoped, tag = 'scoped memory for tatlmp_forward.1']
    %71 = vsyncpa [#allocation6], 0
    %s72 = scalar_lea.sflag [#allocation6], 1
    %73 = vsyncpa %s72, 0
    %74 = vsyncpa [#allocation8], 0
    %s75 = scalar_lea.sflag [#allocation8], 1
    %76 = vsyncpa %s75, 0
    loop: start=0, step=1, limit=4
    $region2: #{tatlmp_forward.1} parent=1 // loop_pre_header
      _
    $region3: #{tatlmp_forward.1} parent=1 // loop_header
      %s78 = sphi 0, %s82
      %p79 = scmp.ge.s32.totalorder %s78, 4
      %s88 = sphi 0, %s90
      %s91 = sphi 0, %s88
      %s92 = sphi 0, %s91
      %s108 = sphi 0, %s92
      %s114 = sphi 0, %s116
      %s117 = sphi 0, %s114
      %s118 = sphi 0, %s117
      %s134 = sphi 0, %s118
      %s140 = sphi 0, %s142
      %s143 = sphi 0, %s140
      %s144 = sphi 0, %s143
      %s160 = sphi 0, %s144
      %s166 = sphi 0, %s168
      %s169 = sphi 0, %s166
      %s170 = sphi 0, %s169
      %s186 = sphi 0, %s170
      %s192 = sphi 0, %s194
      %s195 = sphi 0, %s192
      %s196 = sphi 0, %s195
      %s212 = sphi 0, %s196
      %s216 = sphi 0, %s216
      %s218 = sphi 0, %s216
      %s219 = sphi 0, %s218
      %s233 = sphi 0, %s219
      %s237 = sphi 0, %s237
      %s239 = sphi 0, %s237
      %s240 = sphi 0, %s239
      %s254 = sphi 0, %s240
      %s258 = sphi 0, %s258
      %s260 = sphi 0, %s258
      %s261 = sphi 0, %s260
      %s275 = sphi 0, %s261
      %s279 = sphi 0, %s279
      %s281 = sphi 0, %s279
      %s282 = sphi 0, %s281
      %s296 = sphi 0, %s282
      %s300 = sphi 0, %s300
      %s302 = sphi 0, %s300
      %s303 = sphi 0, %s302
      %s317 = sphi 0, %s303
      %s321 = sphi 0, %s321
      %s323 = sphi 0, %s321
      %s324 = sphi 0, %s323
      %s338 = sphi 0, %s324
      %s342 = sphi 0, %s342
      %s344 = sphi 0, %s342
      %s345 = sphi 0, %s344
      %s359 = sphi 0, %s345
      %s363 = sphi 0, %s363
      %s365 = sphi 0, %s363
      %s366 = sphi 0, %s365
      %s380 = sphi 0, %s366
      %s384 = sphi 0, %s384
      %s386 = sphi 0, %s384
      %s387 = sphi 0, %s386
      %s401 = sphi 0, %s387
      %s405 = sphi 0, %s405
      %s407 = sphi 0, %s405
      %s408 = sphi 0, %s407
      %s422 = sphi 0, %s408
      %s426 = sphi 0, %s426
      %s428 = sphi 0, %s426
      %s429 = sphi 0, %s428
      %s443 = sphi 0, %s429
      %s447 = sphi 0, %s447
      %s449 = sphi 0, %s447
      %s450 = sphi 0, %s449
      %s464 = sphi 0, %s450
      %s468 = sphi 0, %s468
      %s470 = sphi 0, %s468
      %s471 = sphi 0, %s470
      %s485 = sphi 0, %s471
      %s489 = sphi 0, %s489
      %s491 = sphi 0, %s489
      %s492 = sphi 0, %s491
      %s506 = sphi 0, %s492
      %s510 = sphi 0, %s510
      %s512 = sphi 0, %s510
      %s513 = sphi 0, %s512
      %s527 = sphi 0, %s513
      %s531 = sphi 0, %s531
      %s533 = sphi 0, %s531
      %s534 = sphi 0, %s533
      %s548 = sphi 0, %s534
      %s552 = sphi 0, %s552
      %s554 = sphi 0, %s552
      %s555 = sphi 0, %s554
      %s569 = sphi 0, %s555
      %s573 = sphi 0, %s573
      %s575 = sphi 0, %s573
      %s576 = sphi 0, %s575
      %s590 = sphi 0, %s576
      %s594 = sphi 0, %s594
      %s596 = sphi 0, %s594
      %s597 = sphi 0, %s596
      %s611 = sphi 0, %s597
      %s615 = sphi 0, %s615
      %s617 = sphi 0, %s615
      %s618 = sphi 0, %s617
      %s632 = sphi 0, %s618
      %s636 = sphi 0, %s636
      %s638 = sphi 0, %s636
      %s639 = sphi 0, %s638
      %s653 = sphi 0, %s639
      %s657 = sphi 0, %s657
      %s659 = sphi 0, %s657
      %s660 = sphi 0, %s659
      %s674 = sphi 0, %s660
      %s678 = sphi 0, %s678
      %s680 = sphi 0, %s678
      %s681 = sphi 0, %s680
      %s695 = sphi 0, %s681
      %s699 = sphi 0, %s699
      %s701 = sphi 0, %s699
      %s702 = sphi 0, %s701
      %s716 = sphi 0, %s702
      %s722 = sphi 0, %s724
      %s725 = sphi 0, %s722
      %s726 = sphi 0, %s725
      %s742 = sphi 0, %s726
      %s748 = sphi 0, %s750
      %s751 = sphi 0, %s748
      %s752 = sphi 0, %s751
      %s768 = sphi 0, %s752
    $region4: #{tatlmp_forward.1} parent=1 // loop_header_branch
      %81 = sbr.rel (%p79) target = $region8
    $region5: #{tatlmp_forward.1} parent=1 // loop_body
      %s83 = ssub.s32 %s78, 1
      %s84 = ssub.s32 %s78, 2
      %s85 = sadd.s32 %s78, 1
      %s86 = ssub.s32 %s78, %s85
      %p87 = scmp.eq.s32.totalorder %s86, 0
      %s89 = sadd.s32 %s88, 1
      %s90 = scalar_select %p87, %s88, %s89
      %p93 = pneg %p87
      %p94 = scmp.eq.s32.totalorder %s78, 1
      %p95 = por %p93, %p94
      %p96 = scmp.ne.s32.totalorder %s88, %s91
      %p97 = scmp.eq.s32.totalorder %s78, 0
      %p98 = por %p96, %p97
      %p99 = scmp.ne.s32.totalorder %s88, %s91
      %p100 = scmp.eq.s32.totalorder %s83, 1
      %p101 = por %p99, %p100
      %p102 = scmp.ne.s32.totalorder %s91, %s92
      %p103 = scmp.eq.s32.totalorder %s83, 0
      %p104 = por %p102, %p103
      %p105 = scmp.ne.s32.totalorder %s91, %s92
      %p106 = scmp.eq.s32.totalorder %s84, 1
      %p107 = por %p105, %p106
      %p109 = scmp.ne.s32.totalorder %s92, %s108
      %p110 = scmp.eq.s32.totalorder %s84, 0
      %p111 = por %p109, %p110
      %s112 = ssub.s32 %s78, %s85
      %p113 = scmp.eq.s32.totalorder %s112, 0
      %s115 = sadd.s32 %s114, 1
      %s116 = scalar_select %p113, %s114, %s115
      %p119 = pneg %p113
      %p120 = scmp.eq.s32.totalorder %s78, 1
      %p121 = por %p119, %p120
      %p122 = scmp.ne.s32.totalorder %s114, %s117
      %p123 = scmp.eq.s32.totalorder %s78, 0
      %p124 = por %p122, %p123
      %p125 = scmp.ne.s32.totalorder %s114, %s117
      %p126 = scmp.eq.s32.totalorder %s83, 1
      %p127 = por %p125, %p126
      %p128 = scmp.ne.s32.totalorder %s117, %s118
      %p129 = scmp.eq.s32.totalorder %s83, 0
      %p130 = por %p128, %p129
      %p131 = scmp.ne.s32.totalorder %s117, %s118
      %p132 = scmp.eq.s32.totalorder %s84, 1
      %p133 = por %p131, %p132
      %p135 = scmp.ne.s32.totalorder %s118, %s134
      %p136 = scmp.eq.s32.totalorder %s84, 0
      %p137 = por %p135, %p136
      %s138 = ssub.s32 %s78, %s85
      %p139 = scmp.eq.s32.totalorder %s138, 0
      %s141 = sadd.s32 %s140, 1
      %s142 = scalar_select %p139, %s140, %s141
      %p145 = pneg %p139
      %p146 = scmp.eq.s32.totalorder %s78, 1
      %p147 = por %p145, %p146
      %p148 = scmp.ne.s32.totalorder %s140, %s143
      %p149 = scmp.eq.s32.totalorder %s78, 0
      %p150 = por %p148, %p149
      %p151 = scmp.ne.s32.totalorder %s140, %s143
      %p152 = scmp.eq.s32.totalorder %s83, 1
      %p153 = por %p151, %p152
      %p154 = scmp.ne.s32.totalorder %s143, %s144
      %p155 = scmp.eq.s32.totalorder %s83, 0
      %p156 = por %p154, %p155
      %p157 = scmp.ne.s32.totalorder %s143, %s144
      %p158 = scmp.eq.s32.totalorder %s84, 1
      %p159 = por %p157, %p158
      %p161 = scmp.ne.s32.totalorder %s144, %s160
      %p162 = scmp.eq.s32.totalorder %s84, 0
      %p163 = por %p161, %p162
      %s164 = ssub.s32 %s78, %s85
      %p165 = scmp.eq.s32.totalorder %s164, 0
      %s167 = sadd.s32 %s166, 1
      %s168 = scalar_select %p165, %s166, %s167
      %p171 = pneg %p165
      %p172 = scmp.eq.s32.totalorder %s78, 1
      %p173 = por %p171, %p172
      %p174 = scmp.ne.s32.totalorder %s166, %s169
      %p175 = scmp.eq.s32.totalorder %s78, 0
      %p176 = por %p174, %p175
      %p177 = scmp.ne.s32.totalorder %s166, %s169
      %p178 = scmp.eq.s32.totalorder %s83, 1
      %p179 = por %p177, %p178
      %p180 = scmp.ne.s32.totalorder %s169, %s170
      %p181 = scmp.eq.s32.totalorder %s83, 0
      %p182 = por %p180, %p181
      %p183 = scmp.ne.s32.totalorder %s169, %s170
      %p184 = scmp.eq.s32.totalorder %s84, 1
      %p185 = por %p183, %p184
      %p187 = scmp.ne.s32.totalorder %s170, %s186
      %p188 = scmp.eq.s32.totalorder %s84, 0
      %p189 = por %p187, %p188
      %s190 = ssub.s32 %s78, %s85
      %p191 = scmp.eq.s32.totalorder %s190, 0
      %s193 = sadd.s32 %s192, 1
      %s194 = scalar_select %p191, %s192, %s193
      %p197 = pneg %p191
      %p198 = scmp.eq.s32.totalorder %s78, 1
      %p199 = por %p197, %p198
      %p200 = scmp.ne.s32.totalorder %s192, %s195
      %p201 = scmp.eq.s32.totalorder %s78, 0
      %p202 = por %p200, %p201
      %p203 = scmp.ne.s32.totalorder %s192, %s195
      %p204 = scmp.eq.s32.totalorder %s83, 1
      %p205 = por %p203, %p204
      %p206 = scmp.ne.s32.totalorder %s195, %s196
      %p207 = scmp.eq.s32.totalorder %s83, 0
      %p208 = por %p206, %p207
      %p209 = scmp.ne.s32.totalorder %s195, %s196
      %p210 = scmp.eq.s32.totalorder %s84, 1
      %p211 = por %p209, %p210
      %p213 = scmp.ne.s32.totalorder %s196, %s212
      %p214 = scmp.eq.s32.totalorder %s84, 0
      %p215 = por %p213, %p214
      %s217 = sadd.s32 %s216, 1
      %p220 = scmp.eq.s32.totalorder %s78, 1
      %p221 = scmp.ne.s32.totalorder %s216, %s218
      %p222 = scmp.eq.s32.totalorder %s78, 0
      %p223 = por %p221, %p222
      %p224 = scmp.ne.s32.totalorder %s216, %s218
      %p225 = scmp.eq.s32.totalorder %s83, 1
      %p226 = por %p224, %p225
      %p227 = scmp.ne.s32.totalorder %s218, %s219
      %p228 = scmp.eq.s32.totalorder %s83, 0
      %p229 = por %p227, %p228
      %p230 = scmp.ne.s32.totalorder %s218, %s219
      %p231 = scmp.eq.s32.totalorder %s84, 1
      %p232 = por %p230, %p231
      %p234 = scmp.ne.s32.totalorder %s219, %s233
      %p235 = scmp.eq.s32.totalorder %s84, 0
      %p236 = por %p234, %p235
      %s238 = sadd.s32 %s237, 1
      %p241 = scmp.eq.s32.totalorder %s78, 1
      %p242 = scmp.ne.s32.totalorder %s237, %s239
      %p243 = scmp.eq.s32.totalorder %s78, 0
      %p244 = por %p242, %p243
      %p245 = scmp.ne.s32.totalorder %s237, %s239
      %p246 = scmp.eq.s32.totalorder %s83, 1
      %p247 = por %p245, %p246
      %p248 = scmp.ne.s32.totalorder %s239, %s240
      %p249 = scmp.eq.s32.totalorder %s83, 0
      %p250 = por %p248, %p249
      %p251 = scmp.ne.s32.totalorder %s239, %s240
      %p252 = scmp.eq.s32.totalorder %s84, 1
      %p253 = por %p251, %p252
      %p255 = scmp.ne.s32.totalorder %s240, %s254
      %p256 = scmp.eq.s32.totalorder %s84, 0
      %p257 = por %p255, %p256
      %s259 = sadd.s32 %s258, 1
      %p262 = scmp.eq.s32.totalorder %s78, 1
      %p263 = scmp.ne.s32.totalorder %s258, %s260
      %p264 = scmp.eq.s32.totalorder %s78, 0
      %p265 = por %p263, %p264
      %p266 = scmp.ne.s32.totalorder %s258, %s260
      %p267 = scmp.eq.s32.totalorder %s83, 1
      %p268 = por %p266, %p267
      %p269 = scmp.ne.s32.totalorder %s260, %s261
      %p270 = scmp.eq.s32.totalorder %s83, 0
      %p271 = por %p269, %p270
      %p272 = scmp.ne.s32.totalorder %s260, %s261
      %p273 = scmp.eq.s32.totalorder %s84, 1
      %p274 = por %p272, %p273
      %p276 = scmp.ne.s32.totalorder %s261, %s275
      %p277 = scmp.eq.s32.totalorder %s84, 0
      %p278 = por %p276, %p277
      %s280 = sadd.s32 %s279, 1
      %p283 = scmp.eq.s32.totalorder %s78, 1
      %p284 = scmp.ne.s32.totalorder %s279, %s281
      %p285 = scmp.eq.s32.totalorder %s78, 0
      %p286 = por %p284, %p285
      %p287 = scmp.ne.s32.totalorder %s279, %s281
      %p288 = scmp.eq.s32.totalorder %s83, 1
      %p289 = por %p287, %p288
      %p290 = scmp.ne.s32.totalorder %s281, %s282
      %p291 = scmp.eq.s32.totalorder %s83, 0
      %p292 = por %p290, %p291
      %p293 = scmp.ne.s32.totalorder %s281, %s282
      %p294 = scmp.eq.s32.totalorder %s84, 1
      %p295 = por %p293, %p294
      %p297 = scmp.ne.s32.totalorder %s282, %s296
      %p298 = scmp.eq.s32.totalorder %s84, 0
      %p299 = por %p297, %p298
      %s301 = sadd.s32 %s300, 1
      %p304 = scmp.eq.s32.totalorder %s78, 1
      %p305 = scmp.ne.s32.totalorder %s300, %s302
      %p306 = scmp.eq.s32.totalorder %s78, 0
      %p307 = por %p305, %p306
      %p308 = scmp.ne.s32.totalorder %s300, %s302
      %p309 = scmp.eq.s32.totalorder %s83, 1
      %p310 = por %p308, %p309
      %p311 = scmp.ne.s32.totalorder %s302, %s303
      %p312 = scmp.eq.s32.totalorder %s83, 0
      %p313 = por %p311, %p312
      %p314 = scmp.ne.s32.totalorder %s302, %s303
      %p315 = scmp.eq.s32.totalorder %s84, 1
      %p316 = por %p314, %p315
      %p318 = scmp.ne.s32.totalorder %s303, %s317
      %p319 = scmp.eq.s32.totalorder %s84, 0
      %p320 = por %p318, %p319
      %s322 = sadd.s32 %s321, 1
      %p325 = scmp.eq.s32.totalorder %s78, 1
      %p326 = scmp.ne.s32.totalorder %s321, %s323
      %p327 = scmp.eq.s32.totalorder %s78, 0
      %p328 = por %p326, %p327
      %p329 = scmp.ne.s32.totalorder %s321, %s323
      %p330 = scmp.eq.s32.totalorder %s83, 1
      %p331 = por %p329, %p330
      %p332 = scmp.ne.s32.totalorder %s323, %s324
      %p333 = scmp.eq.s32.totalorder %s83, 0
      %p334 = por %p332, %p333
      %p335 = scmp.ne.s32.totalorder %s323, %s324
      %p336 = scmp.eq.s32.totalorder %s84, 1
      %p337 = por %p335, %p336
      %p339 = scmp.ne.s32.totalorder %s324, %s338
      %p340 = scmp.eq.s32.totalorder %s84, 0
      %p341 = por %p339, %p340
      %s343 = sadd.s32 %s342, 1
      %p346 = scmp.eq.s32.totalorder %s78, 1
      %p347 = scmp.ne.s32.totalorder %s342, %s344
      %p348 = scmp.eq.s32.totalorder %s78, 0
      %p349 = por %p347, %p348
      %p350 = scmp.ne.s32.totalorder %s342, %s344
      %p351 = scmp.eq.s32.totalorder %s83, 1
      %p352 = por %p350, %p351
      %p353 = scmp.ne.s32.totalorder %s344, %s345
      %p354 = scmp.eq.s32.totalorder %s83, 0
      %p355 = por %p353, %p354
      %p356 = scmp.ne.s32.totalorder %s344, %s345
      %p357 = scmp.eq.s32.totalorder %s84, 1
      %p358 = por %p356, %p357
      %p360 = scmp.ne.s32.totalorder %s345, %s359
      %p361 = scmp.eq.s32.totalorder %s84, 0
      %p362 = por %p360, %p361
      %s364 = sadd.s32 %s363, 1
      %p367 = scmp.eq.s32.totalorder %s78, 1
      %p368 = scmp.ne.s32.totalorder %s363, %s365
      %p369 = scmp.eq.s32.totalorder %s78, 0
      %p370 = por %p368, %p369
      %p371 = scmp.ne.s32.totalorder %s363, %s365
      %p372 = scmp.eq.s32.totalorder %s83, 1
      %p373 = por %p371, %p372
      %p374 = scmp.ne.s32.totalorder %s365, %s366
      %p375 = scmp.eq.s32.totalorder %s83, 0
      %p376 = por %p374, %p375
      %p377 = scmp.ne.s32.totalorder %s365, %s366
      %p378 = scmp.eq.s32.totalorder %s84, 1
      %p379 = por %p377, %p378
      %p381 = scmp.ne.s32.totalorder %s366, %s380
      %p382 = scmp.eq.s32.totalorder %s84, 0
      %p383 = por %p381, %p382
      %s385 = sadd.s32 %s384, 1
      %p388 = scmp.eq.s32.totalorder %s78, 1
      %p389 = scmp.ne.s32.totalorder %s384, %s386
      %p390 = scmp.eq.s32.totalorder %s78, 0
      %p391 = por %p389, %p390
      %p392 = scmp.ne.s32.totalorder %s384, %s386
      %p393 = scmp.eq.s32.totalorder %s83, 1
      %p394 = por %p392, %p393
      %p395 = scmp.ne.s32.totalorder %s386, %s387
      %p396 = scmp.eq.s32.totalorder %s83, 0
      %p397 = por %p395, %p396
      %p398 = scmp.ne.s32.totalorder %s386, %s387
      %p399 = scmp.eq.s32.totalorder %s84, 1
      %p400 = por %p398, %p399
      %p402 = scmp.ne.s32.totalorder %s387, %s401
      %p403 = scmp.eq.s32.totalorder %s84, 0
      %p404 = por %p402, %p403
      %s406 = sadd.s32 %s405, 1
      %p409 = scmp.eq.s32.totalorder %s78, 1
      %p410 = scmp.ne.s32.totalorder %s405, %s407
      %p411 = scmp.eq.s32.totalorder %s78, 0
      %p412 = por %p410, %p411
      %p413 = scmp.ne.s32.totalorder %s405, %s407
      %p414 = scmp.eq.s32.totalorder %s83, 1
      %p415 = por %p413, %p414
      %p416 = scmp.ne.s32.totalorder %s407, %s408
      %p417 = scmp.eq.s32.totalorder %s83, 0
      %p418 = por %p416, %p417
      %p419 = scmp.ne.s32.totalorder %s407, %s408
      %p420 = scmp.eq.s32.totalorder %s84, 1
      %p421 = por %p419, %p420
      %p423 = scmp.ne.s32.totalorder %s408, %s422
      %p424 = scmp.eq.s32.totalorder %s84, 0
      %p425 = por %p423, %p424
      %s427 = sadd.s32 %s426, 1
      %p430 = scmp.eq.s32.totalorder %s78, 1
      %p431 = scmp.ne.s32.totalorder %s426, %s428
      %p432 = scmp.eq.s32.totalorder %s78, 0
      %p433 = por %p431, %p432
      %p434 = scmp.ne.s32.totalorder %s426, %s428
      %p435 = scmp.eq.s32.totalorder %s83, 1
      %p436 = por %p434, %p435
      %p437 = scmp.ne.s32.totalorder %s428, %s429
      %p438 = scmp.eq.s32.totalorder %s83, 0
      %p439 = por %p437, %p438
      %p440 = scmp.ne.s32.totalorder %s428, %s429
      %p441 = scmp.eq.s32.totalorder %s84, 1
      %p442 = por %p440, %p441
      %p444 = scmp.ne.s32.totalorder %s429, %s443
      %p445 = scmp.eq.s32.totalorder %s84, 0
      %p446 = por %p444, %p445
      %s448 = sadd.s32 %s447, 1
      %p451 = scmp.eq.s32.totalorder %s78, 1
      %p452 = scmp.ne.s32.totalorder %s447, %s449
      %p453 = scmp.eq.s32.totalorder %s78, 0
      %p454 = por %p452, %p453
      %p455 = scmp.ne.s32.totalorder %s447, %s449
      %p456 = scmp.eq.s32.totalorder %s83, 1
      %p457 = por %p455, %p456
      %p458 = scmp.ne.s32.totalorder %s449, %s450
      %p459 = scmp.eq.s32.totalorder %s83, 0
      %p460 = por %p458, %p459
      %p461 = scmp.ne.s32.totalorder %s449, %s450
      %p462 = scmp.eq.s32.totalorder %s84, 1
      %p463 = por %p461, %p462
      %p465 = scmp.ne.s32.totalorder %s450, %s464
      %p466 = scmp.eq.s32.totalorder %s84, 0
      %p467 = por %p465, %p466
      %s469 = sadd.s32 %s468, 1
      %p472 = scmp.eq.s32.totalorder %s78, 1
      %p473 = scmp.ne.s32.totalorder %s468, %s470
      %p474 = scmp.eq.s32.totalorder %s78, 0
      %p475 = por %p473, %p474
      %p476 = scmp.ne.s32.totalorder %s468, %s470
      %p477 = scmp.eq.s32.totalorder %s83, 1
      %p478 = por %p476, %p477
      %p479 = scmp.ne.s32.totalorder %s470, %s471
      %p480 = scmp.eq.s32.totalorder %s83, 0
      %p481 = por %p479, %p480
      %p482 = scmp.ne.s32.totalorder %s470, %s471
      %p483 = scmp.eq.s32.totalorder %s84, 1
      %p484 = por %p482, %p483
      %p486 = scmp.ne.s32.totalorder %s471, %s485
      %p487 = scmp.eq.s32.totalorder %s84, 0
      %p488 = por %p486, %p487
      %s490 = sadd.s32 %s489, 1
      %p493 = scmp.eq.s32.totalorder %s78, 1
      %p494 = scmp.ne.s32.totalorder %s489, %s491
      %p495 = scmp.eq.s32.totalorder %s78, 0
      %p496 = por %p494, %p495
      %p497 = scmp.ne.s32.totalorder %s489, %s491
      %p498 = scmp.eq.s32.totalorder %s83, 1
      %p499 = por %p497, %p498
      %p500 = scmp.ne.s32.totalorder %s491, %s492
      %p501 = scmp.eq.s32.totalorder %s83, 0
      %p502 = por %p500, %p501
      %p503 = scmp.ne.s32.totalorder %s491, %s492
      %p504 = scmp.eq.s32.totalorder %s84, 1
      %p505 = por %p503, %p504
      %p507 = scmp.ne.s32.totalorder %s492, %s506
      %p508 = scmp.eq.s32.totalorder %s84, 0
      %p509 = por %p507, %p508
      %s511 = sadd.s32 %s510, 1
      %p514 = scmp.eq.s32.totalorder %s78, 1
      %p515 = scmp.ne.s32.totalorder %s510, %s512
      %p516 = scmp.eq.s32.totalorder %s78, 0
      %p517 = por %p515, %p516
      %p518 = scmp.ne.s32.totalorder %s510, %s512
      %p519 = scmp.eq.s32.totalorder %s83, 1
      %p520 = por %p518, %p519
      %p521 = scmp.ne.s32.totalorder %s512, %s513
      %p522 = scmp.eq.s32.totalorder %s83, 0
      %p523 = por %p521, %p522
      %p524 = scmp.ne.s32.totalorder %s512, %s513
      %p525 = scmp.eq.s32.totalorder %s84, 1
      %p526 = por %p524, %p525
      %p528 = scmp.ne.s32.totalorder %s513, %s527
      %p529 = scmp.eq.s32.totalorder %s84, 0
      %p530 = por %p528, %p529
      %s532 = sadd.s32 %s531, 1
      %p535 = scmp.eq.s32.totalorder %s78, 1
      %p536 = scmp.ne.s32.totalorder %s531, %s533
      %p537 = scmp.eq.s32.totalorder %s78, 0
      %p538 = por %p536, %p537
      %p539 = scmp.ne.s32.totalorder %s531, %s533
      %p540 = scmp.eq.s32.totalorder %s83, 1
      %p541 = por %p539, %p540
      %p542 = scmp.ne.s32.totalorder %s533, %s534
      %p543 = scmp.eq.s32.totalorder %s83, 0
      %p544 = por %p542, %p543
      %p545 = scmp.ne.s32.totalorder %s533, %s534
      %p546 = scmp.eq.s32.totalorder %s84, 1
      %p547 = por %p545, %p546
      %p549 = scmp.ne.s32.totalorder %s534, %s548
      %p550 = scmp.eq.s32.totalorder %s84, 0
      %p551 = por %p549, %p550
      %s553 = sadd.s32 %s552, 1
      %p556 = scmp.eq.s32.totalorder %s78, 1
      %p557 = scmp.ne.s32.totalorder %s552, %s554
      %p558 = scmp.eq.s32.totalorder %s78, 0
      %p559 = por %p557, %p558
      %p560 = scmp.ne.s32.totalorder %s552, %s554
      %p561 = scmp.eq.s32.totalorder %s83, 1
      %p562 = por %p560, %p561
      %p563 = scmp.ne.s32.totalorder %s554, %s555
      %p564 = scmp.eq.s32.totalorder %s83, 0
      %p565 = por %p563, %p564
      %p566 = scmp.ne.s32.totalorder %s554, %s555
      %p567 = scmp.eq.s32.totalorder %s84, 1
      %p568 = por %p566, %p567
      %p570 = scmp.ne.s32.totalorder %s555, %s569
      %p571 = scmp.eq.s32.totalorder %s84, 0
      %p572 = por %p570, %p571
      %s574 = sadd.s32 %s573, 1
      %p577 = scmp.eq.s32.totalorder %s78, 1
      %p578 = scmp.ne.s32.totalorder %s573, %s575
      %p579 = scmp.eq.s32.totalorder %s78, 0
      %p580 = por %p578, %p579
      %p581 = scmp.ne.s32.totalorder %s573, %s575
      %p582 = scmp.eq.s32.totalorder %s83, 1
      %p583 = por %p581, %p582
      %p584 = scmp.ne.s32.totalorder %s575, %s576
      %p585 = scmp.eq.s32.totalorder %s83, 0
      %p586 = por %p584, %p585
      %p587 = scmp.ne.s32.totalorder %s575, %s576
      %p588 = scmp.eq.s32.totalorder %s84, 1
      %p589 = por %p587, %p588
      %p591 = scmp.ne.s32.totalorder %s576, %s590
      %p592 = scmp.eq.s32.totalorder %s84, 0
      %p593 = por %p591, %p592
      %s595 = sadd.s32 %s594, 1
      %p598 = scmp.eq.s32.totalorder %s78, 1
      %p599 = scmp.ne.s32.totalorder %s594, %s596
      %p600 = scmp.eq.s32.totalorder %s78, 0
      %p601 = por %p599, %p600
      %p602 = scmp.ne.s32.totalorder %s594, %s596
      %p603 = scmp.eq.s32.totalorder %s83, 1
      %p604 = por %p602, %p603
      %p605 = scmp.ne.s32.totalorder %s596, %s597
      %p606 = scmp.eq.s32.totalorder %s83, 0
      %p607 = por %p605, %p606
      %p608 = scmp.ne.s32.totalorder %s596, %s597
      %p609 = scmp.eq.s32.totalorder %s84, 1
      %p610 = por %p608, %p609
      %p612 = scmp.ne.s32.totalorder %s597, %s611
      %p613 = scmp.eq.s32.totalorder %s84, 0
      %p614 = por %p612, %p613
      %s616 = sadd.s32 %s615, 1
      %p619 = scmp.eq.s32.totalorder %s78, 1
      %p620 = scmp.ne.s32.totalorder %s615, %s617
      %p621 = scmp.eq.s32.totalorder %s78, 0
      %p622 = por %p620, %p621
      %p623 = scmp.ne.s32.totalorder %s615, %s617
      %p624 = scmp.eq.s32.totalorder %s83, 1
      %p625 = por %p623, %p624
      %p626 = scmp.ne.s32.totalorder %s617, %s618
      %p627 = scmp.eq.s32.totalorder %s83, 0
      %p628 = por %p626, %p627
      %p629 = scmp.ne.s32.totalorder %s617, %s618
      %p630 = scmp.eq.s32.totalorder %s84, 1
      %p631 = por %p629, %p630
      %p633 = scmp.ne.s32.totalorder %s618, %s632
      %p634 = scmp.eq.s32.totalorder %s84, 0
      %p635 = por %p633, %p634
      %s637 = sadd.s32 %s636, 1
      %p640 = scmp.eq.s32.totalorder %s78, 1
      %p641 = scmp.ne.s32.totalorder %s636, %s638
      %p642 = scmp.eq.s32.totalorder %s78, 0
      %p643 = por %p641, %p642
      %p644 = scmp.ne.s32.totalorder %s636, %s638
      %p645 = scmp.eq.s32.totalorder %s83, 1
      %p646 = por %p644, %p645
      %p647 = scmp.ne.s32.totalorder %s638, %s639
      %p648 = scmp.eq.s32.totalorder %s83, 0
      %p649 = por %p647, %p648
      %p650 = scmp.ne.s32.totalorder %s638, %s639
      %p651 = scmp.eq.s32.totalorder %s84, 1
      %p652 = por %p650, %p651
      %p654 = scmp.ne.s32.totalorder %s639, %s653
      %p655 = scmp.eq.s32.totalorder %s84, 0
      %p656 = por %p654, %p655
      %s658 = sadd.s32 %s657, 1
      %p661 = scmp.eq.s32.totalorder %s78, 1
      %p662 = scmp.ne.s32.totalorder %s657, %s659
      %p663 = scmp.eq.s32.totalorder %s78, 0
      %p664 = por %p662, %p663
      %p665 = scmp.ne.s32.totalorder %s657, %s659
      %p666 = scmp.eq.s32.totalorder %s83, 1
      %p667 = por %p665, %p666
      %p668 = scmp.ne.s32.totalorder %s659, %s660
      %p669 = scmp.eq.s32.totalorder %s83, 0
      %p670 = por %p668, %p669
      %p671 = scmp.ne.s32.totalorder %s659, %s660
      %p672 = scmp.eq.s32.totalorder %s84, 1
      %p673 = por %p671, %p672
      %p675 = scmp.ne.s32.totalorder %s660, %s674
      %p676 = scmp.eq.s32.totalorder %s84, 0
      %p677 = por %p675, %p676
      %s679 = sadd.s32 %s678, 1
      %p682 = scmp.eq.s32.totalorder %s78, 1
      %p683 = scmp.ne.s32.totalorder %s678, %s680
      %p684 = scmp.eq.s32.totalorder %s78, 0
      %p685 = por %p683, %p684
      %p686 = scmp.ne.s32.totalorder %s678, %s680
      %p687 = scmp.eq.s32.totalorder %s83, 1
      %p688 = por %p686, %p687
      %p689 = scmp.ne.s32.totalorder %s680, %s681
      %p690 = scmp.eq.s32.totalorder %s83, 0
      %p691 = por %p689, %p690
      %p692 = scmp.ne.s32.totalorder %s680, %s681
      %p693 = scmp.eq.s32.totalorder %s84, 1
      %p694 = por %p692, %p693
      %p696 = scmp.ne.s32.totalorder %s681, %s695
      %p697 = scmp.eq.s32.totalorder %s84, 0
      %p698 = por %p696, %p697
      %s700 = sadd.s32 %s699, 1
      %p703 = scmp.eq.s32.totalorder %s78, 1
      %p704 = scmp.ne.s32.totalorder %s699, %s701
      %p705 = scmp.eq.s32.totalorder %s78, 0
      %p706 = por %p704, %p705
      %p707 = scmp.ne.s32.totalorder %s699, %s701
      %p708 = scmp.eq.s32.totalorder %s83, 1
      %p709 = por %p707, %p708
      %p710 = scmp.ne.s32.totalorder %s701, %s702
      %p711 = scmp.eq.s32.totalorder %s83, 0
      %p712 = por %p710, %p711
      %p713 = scmp.ne.s32.totalorder %s701, %s702
      %p714 = scmp.eq.s32.totalorder %s84, 1
      %p715 = por %p713, %p714
      %p717 = scmp.ne.s32.totalorder %s702, %s716
      %p718 = scmp.eq.s32.totalorder %s84, 0
      %p719 = por %p717, %p718
      %s720 = ssub.s32 %s78, %s85
      %p721 = scmp.eq.s32.totalorder %s720, 0
      %s723 = sadd.s32 %s722, 1
      %s724 = scalar_select %p721, %s722, %s723
      %p727 = pneg %p721
      %p728 = scmp.eq.s32.totalorder %s78, 1
      %p729 = por %p727, %p728
      %p730 = scmp.ne.s32.totalorder %s722, %s725
      %p731 = scmp.eq.s32.totalorder %s78, 0
      %p732 = por %p730, %p731
      %p733 = scmp.ne.s32.totalorder %s722, %s725
      %p734 = scmp.eq.s32.totalorder %s83, 1
      %p735 = por %p733, %p734
      %p736 = scmp.ne.s32.totalorder %s725, %s726
      %p737 = scmp.eq.s32.totalorder %s83, 0
      %p738 = por %p736, %p737
      %p739 = scmp.ne.s32.totalorder %s725, %s726
      %p740 = scmp.eq.s32.totalorder %s84, 1
      %p741 = por %p739, %p740
      %p743 = scmp.ne.s32.totalorder %s726, %s742
      %p744 = scmp.eq.s32.totalorder %s84, 0
      %p745 = por %p743, %p744
      %s746 = ssub.s32 %s78, %s85
      %p747 = scmp.eq.s32.totalorder %s746, 0
      %s749 = sadd.s32 %s748, 1
      %s750 = scalar_select %p747, %s748, %s749
      %p753 = pneg %p747
      %p754 = scmp.eq.s32.totalorder %s78, 1
      %p755 = por %p753, %p754
      %p756 = scmp.ne.s32.totalorder %s748, %s751
      %p757 = scmp.eq.s32.totalorder %s78, 0
      %p758 = por %p756, %p757
      %p759 = scmp.ne.s32.totalorder %s748, %s751
      %p760 = scmp.eq.s32.totalorder %s83, 1
      %p761 = por %p759, %p760
      %p762 = scmp.ne.s32.totalorder %s751, %s752
      %p763 = scmp.eq.s32.totalorder %s83, 0
      %p764 = por %p762, %p763
      %p765 = scmp.ne.s32.totalorder %s751, %s752
      %p766 = scmp.eq.s32.totalorder %s84, 1
      %p767 = por %p765, %p766
      %p769 = scmp.ne.s32.totalorder %s752, %s768
      %p770 = scmp.eq.s32.totalorder %s84, 0
      %p771 = por %p769, %p770
      %p772 = scmp.le.s32.totalorder 1, %s78
      %p773 = scmp.lt.s32.totalorder %s78, 3
      %p774 = pnand %p772, %p773
      %p775 = pneg %p774
      // Predicated region
      $region9: #{tatlmp_forward.1} parent=5 // pred_check
        _
      $region10: #{tatlmp_forward.1} parent=5 // pred_check_branch
        %777 = sbr.rel (%p774) target = $region12
      $region11: #{tatlmp_forward.1} parent=5 // pred_region
        %s778 = ssub.s32 %s78, 1
        // Predicated region
        $region13: #{tatlmp_forward.1} parent=11 // pred_check
          %p779 = pneg %p229
        $region14: #{tatlmp_forward.1} parent=11 // pred_check_branch
          %781 = sbr.rel (%p779) target = $region16
        $region15: #{tatlmp_forward.1} parent=11 // pred_region
          _
        $region16: #{tatlmp_forward.1} parent=11 // pred_fallthru
          _
        // Predicated region
        $region17: #{tatlmp_forward.1} parent=11 // pred_check
          %p782 = pneg %p250
        $region18: #{tatlmp_forward.1} parent=11 // pred_check_branch
          %784 = sbr.rel (%p782) target = $region20
        $region19: #{tatlmp_forward.1} parent=11 // pred_region
          _
        $region20: #{tatlmp_forward.1} parent=11 // pred_fallthru
          _
        // Predicated region
        $region21: #{tatlmp_forward.1} parent=11 // pred_check
          %p785 = pneg %p271
        $region22: #{tatlmp_forward.1} parent=11 // pred_check_branch
          %787 = sbr.rel (%p785) target = $region24
        $region23: #{tatlmp_forward.1} parent=11 // pred_region
          _
        $region24: #{tatlmp_forward.1} parent=11 // pred_fallthru
          _
        // Predicated region
        $region25: #{tatlmp_forward.1} parent=11 // pred_check
          %p788 = pneg %p292
        $region26: #{tatlmp_forward.1} parent=11 // pred_check_branch
          %790 = sbr.rel (%p788) target = $region28
        $region27: #{tatlmp_forward.1} parent=11 // pred_region
          _
        $region28: #{tatlmp_forward.1} parent=11 // pred_fallthru
          _
        // Predicated region
        $region29: #{tatlmp_forward.1} parent=11 // pred_check
          %p791 = pneg %p313
        $region30: #{tatlmp_forward.1} parent=11 // pred_check_branch
          %793 = sbr.rel (%p791) target = $region32
        $region31: #{tatlmp_forward.1} parent=11 // pred_region
          _
        $region32: #{tatlmp_forward.1} parent=11 // pred_fallthru
          _
        // Predicated region
        $region33: #{tatlmp_forward.1} parent=11 // pred_check
          %p794 = pneg %p334
        $region34: #{tatlmp_forward.1} parent=11 // pred_check_branch
          %796 = sbr.rel (%p794) target = $region36
        $region35: #{tatlmp_forward.1} parent=11 // pred_region
          _
        $region36: #{tatlmp_forward.1} parent=11 // pred_fallthru
          _
        // Predicated region
        $region37: #{tatlmp_forward.1} parent=11 // pred_check
          %p797 = pneg %p355
        $region38: #{tatlmp_forward.1} parent=11 // pred_check_branch
          %799 = sbr.rel (%p797) target = $region40
        $region39: #{tatlmp_forward.1} parent=11 // pred_region
          _
        $region40: #{tatlmp_forward.1} parent=11 // pred_fallthru
          _
        // Predicated region
        $region41: #{tatlmp_forward.1} parent=11 // pred_check
          %p800 = pneg %p376
        $region42: #{tatlmp_forward.1} parent=11 // pred_check_branch
          %802 = sbr.rel (%p800) target = $region44
        $region43: #{tatlmp_forward.1} parent=11 // pred_region
          _
        $region44: #{tatlmp_forward.1} parent=11 // pred_fallthru
          _
        // Predicated region
        $region45: #{tatlmp_forward.1} parent=11 // pred_check
          %p803 = pneg %p397
        $region46: #{tatlmp_forward.1} parent=11 // pred_check_branch
          %805 = sbr.rel (%p803) target = $region48
        $region47: #{tatlmp_forward.1} parent=11 // pred_region
          _
        $region48: #{tatlmp_forward.1} parent=11 // pred_fallthru
          _
        // Predicated region
        $region49: #{tatlmp_forward.1} parent=11 // pred_check
          %p806 = pneg %p418
        $region50: #{tatlmp_forward.1} parent=11 // pred_check_branch
          %808 = sbr.rel (%p806) target = $region52
        $region51: #{tatlmp_forward.1} parent=11 // pred_region
          _
        $region52: #{tatlmp_forward.1} parent=11 // pred_fallthru
          _
        // Predicated region
        $region53: #{tatlmp_forward.1} parent=11 // pred_check
          %p809 = pneg %p439
        $region54: #{tatlmp_forward.1} parent=11 // pred_check_branch
          %811 = sbr.rel (%p809) target = $region56
        $region55: #{tatlmp_forward.1} parent=11 // pred_region
          _
        $region56: #{tatlmp_forward.1} parent=11 // pred_fallthru
          _
        // Predicated region
        $region57: #{tatlmp_forward.1} parent=11 // pred_check
          %p812 = pneg %p460
        $region58: #{tatlmp_forward.1} parent=11 // pred_check_branch
          %814 = sbr.rel (%p812) target = $region60
        $region59: #{tatlmp_forward.1} parent=11 // pred_region
          _
        $region60: #{tatlmp_forward.1} parent=11 // pred_fallthru
          _
        // Predicated region
        $region61: #{tatlmp_forward.1} parent=11 // pred_check
          %p815 = pneg %p481
        $region62: #{tatlmp_forward.1} parent=11 // pred_check_branch
          %817 = sbr.rel (%p815) target = $region64
        $region63: #{tatlmp_forward.1} parent=11 // pred_region
          _
        $region64: #{tatlmp_forward.1} parent=11 // pred_fallthru
          _
        // Predicated region
        $region65: #{tatlmp_forward.1} parent=11 // pred_check
          %p818 = pneg %p502
        $region66: #{tatlmp_forward.1} parent=11 // pred_check_branch
          %820 = sbr.rel (%p818) target = $region68
        $region67: #{tatlmp_forward.1} parent=11 // pred_region
          _
        $region68: #{tatlmp_forward.1} parent=11 // pred_fallthru
          _
        // Predicated region
        $region69: #{tatlmp_forward.1} parent=11 // pred_check
          %p821 = pneg %p523
        $region70: #{tatlmp_forward.1} parent=11 // pred_check_branch
          %823 = sbr.rel (%p821) target = $region72
        $region71: #{tatlmp_forward.1} parent=11 // pred_region
          _
        $region72: #{tatlmp_forward.1} parent=11 // pred_fallthru
          _
        // Predicated region
        $region73: #{tatlmp_forward.1} parent=11 // pred_check
          %p824 = pneg %p544
        $region74: #{tatlmp_forward.1} parent=11 // pred_check_branch
          %826 = sbr.rel (%p824) target = $region76
        $region75: #{tatlmp_forward.1} parent=11 // pred_region
          _
        $region76: #{tatlmp_forward.1} parent=11 // pred_fallthru
          _
        // Predicated region
        $region77: #{tatlmp_forward.1} parent=11 // pred_check
          %p827 = pneg %p565
        $region78: #{tatlmp_forward.1} parent=11 // pred_check_branch
          %829 = sbr.rel (%p827) target = $region80
        $region79: #{tatlmp_forward.1} parent=11 // pred_region
          _
        $region80: #{tatlmp_forward.1} parent=11 // pred_fallthru
          _
        // Predicated region
        $region81: #{tatlmp_forward.1} parent=11 // pred_check
          %p830 = pneg %p586
        $region82: #{tatlmp_forward.1} parent=11 // pred_check_branch
          %832 = sbr.rel (%p830) target = $region84
        $region83: #{tatlmp_forward.1} parent=11 // pred_region
          _
        $region84: #{tatlmp_forward.1} parent=11 // pred_fallthru
          _
        // Predicated region
        $region85: #{tatlmp_forward.1} parent=11 // pred_check
          %p833 = pneg %p607
        $region86: #{tatlmp_forward.1} parent=11 // pred_check_branch
          %835 = sbr.rel (%p833) target = $region88
        $region87: #{tatlmp_forward.1} parent=11 // pred_region
          _
        $region88: #{tatlmp_forward.1} parent=11 // pred_fallthru
          _
        // Predicated region
        $region89: #{tatlmp_forward.1} parent=11 // pred_check
          %p836 = pneg %p628
        $region90: #{tatlmp_forward.1} parent=11 // pred_check_branch
          %838 = sbr.rel (%p836) target = $region92
        $region91: #{tatlmp_forward.1} parent=11 // pred_region
          _
        $region92: #{tatlmp_forward.1} parent=11 // pred_fallthru
          _
        // Predicated region
        $region93: #{tatlmp_forward.1} parent=11 // pred_check
          %p839 = pneg %p649
        $region94: #{tatlmp_forward.1} parent=11 // pred_check_branch
          %841 = sbr.rel (%p839) target = $region96
        $region95: #{tatlmp_forward.1} parent=11 // pred_region
          _
        $region96: #{tatlmp_forward.1} parent=11 // pred_fallthru
          _
        // Predicated region
        $region97: #{tatlmp_forward.1} parent=11 // pred_check
          %p842 = pneg %p670
        $region98: #{tatlmp_forward.1} parent=11 // pred_check_branch
          %844 = sbr.rel (%p842) target = $region100
        $region99: #{tatlmp_forward.1} parent=11 // pred_region
          _
        $region100: #{tatlmp_forward.1} parent=11 // pred_fallthru
          _
        // Predicated region
        $region101: #{tatlmp_forward.1} parent=11 // pred_check
          %p845 = pneg %p691
        $region102: #{tatlmp_forward.1} parent=11 // pred_check_branch
          %847 = sbr.rel (%p845) target = $region104
        $region103: #{tatlmp_forward.1} parent=11 // pred_region
          _
        $region104: #{tatlmp_forward.1} parent=11 // pred_fallthru
          _
        // Predicated region
        $region105: #{tatlmp_forward.1} parent=11 // pred_check
          %p848 = pneg %p712
        $region106: #{tatlmp_forward.1} parent=11 // pred_check_branch
          %850 = sbr.rel (%p848) target = $region108
        $region107: #{tatlmp_forward.1} parent=11 // pred_region
          _
        $region108: #{tatlmp_forward.1} parent=11 // pred_fallthru
          _
      $region12: #{tatlmp_forward.1} parent=5 // pred_fallthru
        _
      %p851 = scmp.lt.s32.totalorder %s78, 2
      // Predicated region
      $region109: #{tatlmp_forward.1} parent=5 // pred_check
        %p852 = pneg %p851
      $region110: #{tatlmp_forward.1} parent=5 // pred_check_branch
        %854 = sbr.rel (%p852) target = $region112
      $region111: #{tatlmp_forward.1} parent=5 // pred_region
        // Predicated region
        $region113: #{tatlmp_forward.1} parent=111 // pred_check
          %p855 = pneg %p98
        $region114: #{tatlmp_forward.1} parent=111 // pred_check_branch
          %857 = sbr.rel (%p855) target = $region116
        $region115: #{tatlmp_forward.1} parent=111 // pred_region
          %p858 = scmp.lt.s32.totalorder %s78, 1
          %s859 = scalar_select %p858, %s78, 1
          %s860 = smul.addr %s859, 8
          %s861 = scalar_lea.vmem %s1, %s860
        $region116: #{tatlmp_forward.1} parent=111 // pred_fallthru
          _
        // Predicated region
        $region117: #{tatlmp_forward.1} parent=111 // pred_check
          %p862 = pneg %p124
        $region118: #{tatlmp_forward.1} parent=111 // pred_check_branch
          %864 = sbr.rel (%p862) target = $region120
        $region119: #{tatlmp_forward.1} parent=111 // pred_region
          %p865 = scmp.lt.s32.totalorder %s78, 1
          %s866 = scalar_select %p865, %s78, 1
          %s867 = smul.addr %s866, 8
          %s868 = scalar_lea.vmem %s3, %s867
        $region120: #{tatlmp_forward.1} parent=111 // pred_fallthru
          _
        // Predicated region
        $region121: #{tatlmp_forward.1} parent=111 // pred_check
          %p869 = pneg %p150
        $region122: #{tatlmp_forward.1} parent=111 // pred_check_branch
          %871 = sbr.rel (%p869) target = $region124
        $region123: #{tatlmp_forward.1} parent=111 // pred_region
          %p872 = scmp.lt.s32.totalorder %s78, 1
          %s873 = scalar_select %p872, %s78, 1
          %s874 = smul.addr %s873, 8
          %s875 = scalar_lea.vmem %s5, %s874
        $region124: #{tatlmp_forward.1} parent=111 // pred_fallthru
          _
        // Predicated region
        $region125: #{tatlmp_forward.1} parent=111 // pred_check
          %p876 = pneg %p176
        $region126: #{tatlmp_forward.1} parent=111 // pred_check_branch
          %878 = sbr.rel (%p876) target = $region128
        $region127: #{tatlmp_forward.1} parent=111 // pred_region
          %p879 = scmp.lt.s32.totalorder %s78, 1
          %s880 = scalar_select %p879, %s78, 1
          %s881 = smul.addr %s880, 8
          %s882 = scalar_lea.vmem %s7, %s881
        $region128: #{tatlmp_forward.1} parent=111 // pred_fallthru
          _
        // Predicated region
        $region129: #{tatlmp_forward.1} parent=111 // pred_check
          %p883 = pneg %p202
        $region130: #{tatlmp_forward.1} parent=111 // pred_check_branch
          %885 = sbr.rel (%p883) target = $region132
        $region131: #{tatlmp_forward.1} parent=111 // pred_region
          %p886 = scmp.lt.s32.totalorder %s78, 1
          %s887 = scalar_select %p886, %s78, 1
          %s888 = smul.addr %s887, 8
          %s889 = scalar_lea.vmem %s9, %s888
        $region132: #{tatlmp_forward.1} parent=111 // pred_fallthru
          _
      $region112: #{tatlmp_forward.1} parent=5 // pred_fallthru
        _
      %p890 = scmp.le.s32.totalorder 1, %s78
      %p891 = scmp.lt.s32.totalorder %s78, 3
      %p892 = pnand %p890, %p891
      %p893 = pneg %p892
      // Predicated region
      $region133: #{tatlmp_forward.1} parent=5 // pred_check
        _
      $region134: #{tatlmp_forward.1} parent=5 // pred_check_branch
        %895 = sbr.rel (%p892) target = $region136
      $region135: #{tatlmp_forward.1} parent=5 // pred_region
        %s896 = ssub.s32 %s78, 1
        %p897 = scmp.lt.s32.totalorder %s83, 1
        %s898 = scalar_select %p897, %s83, 1
        %s899 = smul.addr %s898, 8
        %s900 = scalar_lea.vmem %s1, %s899
        %p901 = pneg %p104
        %p902 = pneg %p101
        %p903 = scmp.lt.s32.totalorder %s83, 1
        %s904 = scalar_select %p903, %s83, 1
        %s905 = smul.addr %s904, 8
        %s906 = scalar_lea.vmem %s3, %s905
        %p907 = pneg %p130
        %p908 = pneg %p127
        %p909 = scmp.lt.s32.totalorder %s83, 1
        %s910 = scalar_select %p909, %s83, 1
        %s911 = smul.addr %s910, 8
        %s912 = scalar_lea.vmem %s5, %s911
        %p913 = pneg %p156
        %p914 = pneg %p153
        %p915 = scmp.lt.s32.totalorder %s83, 1
        %s916 = scalar_select %p915, %s83, 1
        %s917 = smul.addr %s916, 8
        %s918 = scalar_lea.vmem %s7, %s917
        %p919 = pneg %p182
        %p920 = pneg %p179
        %p921 = scmp.lt.s32.totalorder %s83, 1
        %s922 = scalar_select %p921, %s83, 1
        %s923 = smul.addr %s922, 8
        %s924 = scalar_lea.vmem %s9, %s923
        %p925 = pneg %p208
        %p926 = pneg %p205
        %p927 = pneg %p229
        %p928 = pneg %p226
        %p929 = pneg %p250
        %p930 = pneg %p247
        %p931 = pneg %p271
        %p932 = pneg %p268
        %p933 = pneg %p292
        %p934 = pneg %p289
        %p935 = pneg %p313
        %p936 = pneg %p310
        %p937 = pneg %p334
        %p938 = pneg %p331
        %p939 = pneg %p355
        %p940 = pneg %p352
        %p941 = pneg %p376
        %p942 = pneg %p373
        %p943 = pneg %p397
        %p944 = pneg %p394
        %p945 = pneg %p418
        %p946 = pneg %p415
        %p947 = pneg %p439
        %p948 = pneg %p436
        %p949 = pneg %p460
        %p950 = pneg %p457
        %p951 = pneg %p481
        %p952 = pneg %p478
        %p953 = pneg %p502
        %p954 = pneg %p499
        %p955 = pneg %p523
        %p956 = pneg %p520
        %p957 = pneg %p544
        %p958 = pneg %p541
        %p959 = pneg %p565
        %p960 = pneg %p562
        %p961 = pneg %p586
        %p962 = pneg %p583
        %p963 = pneg %p607
        %p964 = pneg %p604
        %p965 = pneg %p628
        %p966 = pneg %p625
        %p967 = pneg %p649
        %p968 = pneg %p646
        %p969 = pneg %p670
        %p970 = pneg %p667
        %p971 = pneg %p691
        %p972 = pneg %p688
        %p973 = pneg %p712
        %p974 = pneg %p709
        %p975 = pneg %p738
        %p976 = pneg %p735
        %s977 = sand.u32 %s725, 1
        %s978 = scalar_lea.sflag [#allocation6], %s977
        %s979 = sand.u32 %s725, 1
        %s980 = smul.addr %s979, 8
        %s981 = scalar_lea.vmem [#allocation5], %s980
        %p982 = pneg %p764
        %p983 = pneg %p761
        %s984 = sand.u32 %s751, 1
        %s985 = scalar_lea.sflag [#allocation8], %s984
        %s986 = sand.u32 %s751, 1
        %s987 = smul.addr %s986, 8
        %s988 = scalar_lea.vmem [#allocation7], %s987
        %p989 = scmp.lt.s32.totalorder %s83, 1
        %s990 = scalar_select %p989, %s83, 1
        %s991 = smul.addr %s990, 8
        %s992 = scalar_lea.vmem %s1, %s991
        %p993 = scmp.lt.s32.totalorder %s83, 1
        %s994 = scalar_select %p993, %s83, 1
        %s995 = smul.addr %s994, 8
        %s996 = scalar_lea.vmem %s3, %s995
        %p997 = scmp.lt.s32.totalorder %s83, 1
        %s998 = scalar_select %p997, %s83, 1
        %s999 = smul.addr %s998, 8
        %s1000 = scalar_lea.vmem %s5, %s999
        %p1001 = scmp.lt.s32.totalorder %s83, 1
        %s1002 = scalar_select %p1001, %s83, 1
        %s1003 = smul.addr %s1002, 8
        %s1004 = scalar_lea.vmem %s7, %s1003
        %p1005 = scmp.lt.s32.totalorder %s83, 1
        %s1006 = scalar_select %p1005, %s83, 1
        %s1007 = smul.addr %s1006, 8
        %s1008 = scalar_lea.vmem %s9, %s1007
        %v1009 = vld [vmem:[%s992] sm:$0xff]
        %v1010 = vld [vmem:[%s996] sm:$0xff]
        %v1011 = vld [vmem:[%s1000] sm:$0xff]
        %v1012 = vld [vmem:[%s1004] sm:$0xff]
        %v1013 = vld [vmem:[%s1008] sm:$0xff]
        %v1014 = vld [vmem:[%s11] sm:$0xff]
        %v1015 = vld [vmem:[%s11 + $0x8] sm:$0xff]
        %v1016 = vld [vmem:[%s11 + $0x10] sm:$0xff]
        %v1017 = vld [vmem:[%s11 + $0x18] sm:$0xff]
        %v1018 = vld [vmem:[%s13] sm:$0xff]
        %v1019 = vld [vmem:[%s13 + $0x8] sm:$0xff]
        %v1020 = vld [vmem:[%s13 + $0x10] sm:$0xff]
        %v1021 = vld [vmem:[%s13 + $0x18] sm:$0xff]
        %v1022 = vld [vmem:[%s15] sm:$0x1]
        %v1023 = vld [vmem:[%s17] sm:$0x1]
        %v1024 = vld [vmem:[#allocation3] sm:$0x1]
        %vm1025 = vcmask 64512
        %v1027 = vsel %vm1025, %v1012, 0
        %1029 = vmatprep.subr.mxu0 0.0
        %1030 = vmatpush1.msra.mxu0 %v1009
        %1031 = vmatprep.subr.mxu0 0.0
        %1032 = vmatpush1.msra.mxu0 0.0
        %1033 = vmatprep.subr.mxu0 0.0
        %1034 = vmatpush1.msra.mxu0 0.0
        %1035 = vmatprep.subr.mxu0 0.0
        %1036 = vmatpush1.msra.mxu0 0.0
        %1037 = vmatprep.subr.mxu0 0.0
        %1038 = vmatpush1.msra.mxu0 0.0
        %1039 = vmatprep.subr.mxu0 0.0
        %1040 = vmatpush1.msra.mxu0 0.0
        %1041 = vmatprep.subr.mxu0 0.0
        %1042 = vmatpush1.msra.mxu0 0.0
        %1043 = vmatprep.subr.mxu0 0.0
        %1044 = vmatpush1.msra.mxu0 0.0
        %1045 = vmatprep.subr.mxu0 0.0
        %1046 = vmatpush1.msra.mxu0 0.0
        %1047 = vmatprep.subr.mxu0 0.0
        %1048 = vmatpush1.msra.mxu0 0.0
        %1049 = vmatprep.subr.mxu0 0.0
        %1050 = vmatpush1.msra.mxu0 0.0
        %1051 = vmatprep.subr.mxu0 0.0
        %1052 = vmatpush1.msra.mxu0 0.0
        %1053 = vmatprep.subr.mxu0 0.0
        %1054 = vmatpush1.msra.mxu0 0.0
        %1055 = vmatprep.subr.mxu0 0.0
        %1056 = vmatpush1.msra.mxu0 0.0
        %1057 = vmatprep.subr.mxu0 0.0
        %1058 = vmatpush1.msra.mxu0 0.0
        %1059 = vmatprep.subr.mxu0 0.0
        %1060 = vmatpush1.msra.mxu0 0.0
        %1061 = vmatprep.subr.mxu0 0.0
        %1062 = vmatpush1.msra.mxu0 0.0
        %1063 = vmatprep.subr.mxu0 0.0
        %1064 = vmatpush1.msra.mxu0 0.0
        %1065 = vmatprep.subr.mxu0 0.0
        %1066 = vmatpush1.msra.mxu0 0.0
        %1067 = vmatprep.subr.mxu0 0.0
        %1068 = vmatpush1.msra.mxu0 0.0
        %1069 = vmatprep.subr.mxu0 0.0
        %1070 = vmatpush1.msra.mxu0 0.0
        %1071 = vmatprep.subr.mxu0 0.0
        %1072 = vmatpush1.msra.mxu0 0.0
        %1073 = vmatprep.subr.mxu0 0.0
        %1074 = vmatpush1.msra.mxu0 0.0
        %1075 = vmatprep.subr.mxu0 0.0
        %1076 = vmatpush1.msra.mxu0 0.0
        %1077 = vmatprep.subr.mxu0 0.0
        %1078 = vmatpush1.msra.mxu0 0.0
        %1079 = vmatprep.subr.mxu0 0.0
        %1080 = vmatpush1.msra.mxu0 0.0
        %1081 = vmatprep.subr.mxu0 0.0
        %1082 = vmatpush1.msra.mxu0 0.0
        %1083 = vmatprep.subr.mxu0 0.0
        %1084 = vmatpush1.msra.mxu0 0.0
        %1085 = vmatprep.subr.mxu0 0.0
        %1086 = vmatpush1.msra.mxu0 0.0
        %1087 = vmatprep.subr.mxu0 0.0
        %1088 = vmatpush1.msra.mxu0 0.0
        %1089 = vmatprep.subr.mxu0 0.0
        %1090 = vmatpush1.msra.mxu0 0.0
        %1091 = vmatprep.subr.mxu0 0.0
        %1092 = vmatpush1.msra.mxu0 0.0
        %1093 = vmatprep.mubr.f32.mxu0 0.0
        %1094 = vmatmul.mubr.f32.gmra.mrb[0].mxu0 %v1027
        %v1095 = vpop.f32.mrb[0].mxu0
        %v1096 = vadd.f32 0.0, %v1095
        %v1097 = vpop.f32.mrb[0].mxu0
        %1098 = vdwg.mxu0
        %1099 = vmatprep.subr.mxu0 0.0
        %1100 = vmatpush1.msra.mxu0 %v1010
        %1101 = vmatprep.subr.mxu0 0.0
        %1102 = vmatpush1.msra.mxu0 0.0
        %1103 = vmatprep.subr.mxu0 0.0
        %1104 = vmatpush1.msra.mxu0 0.0
        %1105 = vmatprep.subr.mxu0 0.0
        %1106 = vmatpush1.msra.mxu0 0.0
        %1107 = vmatprep.subr.mxu0 0.0
        %1108 = vmatpush1.msra.mxu0 0.0
        %1109 = vmatprep.subr.mxu0 0.0
        %1110 = vmatpush1.msra.mxu0 0.0
        %1111 = vmatprep.subr.mxu0 0.0
        %1112 = vmatpush1.msra.mxu0 0.0
        %1113 = vmatprep.subr.mxu0 0.0
        %1114 = vmatpush1.msra.mxu0 0.0
        %1115 = vmatprep.subr.mxu0 0.0
        %1116 = vmatpush1.msra.mxu0 0.0
        %1117 = vmatprep.subr.mxu0 0.0
        %1118 = vmatpush1.msra.mxu0 0.0
        %1119 = vmatprep.subr.mxu0 0.0
        %1120 = vmatpush1.msra.mxu0 0.0
        %1121 = vmatprep.subr.mxu0 0.0
        %1122 = vmatpush1.msra.mxu0 0.0
        %1123 = vmatprep.subr.mxu0 0.0
        %1124 = vmatpush1.msra.mxu0 0.0
        %1125 = vmatprep.subr.mxu0 0.0
        %1126 = vmatpush1.msra.mxu0 0.0
        %1127 = vmatprep.subr.mxu0 0.0
        %1128 = vmatpush1.msra.mxu0 0.0
        %1129 = vmatprep.subr.mxu0 0.0
        %1130 = vmatpush1.msra.mxu0 0.0
        %1131 = vmatprep.subr.mxu0 0.0
        %1132 = vmatpush1.msra.mxu0 0.0
        %1133 = vmatprep.subr.mxu0 0.0
        %1134 = vmatpush1.msra.mxu0 0.0
        %1135 = vmatprep.subr.mxu0 0.0
        %1136 = vmatpush1.msra.mxu0 0.0
        %1137 = vmatprep.subr.mxu0 0.0
        %1138 = vmatpush1.msra.mxu0 0.0
        %1139 = vmatprep.subr.mxu0 0.0
        %1140 = vmatpush1.msra.mxu0 0.0
        %1141 = vmatprep.subr.mxu0 0.0
        %1142 = vmatpush1.msra.mxu0 0.0
        %1143 = vmatprep.subr.mxu0 0.0
        %1144 = vmatpush1.msra.mxu0 0.0
        %1145 = vmatprep.subr.mxu0 0.0
        %1146 = vmatpush1.msra.mxu0 0.0
        %1147 = vmatprep.subr.mxu0 0.0
        %1148 = vmatpush1.msra.mxu0 0.0
        %1149 = vmatprep.subr.mxu0 0.0
        %1150 = vmatpush1.msra.mxu0 0.0
        %1151 = vmatprep.subr.mxu0 0.0
        %1152 = vmatpush1.msra.mxu0 0.0
        %1153 = vmatprep.subr.mxu0 0.0
        %1154 = vmatpush1.msra.mxu0 0.0
        %1155 = vmatprep.subr.mxu0 0.0
        %1156 = vmatpush1.msra.mxu0 0.0
        %1157 = vmatprep.subr.mxu0 0.0
        %1158 = vmatpush1.msra.mxu0 0.0
        %1159 = vmatprep.subr.mxu0 0.0
        %1160 = vmatpush1.msra.mxu0 0.0
        %1161 = vmatprep.subr.mxu0 0.0
        %1162 = vmatpush1.msra.mxu0 0.0
        %1163 = vmatprep.mubr.f32.mxu0 0.0
        %1164 = vmatmul.mubr.f32.gmra.mrb[0].mxu0 %v1027
        %v1165 = vpop.f32.mrb[0].mxu0
        %v1166 = vadd.f32 0.0, %v1165
        %v1167 = vpop.f32.mrb[0].mxu0
        %1168 = vdwg.mxu0
        %vm1169 = vcmask 261120
        %v1171 = vsel %vm1169, %v1009, 0
        %1173 = vmatprep.subr.mxu0 0.0
        %1174 = vmatpush1.msra.mxu0 %v1018
        %1175 = vmatprep.subr.mxu0 0.0
        %1176 = vmatpush1.msra.mxu0 %v1019
        %1177 = vmatprep.subr.mxu0 0.0
        %1178 = vmatpush1.msra.mxu0 %v1020
        %1179 = vmatprep.subr.mxu0 0.0
        %1180 = vmatpush1.msra.mxu0 %v1021
        %1181 = vmatprep.subr.mxu0 0.0
        %1182 = vmatpush1.msra.mxu0 0.0
        %1183 = vmatprep.subr.mxu0 0.0
        %1184 = vmatpush1.msra.mxu0 0.0
        %1185 = vmatprep.subr.mxu0 0.0
        %1186 = vmatpush1.msra.mxu0 0.0
        %1187 = vmatprep.subr.mxu0 0.0
        %1188 = vmatpush1.msra.mxu0 0.0
        %1189 = vmatprep.subr.mxu0 0.0
        %1190 = vmatpush1.msra.mxu0 0.0
        %1191 = vmatprep.subr.mxu0 0.0
        %1192 = vmatpush1.msra.mxu0 0.0
        %1193 = vmatprep.subr.mxu0 0.0
        %1194 = vmatpush1.msra.mxu0 0.0
        %1195 = vmatprep.subr.mxu0 0.0
        %1196 = vmatpush1.msra.mxu0 0.0
        %1197 = vmatprep.subr.mxu0 0.0
        %1198 = vmatpush1.msra.mxu0 0.0
        %1199 = vmatprep.subr.mxu0 0.0
        %1200 = vmatpush1.msra.mxu0 0.0
        %1201 = vmatprep.subr.mxu0 0.0
        %1202 = vmatpush1.msra.mxu0 0.0
        %1203 = vmatprep.subr.mxu0 0.0
        %1204 = vmatpush1.msra.mxu0 0.0
        %1205 = vmatprep.subr.mxu0 0.0
        %1206 = vmatpush1.msra.mxu0 0.0
        %1207 = vmatprep.subr.mxu0 0.0
        %1208 = vmatpush1.msra.mxu0 0.0
        %1209 = vmatprep.subr.mxu0 0.0
        %1210 = vmatpush1.msra.mxu0 0.0
        %1211 = vmatprep.subr.mxu0 0.0
        %1212 = vmatpush1.msra.mxu0 0.0
        %1213 = vmatprep.subr.mxu0 0.0
        %1214 = vmatpush1.msra.mxu0 0.0
        %1215 = vmatprep.subr.mxu0 0.0
        %1216 = vmatpush1.msra.mxu0 0.0
        %1217 = vmatprep.subr.mxu0 0.0
        %1218 = vmatpush1.msra.mxu0 0.0
        %1219 = vmatprep.subr.mxu0 0.0
        %1220 = vmatpush1.msra.mxu0 0.0
        %1221 = vmatprep.subr.mxu0 0.0
        %1222 = vmatpush1.msra.mxu0 0.0
        %1223 = vmatprep.subr.mxu0 0.0
        %1224 = vmatpush1.msra.mxu0 0.0
        %1225 = vmatprep.subr.mxu0 0.0
        %1226 = vmatpush1.msra.mxu0 0.0
        %1227 = vmatprep.subr.mxu0 0.0
        %1228 = vmatpush1.msra.mxu0 0.0
        %1229 = vmatprep.subr.mxu0 0.0
        %1230 = vmatpush1.msra.mxu0 0.0
        %1231 = vmatprep.subr.mxu0 0.0
        %1232 = vmatpush1.msra.mxu0 0.0
        %1233 = vmatprep.subr.mxu0 0.0
        %1234 = vmatpush1.msra.mxu0 0.0
        %1235 = vmatprep.subr.mxu0 0.0
        %1236 = vmatpush1.msra.mxu0 0.0
        %1237 = vmatprep.mubr.f32.mxu0 0.0
        %1238 = vmatmul.mubr.f32.gmra.mrb[0].mxu0 %v1171
        %v1239 = vpop.f32.mrb[0].mxu0
        %v1240 = vadd.f32 0.0, %v1239
        %v1241 = vpop.f32.mrb[0].mxu0
        %1242 = vdwg.mxu0
        %v1244 = vsel %vm1169, %v1096, 0
        %1246 = vmatprep.subr.mxu0 0.0
        %1247 = vmatpush1.msra.mxu0 %v1014
        %1248 = vmatprep.subr.mxu0 0.0
        %1249 = vmatpush1.msra.mxu0 %v1015
        %1250 = vmatprep.subr.mxu0 0.0
        %1251 = vmatpush1.msra.mxu0 %v1016
        %1252 = vmatprep.subr.mxu0 0.0
        %1253 = vmatpush1.msra.mxu0 %v1017
        %1254 = vmatprep.subr.mxu0 0.0
        %1255 = vmatpush1.msra.mxu0 0.0
        %1256 = vmatprep.subr.mxu0 0.0
        %1257 = vmatpush1.msra.mxu0 0.0
        %1258 = vmatprep.subr.mxu0 0.0
        %1259 = vmatpush1.msra.mxu0 0.0
        %1260 = vmatprep.subr.mxu0 0.0
        %1261 = vmatpush1.msra.mxu0 0.0
        %1262 = vmatprep.subr.mxu0 0.0
        %1263 = vmatpush1.msra.mxu0 0.0
        %1264 = vmatprep.subr.mxu0 0.0
        %1265 = vmatpush1.msra.mxu0 0.0
        %1266 = vmatprep.subr.mxu0 0.0
        %1267 = vmatpush1.msra.mxu0 0.0
        %1268 = vmatprep.subr.mxu0 0.0
        %1269 = vmatpush1.msra.mxu0 0.0
        %1270 = vmatprep.subr.mxu0 0.0
        %1271 = vmatpush1.msra.mxu0 0.0
        %1272 = vmatprep.subr.mxu0 0.0
        %1273 = vmatpush1.msra.mxu0 0.0
        %1274 = vmatprep.subr.mxu0 0.0
        %1275 = vmatpush1.msra.mxu0 0.0
        %1276 = vmatprep.subr.mxu0 0.0
        %1277 = vmatpush1.msra.mxu0 0.0
        %1278 = vmatprep.subr.mxu0 0.0
        %1279 = vmatpush1.msra.mxu0 0.0
        %1280 = vmatprep.subr.mxu0 0.0
        %1281 = vmatpush1.msra.mxu0 0.0
        %1282 = vmatprep.subr.mxu0 0.0
        %1283 = vmatpush1.msra.mxu0 0.0
        %1284 = vmatprep.subr.mxu0 0.0
        %1285 = vmatpush1.msra.mxu0 0.0
        %1286 = vmatprep.subr.mxu0 0.0
        %1287 = vmatpush1.msra.mxu0 0.0
        %1288 = vmatprep.subr.mxu0 0.0
        %1289 = vmatpush1.msra.mxu0 0.0
        %1290 = vmatprep.subr.mxu0 0.0
        %1291 = vmatpush1.msra.mxu0 0.0
        %1292 = vmatprep.subr.mxu0 0.0
        %1293 = vmatpush1.msra.mxu0 0.0
        %1294 = vmatprep.subr.mxu0 0.0
        %1295 = vmatpush1.msra.mxu0 0.0
        %1296 = vmatprep.subr.mxu0 0.0
        %1297 = vmatpush1.msra.mxu0 0.0
        %1298 = vmatprep.subr.mxu0 0.0
        %1299 = vmatpush1.msra.mxu0 0.0
        %1300 = vmatprep.subr.mxu0 0.0
        %1301 = vmatpush1.msra.mxu0 0.0
        %1302 = vmatprep.subr.mxu0 0.0
        %1303 = vmatpush1.msra.mxu0 0.0
        %1304 = vmatprep.subr.mxu0 0.0
        %1305 = vmatpush1.msra.mxu0 0.0
        %1306 = vmatprep.subr.mxu0 0.0
        %1307 = vmatpush1.msra.mxu0 0.0
        %1308 = vmatprep.subr.mxu0 0.0
        %1309 = vmatpush1.msra.mxu0 0.0
        %1310 = vmatprep.mubr.f32.mxu0 0.0
        %1311 = vmatmul.mubr.f32.gmra.mrb[0].mxu0 %v1244
        %v1312 = vpop.f32.mrb[0].mxu0
        %v1313 = vadd.f32 0.0, %v1312
        %v1314 = vpop.f32.mrb[0].mxu0
        %1315 = vdwg.mxu0
        %v1317 = vcombine.high %v1313, %v1313
        %v1319 = vunpack.c.l.s4 1966171168
        %v1320 = vunpack.c.0.s8 %v1319
        %v1321 = vlaneseq
        %v1322 = vshrl.u32 %v1321, 7
        %v1323 = vsub.s32 %v1320, %v1322
        %v1324 = vrot.slane %v1313, %v1323
        %v1326 = vunpack.c.l.s4 1966171168
        %v1327 = vunpack.c.0.s8 %v1326
        %v1328 = vlaneseq
        %v1329 = vshrl.u32 %v1328, 7
        %v1330 = vsub.s32 %v1327, %v1329
        %v1331 = vrot.slane %v1317, %v1330
        %v1332 = vcombine.high %v1324, %v1324
        %v1333 = vcombine.high %v1331, %v1331
        %v1335 = vunpack.c.l.s4 1966171168
        %v1336 = vunpack.c.0.s8 %v1335
        %v1337 = vlaneseq
        %v1338 = vshrl.u32 %v1337, 7
        %v1339 = vsub.s32 %v1336, %v1338
        %v1340 = vrot.slane %v1324, %v1339
        %v1342 = vunpack.c.l.s4 1966171168
        %v1343 = vunpack.c.0.s8 %v1342
        %v1344 = vlaneseq
        %v1345 = vshrl.u32 %v1344, 7
        %v1346 = vsub.s32 %v1343, %v1345
        %v1347 = vrot.slane %v1331, %v1346
        %v1349 = vunpack.c.l.s4 1966171168
        %v1350 = vunpack.c.0.s8 %v1349
        %v1351 = vlaneseq
        %v1352 = vshrl.u32 %v1351, 7
        %v1353 = vsub.s32 %v1350, %v1352
        %v1354 = vrot.slane %v1332, %v1353
        %v1356 = vunpack.c.l.s4 1966171168
        %v1357 = vunpack.c.0.s8 %v1356
        %v1358 = vlaneseq
        %v1359 = vshrl.u32 %v1358, 7
        %v1360 = vsub.s32 %v1357, %v1359
        %v1361 = vrot.slane %v1333, %v1360
        %v1362 = vcombine.high %v1340, %v1340
        %v1363 = vcombine.high %v1347, %v1347
        %v1364 = vcombine.high %v1354, %v1354
        %v1365 = vcombine.high %v1361, %v1361
        %v1366 = vlaneseq
        %v1367 = vshrl.u32 %v1366, 7
        %v1368 = vsub.s32 0, %v1367
        %v1369 = vrot.slane %v1340, %v1368
        %v1370 = vlaneseq
        %v1371 = vshrl.u32 %v1370, 7
        %v1372 = vsub.s32 0, %v1371
        %v1373 = vrot.slane %v1354, %v1372
        %v1374 = vlaneseq
        %v1375 = vshrl.u32 %v1374, 7
        %v1376 = vsub.s32 0, %v1375
        %v1377 = vrot.slane %v1362, %v1376
        %v1378 = vlaneseq
        %v1379 = vshrl.u32 %v1378, 7
        %v1380 = vsub.s32 0, %v1379
        %v1381 = vrot.slane %v1364, %v1380
        %v1382 = vlaneseq
        %v1383 = vshrl.u32 %v1382, 7
        %v1384 = vsub.s32 0, %v1383
        %v1385 = vrot.slane %v1347, %v1384
        %v1386 = vlaneseq
        %v1387 = vshrl.u32 %v1386, 7
        %v1388 = vsub.s32 0, %v1387
        %v1389 = vrot.slane %v1361, %v1388
        %v1390 = vlaneseq
        %v1391 = vshrl.u32 %v1390, 7
        %v1392 = vsub.s32 0, %v1391
        %v1393 = vrot.slane %v1363, %v1392
        %v1394 = vlaneseq
        %v1395 = vshrl.u32 %v1394, 7
        %v1396 = vsub.s32 0, %v1395
        %v1397 = vrot.slane %v1365, %v1396
        %v1406 = vadd.f32 %v1369, %v1240
        %v1407 = vadd.f32 %v1373, %v1240
        %v1408 = vadd.f32 %v1377, %v1240
        %v1409 = vadd.f32 %v1381, %v1240
        %v1410 = vadd.f32 %v1385, %v1240
        %v1411 = vadd.f32 %v1389, %v1240
        %v1412 = vadd.f32 %v1393, %v1240
        %v1413 = vadd.f32 %v1397, %v1240
        %v1415 = vlaneseq
        %v1416 = vshrl.u32 %v1415, 7
        %v1417 = vsub.s32 0, %v1416
        %v1418 = vrot.slane %v1022, %v1417
        %v1420 = vadd.f32 %v1406, %v1418
        %v1421 = vadd.f32 %v1407, %v1418
        %v1422 = vadd.f32 %v1408, %v1418
        %v1423 = vadd.f32 %v1409, %v1418
        %v1424 = vadd.f32 %v1410, %v1418
        %v1425 = vadd.f32 %v1411, %v1418
        %v1426 = vadd.f32 %v1412, %v1418
        %v1427 = vadd.f32 %v1413, %v1418
        %v1428 = vmax.f32 %v1420, 0.0
        %v1429 = vmax.f32 %v1421, 0.0
        %v1430 = vmax.f32 %v1422, 0.0
        %v1431 = vmax.f32 %v1423, 0.0
        %v1432 = vmax.f32 %v1424, 0.0
        %v1433 = vmax.f32 %v1425, 0.0
        %v1434 = vmax.f32 %v1426, 0.0
        %v1435 = vmax.f32 %v1427, 0.0
        %v1437 = vlaneseq
        %v1438 = vshrl.u32 %v1437, 7
        %v1439 = vsub.s32 0, %v1438
        %v1440 = vrot.slane %v1023, %v1439
        %v1442 = vmul.f32 %v1428, %v1440
        %v1443 = vmul.f32 %v1429, %v1440
        %v1444 = vmul.f32 %v1430, %v1440
        %v1445 = vmul.f32 %v1431, %v1440
        %v1446 = vmul.f32 %v1432, %v1440
        %v1447 = vmul.f32 %v1433, %v1440
        %v1448 = vmul.f32 %v1434, %v1440
        %v1449 = vmul.f32 %v1435, %v1440
        %vm1450 = vcmask 523264
        %v1451 = vsel %vm1450, %v1442, 0.0
        %1452 = vadd.xlane.f32.xlu0 %v1451
        %v1453 = vpop.xlane.xlu0 %1452
        %v1454 = vsel %vm1450, %v1443, 0.0
        %1455 = vadd.xlane.f32.xlu0 %v1454
        %v1456 = vpop.xlane.xlu0 %1455
        %v1457 = vsel %vm1450, %v1444, 0.0
        %1458 = vadd.xlane.f32.xlu0 %v1457
        %v1459 = vpop.xlane.xlu0 %1458
        %v1460 = vsel %vm1450, %v1445, 0.0
        %1461 = vadd.xlane.f32.xlu0 %v1460
        %v1462 = vpop.xlane.xlu0 %1461
        %v1463 = vsel %vm1450, %v1446, 0.0
        %1464 = vadd.xlane.f32.xlu0 %v1463
        %v1465 = vpop.xlane.xlu0 %1464
        %v1466 = vsel %vm1450, %v1447, 0.0
        %1467 = vadd.xlane.f32.xlu0 %v1466
        %v1468 = vpop.xlane.xlu0 %1467
        %v1469 = vsel %vm1450, %v1448, 0.0
        %1470 = vadd.xlane.f32.xlu0 %v1469
        %v1471 = vpop.xlane.xlu0 %1470
        %v1472 = vsel %vm1450, %v1449, 0.0
        %1473 = vadd.xlane.f32.xlu0 %v1472
        %v1474 = vpop.xlane.xlu0 %1473
        %v1476 = vlaneseq
        %v1477 = vshrl.u32 %v1476, 7
        %v1478 = vsub.s32 0, %v1477
        %v1479 = vrot.slane %v1024, %v1478
        %1480 = vset.pattern.permute.xlu0 0
        %1481 = vperm.xlu0 %1480, %v1479
        %v1482 = vpop.permute.xlu0 %1481
        %v1484 = vadd.f32 %v1453, %v1482
        %v1485 = vadd.f32 %v1456, %v1482
        %v1486 = vadd.f32 %v1459, %v1482
        %v1487 = vadd.f32 %v1462, %v1482
        %v1488 = vadd.f32 %v1465, %v1482
        %v1489 = vadd.f32 %v1468, %v1482
        %v1490 = vadd.f32 %v1471, %v1482
        %v1491 = vadd.f32 %v1474, %v1482
        %v1492 = vlaneseq
        %v1493 = vshrl.u32 %v1492, 7
        %v1494 = vsub.s32 0, %v1493
        %v1495 = vrot.slane %v1012, %v1494
        %1497 = vbcast.lane.b32.xlu0 %v1495, 256
        %v1498 = vpop.permute.xlu0 %1497
        %v1499 = vlaneseq
        %v1500 = vshrl.u32 %v1499, 7
        %v1501 = vsub.s32 1, %v1500
        %v1502 = vrot.slane %v1012, %v1501
        %1504 = vbcast.lane.b32.xlu0 %v1502, 256
        %v1505 = vpop.permute.xlu0 %1504
        %v1506 = vlaneseq
        %v1507 = vshrl.u32 %v1506, 7
        %v1508 = vsub.s32 2, %v1507
        %v1509 = vrot.slane %v1012, %v1508
        %1511 = vbcast.lane.b32.xlu0 %v1509, 256
        %v1512 = vpop.permute.xlu0 %1511
        %v1513 = vlaneseq
        %v1514 = vshrl.u32 %v1513, 7
        %v1515 = vsub.s32 3, %v1514
        %v1516 = vrot.slane %v1012, %v1515
        %1518 = vbcast.lane.b32.xlu0 %v1516, 256
        %v1519 = vpop.permute.xlu0 %1518
        %v1520 = vlaneseq
        %v1521 = vshrl.u32 %v1520, 7
        %v1522 = vsub.s32 4, %v1521
        %v1523 = vrot.slane %v1012, %v1522
        %1525 = vbcast.lane.b32.xlu0 %v1523, 256
        %v1526 = vpop.permute.xlu0 %1525
        %v1527 = vlaneseq
        %v1528 = vshrl.u32 %v1527, 7
        %v1529 = vsub.s32 5, %v1528
        %v1530 = vrot.slane %v1012, %v1529
        %1532 = vbcast.lane.b32.xlu0 %v1530, 256
        %v1533 = vpop.permute.xlu0 %1532
        %v1534 = vlaneseq
        %v1535 = vshrl.u32 %v1534, 7
        %v1536 = vsub.s32 6, %v1535
        %v1537 = vrot.slane %v1012, %v1536
        %1539 = vbcast.lane.b32.xlu0 %v1537, 256
        %v1540 = vpop.permute.xlu0 %1539
        %v1541 = vlaneseq
        %v1542 = vshrl.u32 %v1541, 7
        %v1543 = vsub.s32 7, %v1542
        %v1544 = vrot.slane %v1012, %v1543
        %1546 = vbcast.lane.b32.xlu0 %v1544, 256
        %v1547 = vpop.permute.xlu0 %1546
        %v1556 = vmul.f32 %v1484, %v1498
        %v1557 = vmul.f32 %v1485, %v1505
        %v1558 = vmul.f32 %v1486, %v1512
        %v1559 = vmul.f32 %v1487, %v1519
        %v1560 = vmul.f32 %v1488, %v1526
        %v1561 = vmul.f32 %v1489, %v1533
        %v1562 = vmul.f32 %v1490, %v1540
        %v1563 = vmul.f32 %v1491, %v1547
        %1572 = vset.pattern.permute.xlu0 0
        %1573 = vperm.xlu0 %1572, %v1556
        %v1574 = vpop.permute.xlu0 %1573
        %1575 = vset.pattern.permute.xlu0 0
        %1576 = vperm.xlu0 %1575, %v1557
        %v1577 = vpop.permute.xlu0 %1576
        %1578 = vset.pattern.permute.xlu0 0
        %1579 = vperm.xlu0 %1578, %v1558
        %v1580 = vpop.permute.xlu0 %1579
        %1581 = vset.pattern.permute.xlu0 0
        %1582 = vperm.xlu0 %1581, %v1559
        %v1583 = vpop.permute.xlu0 %1582
        %1584 = vset.pattern.permute.xlu0 0
        %1585 = vperm.xlu0 %1584, %v1560
        %v1586 = vpop.permute.xlu0 %1585
        %1587 = vset.pattern.permute.xlu0 0
        %1588 = vperm.xlu0 %1587, %v1561
        %v1589 = vpop.permute.xlu0 %1588
        %1590 = vset.pattern.permute.xlu0 0
        %1591 = vperm.xlu0 %1590, %v1562
        %v1592 = vpop.permute.xlu0 %1591
        %1593 = vset.pattern.permute.xlu0 0
        %1594 = vperm.xlu0 %1593, %v1563
        %v1595 = vpop.permute.xlu0 %1594
        %v1596 = vlaneseq
        %v1597 = vand.u32 %v1596, 127
        %v1598 = vlaneseq
        %v1599 = vshrl.u32 %v1598, 7
        %v1600 = vsub.s32 %v1597, %v1599
        %v1601 = vrot.slane %v1574, %v1600
        %v1602 = vlaneseq
        %v1603 = vshrl.u32 %v1602, 7
        %v1604 = vsub.s32 %v1597, %v1603
        %v1605 = vrot.slane %v1577, %v1604
        %v1606 = vlaneseq
        %v1607 = vshrl.u32 %v1606, 7
        %v1608 = vsub.s32 %v1597, %v1607
        %v1609 = vrot.slane %v1580, %v1608
        %v1610 = vlaneseq
        %v1611 = vshrl.u32 %v1610, 7
        %v1612 = vsub.s32 %v1597, %v1611
        %v1613 = vrot.slane %v1583, %v1612
        %v1614 = vlaneseq
        %v1615 = vshrl.u32 %v1614, 7
        %v1616 = vsub.s32 %v1597, %v1615
        %v1617 = vrot.slane %v1586, %v1616
        %v1618 = vlaneseq
        %v1619 = vshrl.u32 %v1618, 7
        %v1620 = vsub.s32 %v1597, %v1619
        %v1621 = vrot.slane %v1589, %v1620
        %v1622 = vlaneseq
        %v1623 = vshrl.u32 %v1622, 7
        %v1624 = vsub.s32 %v1597, %v1623
        %v1625 = vrot.slane %v1592, %v1624
        %v1626 = vlaneseq
        %v1627 = vshrl.u32 %v1626, 7
        %v1628 = vsub.s32 %v1597, %v1627
        %v1629 = vrot.slane %v1595, %v1628
        %vm1630 = vcmask 1041409
        %v1631 = vsel %vm1630, %v1605, %v1601
        %vm1632 = vcmask 1042434
        %v1633 = vsel %vm1632, %v1609, %v1631
        %vm1634 = vcmask 1043459
        %v1635 = vsel %vm1634, %v1613, %v1633
        %vm1636 = vcmask 1044484
        %v1637 = vsel %vm1636, %v1617, %v1635
        %vm1638 = vcmask 1045509
        %v1639 = vsel %vm1638, %v1621, %v1637
        %vm1640 = vcmask 1046534
        %v1641 = vsel %vm1640, %v1625, %v1639
        %vm1642 = vcmask 1047559
        %v1643 = vsel %vm1642, %v1629, %v1641
        %v1645 = vsel %vm1025, %v1643, -inf
        %1646 = vmax.xlane.f32.xlu0 %v1645
        %v1647 = vpop.xlane.xlu0 %1646
        %v1649 = vlaneseq
        %v1650 = vshrl.u32 %v1649, 7
        %v1651 = vsub.s32 0, %v1650
        %v1652 = vrot.slane %v1647, %v1651
        %v1653 = vlaneseq
        %v1654 = vshrl.u32 %v1653, 7
        %v1655 = vsub.s32 1, %v1654
        %v1656 = vrot.slane %v1647, %v1655
        %v1657 = vlaneseq
        %v1658 = vshrl.u32 %v1657, 7
        %v1659 = vsub.s32 2, %v1658
        %v1660 = vrot.slane %v1647, %v1659
        %v1661 = vlaneseq
        %v1662 = vshrl.u32 %v1661, 7
        %v1663 = vsub.s32 3, %v1662
        %v1664 = vrot.slane %v1647, %v1663
        %v1665 = vlaneseq
        %v1666 = vshrl.u32 %v1665, 7
        %v1667 = vsub.s32 4, %v1666
        %v1668 = vrot.slane %v1647, %v1667
        %v1669 = vlaneseq
        %v1670 = vshrl.u32 %v1669, 7
        %v1671 = vsub.s32 5, %v1670
        %v1672 = vrot.slane %v1647, %v1671
        %v1673 = vlaneseq
        %v1674 = vshrl.u32 %v1673, 7
        %v1675 = vsub.s32 6, %v1674
        %v1676 = vrot.slane %v1647, %v1675
        %v1677 = vlaneseq
        %v1678 = vshrl.u32 %v1677, 7
        %v1679 = vsub.s32 7, %v1678
        %v1680 = vrot.slane %v1647, %v1679
        %v1689 = vsub.f32 %v1556, %v1652
        %v1690 = vsub.f32 %v1557, %v1656
        %v1691 = vsub.f32 %v1558, %v1660
        %v1692 = vsub.f32 %v1559, %v1664
        %v1693 = vsub.f32 %v1560, %v1668
        %v1694 = vsub.f32 %v1561, %v1672
        %v1695 = vsub.f32 %v1562, %v1676
        %v1696 = vsub.f32 %v1563, %v1680
        %v1697 = vmul.f32 %v1689, 1.442695
        %v1698 = vpow.pop %v1697
        %v1699 = vmul.f32 %v1690, 1.442695
        %v1700 = vpow.pop %v1699
        %v1701 = vmul.f32 %v1691, 1.442695
        %v1702 = vpow.pop %v1701
        %v1703 = vmul.f32 %v1692, 1.442695
        %v1704 = vpow.pop %v1703
        %v1705 = vmul.f32 %v1693, 1.442695
        %v1706 = vpow.pop %v1705
        %v1707 = vmul.f32 %v1694, 1.442695
        %v1708 = vpow.pop %v1707
        %v1709 = vmul.f32 %v1695, 1.442695
        %v1710 = vpow.pop %v1709
        %v1711 = vmul.f32 %v1696, 1.442695
        %v1712 = vpow.pop %v1711
        %1721 = vset.pattern.permute.xlu0 0
        %1722 = vperm.xlu0 %1721, %v1698
        %v1723 = vpop.permute.xlu0 %1722
        %1724 = vset.pattern.permute.xlu0 0
        %1725 = vperm.xlu0 %1724, %v1700
        %v1726 = vpop.permute.xlu0 %1725
        %1727 = vset.pattern.permute.xlu0 0
        %1728 = vperm.xlu0 %1727, %v1702
        %v1729 = vpop.permute.xlu0 %1728
        %1730 = vset.pattern.permute.xlu0 0
        %1731 = vperm.xlu0 %1730, %v1704
        %v1732 = vpop.permute.xlu0 %1731
        %1733 = vset.pattern.permute.xlu0 0
        %1734 = vperm.xlu0 %1733, %v1706
        %v1735 = vpop.permute.xlu0 %1734
        %1736 = vset.pattern.permute.xlu0 0
        %1737 = vperm.xlu0 %1736, %v1708
        %v1738 = vpop.permute.xlu0 %1737
        %1739 = vset.pattern.permute.xlu0 0
        %1740 = vperm.xlu0 %1739, %v1710
        %v1741 = vpop.permute.xlu0 %1740
        %1742 = vset.pattern.permute.xlu0 0
        %1743 = vperm.xlu0 %1742, %v1712
        %v1744 = vpop.permute.xlu0 %1743
        %v1745 = vlaneseq
        %v1746 = vshrl.u32 %v1745, 7
        %v1747 = vsub.s32 %v1597, %v1746
        %v1748 = vrot.slane %v1723, %v1747
        %v1749 = vlaneseq
        %v1750 = vshrl.u32 %v1749, 7
        %v1751 = vsub.s32 %v1597, %v1750
        %v1752 = vrot.slane %v1726, %v1751
        %v1753 = vlaneseq
        %v1754 = vshrl.u32 %v1753, 7
        %v1755 = vsub.s32 %v1597, %v1754
        %v1756 = vrot.slane %v1729, %v1755
        %v1757 = vlaneseq
        %v1758 = vshrl.u32 %v1757, 7
        %v1759 = vsub.s32 %v1597, %v1758
        %v1760 = vrot.slane %v1732, %v1759
        %v1761 = vlaneseq
        %v1762 = vshrl.u32 %v1761, 7
        %v1763 = vsub.s32 %v1597, %v1762
        %v1764 = vrot.slane %v1735, %v1763
        %v1765 = vlaneseq
        %v1766 = vshrl.u32 %v1765, 7
        %v1767 = vsub.s32 %v1597, %v1766
        %v1768 = vrot.slane %v1738, %v1767
        %v1769 = vlaneseq
        %v1770 = vshrl.u32 %v1769, 7
        %v1771 = vsub.s32 %v1597, %v1770
        %v1772 = vrot.slane %v1741, %v1771
        %v1773 = vlaneseq
        %v1774 = vshrl.u32 %v1773, 7
        %v1775 = vsub.s32 %v1597, %v1774
        %v1776 = vrot.slane %v1744, %v1775
        %v1777 = vsel %vm1630, %v1752, %v1748
        %v1778 = vsel %vm1632, %v1756, %v1777
        %v1779 = vsel %vm1634, %v1760, %v1778
        %v1780 = vsel %vm1636, %v1764, %v1779
        %v1781 = vsel %vm1638, %v1768, %v1780
        %v1782 = vsel %vm1640, %v1772, %v1781
        %v1783 = vsel %vm1642, %v1776, %v1782
        %v1785 = vsel %vm1025, %v1783, 0.0
        %1786 = vadd.xlane.f32.xlu0 %v1785
        %v1787 = vpop.xlane.xlu0 %1786
        %v1788 = vrcp.pop %v1787
        %v1790 = vlaneseq
        %v1791 = vshrl.u32 %v1790, 7
        %v1792 = vsub.s32 0, %v1791
        %v1793 = vrot.slane %v1788, %v1792
        %v1794 = vlaneseq
        %v1795 = vshrl.u32 %v1794, 7
        %v1796 = vsub.s32 1, %v1795
        %v1797 = vrot.slane %v1788, %v1796
        %v1798 = vlaneseq
        %v1799 = vshrl.u32 %v1798, 7
        %v1800 = vsub.s32 2, %v1799
        %v1801 = vrot.slane %v1788, %v1800
        %v1802 = vlaneseq
        %v1803 = vshrl.u32 %v1802, 7
        %v1804 = vsub.s32 3, %v1803
        %v1805 = vrot.slane %v1788, %v1804
        %v1806 = vlaneseq
        %v1807 = vshrl.u32 %v1806, 7
        %v1808 = vsub.s32 4, %v1807
        %v1809 = vrot.slane %v1788, %v1808
        %v1810 = vlaneseq
        %v1811 = vshrl.u32 %v1810, 7
        %v1812 = vsub.s32 5, %v1811
        %v1813 = vrot.slane %v1788, %v1812
        %v1814 = vlaneseq
        %v1815 = vshrl.u32 %v1814, 7
        %v1816 = vsub.s32 6, %v1815
        %v1817 = vrot.slane %v1788, %v1816
        %v1818 = vlaneseq
        %v1819 = vshrl.u32 %v1818, 7
        %v1820 = vsub.s32 7, %v1819
        %v1821 = vrot.slane %v1788, %v1820
        %v1830 = vmul.f32 %v1698, %v1793
        %v1831 = vmul.f32 %v1700, %v1797
        %v1832 = vmul.f32 %v1702, %v1801
        %v1833 = vmul.f32 %v1704, %v1805
        %v1834 = vmul.f32 %v1706, %v1809
        %v1835 = vmul.f32 %v1708, %v1813
        %v1836 = vmul.f32 %v1710, %v1817
        %v1837 = vmul.f32 %v1712, %v1821
        %v1838 = vmul.f32 %v1830, %v1498
        %v1839 = vmul.f32 %v1831, %v1505
        %v1840 = vmul.f32 %v1832, %v1512
        %v1841 = vmul.f32 %v1833, %v1519
        %v1842 = vmul.f32 %v1834, %v1526
        %v1843 = vmul.f32 %v1835, %v1533
        %v1844 = vmul.f32 %v1836, %v1540
        %v1845 = vmul.f32 %v1837, %v1547
        %1854 = vset.pattern.permute.xlu0 0
        %1855 = vperm.xlu0 %1854, %v1838
        %v1856 = vpop.permute.xlu0 %1855
        %1857 = vset.pattern.permute.xlu0 0
        %1858 = vperm.xlu0 %1857, %v1839
        %v1859 = vpop.permute.xlu0 %1858
        %1860 = vset.pattern.permute.xlu0 0
        %1861 = vperm.xlu0 %1860, %v1840
        %v1862 = vpop.permute.xlu0 %1861
        %1863 = vset.pattern.permute.xlu0 0
        %1864 = vperm.xlu0 %1863, %v1841
        %v1865 = vpop.permute.xlu0 %1864
        %1866 = vset.pattern.permute.xlu0 0
        %1867 = vperm.xlu0 %1866, %v1842
        %v1868 = vpop.permute.xlu0 %1867
        %1869 = vset.pattern.permute.xlu0 0
        %1870 = vperm.xlu0 %1869, %v1843
        %v1871 = vpop.permute.xlu0 %1870
        %1872 = vset.pattern.permute.xlu0 0
        %1873 = vperm.xlu0 %1872, %v1844
        %v1874 = vpop.permute.xlu0 %1873
        %1875 = vset.pattern.permute.xlu0 0
        %1876 = vperm.xlu0 %1875, %v1845
        %v1877 = vpop.permute.xlu0 %1876
        %v1878 = vlaneseq
        %v1879 = vshrl.u32 %v1878, 7
        %v1880 = vsub.s32 %v1597, %v1879
        %v1881 = vrot.slane %v1856, %v1880
        %v1882 = vlaneseq
        %v1883 = vshrl.u32 %v1882, 7
        %v1884 = vsub.s32 %v1597, %v1883
        %v1885 = vrot.slane %v1859, %v1884
        %v1886 = vlaneseq
        %v1887 = vshrl.u32 %v1886, 7
        %v1888 = vsub.s32 %v1597, %v1887
        %v1889 = vrot.slane %v1862, %v1888
        %v1890 = vlaneseq
        %v1891 = vshrl.u32 %v1890, 7
        %v1892 = vsub.s32 %v1597, %v1891
        %v1893 = vrot.slane %v1865, %v1892
        %v1894 = vlaneseq
        %v1895 = vshrl.u32 %v1894, 7
        %v1896 = vsub.s32 %v1597, %v1895
        %v1897 = vrot.slane %v1868, %v1896
        %v1898 = vlaneseq
        %v1899 = vshrl.u32 %v1898, 7
        %v1900 = vsub.s32 %v1597, %v1899
        %v1901 = vrot.slane %v1871, %v1900
        %v1902 = vlaneseq
        %v1903 = vshrl.u32 %v1902, 7
        %v1904 = vsub.s32 %v1597, %v1903
        %v1905 = vrot.slane %v1874, %v1904
        %v1906 = vlaneseq
        %v1907 = vshrl.u32 %v1906, 7
        %v1908 = vsub.s32 %v1597, %v1907
        %v1909 = vrot.slane %v1877, %v1908
        %v1910 = vsel %vm1630, %v1885, %v1881
        %v1911 = vsel %vm1632, %v1889, %v1910
        %v1912 = vsel %vm1634, %v1893, %v1911
        %v1913 = vsel %vm1636, %v1897, %v1912
        %v1914 = vsel %vm1638, %v1901, %v1913
        %v1915 = vsel %vm1640, %v1905, %v1914
        %v1916 = vsel %vm1642, %v1909, %v1915
        %v1917 = vsel %vm1025, %v1916, 0
        %1919 = vmatprep.subr.mxu0 0.0
        %1920 = vmatpush1.msra.mxu0 %v1009
        %1921 = vmatprep.subr.mxu0 0.0
        %1922 = vmatpush1.msra.mxu0 0.0
        %1923 = vmatprep.subr.mxu0 0.0
        %1924 = vmatpush1.msra.mxu0 0.0
        %1925 = vmatprep.subr.mxu0 0.0
        %1926 = vmatpush1.msra.mxu0 0.0
        %1927 = vmatprep.subr.mxu0 0.0
        %1928 = vmatpush1.msra.mxu0 0.0
        %1929 = vmatprep.subr.mxu0 0.0
        %1930 = vmatpush1.msra.mxu0 0.0
        %1931 = vmatprep.subr.mxu0 0.0
        %1932 = vmatpush1.msra.mxu0 0.0
        %1933 = vmatprep.subr.mxu0 0.0
        %1934 = vmatpush1.msra.mxu0 0.0
        %1935 = vmatprep.subr.mxu0 0.0
        %1936 = vmatpush1.msra.mxu0 0.0
        %1937 = vmatprep.subr.mxu0 0.0
        %1938 = vmatpush1.msra.mxu0 0.0
        %1939 = vmatprep.subr.mxu0 0.0
        %1940 = vmatpush1.msra.mxu0 0.0
        %1941 = vmatprep.subr.mxu0 0.0
        %1942 = vmatpush1.msra.mxu0 0.0
        %1943 = vmatprep.subr.mxu0 0.0
        %1944 = vmatpush1.msra.mxu0 0.0
        %1945 = vmatprep.subr.mxu0 0.0
        %1946 = vmatpush1.msra.mxu0 0.0
        %1947 = vmatprep.subr.mxu0 0.0
        %1948 = vmatpush1.msra.mxu0 0.0
        %1949 = vmatprep.subr.mxu0 0.0
        %1950 = vmatpush1.msra.mxu0 0.0
        %1951 = vmatprep.subr.mxu0 0.0
        %1952 = vmatpush1.msra.mxu0 0.0
        %1953 = vmatprep.subr.mxu0 0.0
        %1954 = vmatpush1.msra.mxu0 0.0
        %1955 = vmatprep.subr.mxu0 0.0
        %1956 = vmatpush1.msra.mxu0 0.0
        %1957 = vmatprep.subr.mxu0 0.0
        %1958 = vmatpush1.msra.mxu0 0.0
        %1959 = vmatprep.subr.mxu0 0.0
        %1960 = vmatpush1.msra.mxu0 0.0
        %1961 = vmatprep.subr.mxu0 0.0
        %1962 = vmatpush1.msra.mxu0 0.0
        %1963 = vmatprep.subr.mxu0 0.0
        %1964 = vmatpush1.msra.mxu0 0.0
        %1965 = vmatprep.subr.mxu0 0.0
        %1966 = vmatpush1.msra.mxu0 0.0
        %1967 = vmatprep.subr.mxu0 0.0
        %1968 = vmatpush1.msra.mxu0 0.0
        %1969 = vmatprep.subr.mxu0 0.0
        %1970 = vmatpush1.msra.mxu0 0.0
        %1971 = vmatprep.subr.mxu0 0.0
        %1972 = vmatpush1.msra.mxu0 0.0
        %1973 = vmatprep.subr.mxu0 0.0
        %1974 = vmatpush1.msra.mxu0 0.0
        %1975 = vmatprep.subr.mxu0 0.0
        %1976 = vmatpush1.msra.mxu0 0.0
        %1977 = vmatprep.subr.mxu0 0.0
        %1978 = vmatpush1.msra.mxu0 0.0
        %1979 = vmatprep.subr.mxu0 0.0
        %1980 = vmatpush1.msra.mxu0 0.0
        %1981 = vmatprep.subr.mxu0 0.0
        %1982 = vmatpush1.msra.mxu0 0.0
        %1983 = vmatprep.mubr.f32.mxu0 0.0
        %1984 = vmatmul.mubr.f32.gmra.mrb[0].mxu0 %v1917
        %v1985 = vpop.f32.mrb[0].mxu0
        %v1986 = vadd.f32 0.0, %v1985
        %v1987 = vpop.f32.mrb[0].mxu0
        %1988 = vdwg.mxu0
        %v1989 = vld [vmem:[%s21] sm:$0xff]
        %v1990 = vld [vmem:[%s21 + $0x8] sm:$0xff]
        %v1991 = vld [vmem:[%s21 + $0x10] sm:$0xff]
        %v1992 = vld [vmem:[%s21 + $0x18] sm:$0xff]
        %v1993 = vld [vmem:[%s23] sm:$0xf]
        %vm1994 = vcmask 31744
        %v1996 = vsel %vm1994, %v1166, 0
        %vm1998 = vcmask 1043456
        %v2000 = vsel %vm1998, %v1993, 0
        %2002 = vmatprep.subr.mxu0 0.0
        %2003 = vmatpush1.msra.mxu0 %v2000
        %2004 = vmatprep.subr.mxu0 0.0
        %2005 = vmatpush1.msra.mxu0 0.0
        %2006 = vmatprep.subr.mxu0 0.0
        %2007 = vmatpush1.msra.mxu0 0.0
        %2008 = vmatprep.subr.mxu0 0.0
        %2009 = vmatpush1.msra.mxu0 0.0
        %2010 = vmatprep.subr.mxu0 0.0
        %2011 = vmatpush1.msra.mxu0 0.0
        %2012 = vmatprep.subr.mxu0 0.0
        %2013 = vmatpush1.msra.mxu0 0.0
        %2014 = vmatprep.subr.mxu0 0.0
        %2015 = vmatpush1.msra.mxu0 0.0
        %2016 = vmatprep.subr.mxu0 0.0
        %2017 = vmatpush1.msra.mxu0 0.0
        %2018 = vmatprep.subr.mxu0 0.0
        %2019 = vmatpush1.msra.mxu0 0.0
        %2020 = vmatprep.subr.mxu0 0.0
        %2021 = vmatpush1.msra.mxu0 0.0
        %2022 = vmatprep.subr.mxu0 0.0
        %2023 = vmatpush1.msra.mxu0 0.0
        %2024 = vmatprep.subr.mxu0 0.0
        %2025 = vmatpush1.msra.mxu0 0.0
        %2026 = vmatprep.subr.mxu0 0.0
        %2027 = vmatpush1.msra.mxu0 0.0
        %2028 = vmatprep.subr.mxu0 0.0
        %2029 = vmatpush1.msra.mxu0 0.0
        %2030 = vmatprep.subr.mxu0 0.0
        %2031 = vmatpush1.msra.mxu0 0.0
        %2032 = vmatprep.subr.mxu0 0.0
        %2033 = vmatpush1.msra.mxu0 0.0
        %2034 = vmatprep.subr.mxu0 0.0
        %2035 = vmatpush1.msra.mxu0 0.0
        %2036 = vmatprep.subr.mxu0 0.0
        %2037 = vmatpush1.msra.mxu0 0.0
        %2038 = vmatprep.subr.mxu0 0.0
        %2039 = vmatpush1.msra.mxu0 0.0
        %2040 = vmatprep.subr.mxu0 0.0
        %2041 = vmatpush1.msra.mxu0 0.0
        %2042 = vmatprep.subr.mxu0 0.0
        %2043 = vmatpush1.msra.mxu0 0.0
        %2044 = vmatprep.subr.mxu0 0.0
        %2045 = vmatpush1.msra.mxu0 0.0
        %2046 = vmatprep.subr.mxu0 0.0
        %2047 = vmatpush1.msra.mxu0 0.0
        %2048 = vmatprep.subr.mxu0 0.0
        %2049 = vmatpush1.msra.mxu0 0.0
        %2050 = vmatprep.subr.mxu0 0.0
        %2051 = vmatpush1.msra.mxu0 0.0
        %2052 = vmatprep.subr.mxu0 0.0
        %2053 = vmatpush1.msra.mxu0 0.0
        %2054 = vmatprep.subr.mxu0 0.0
        %2055 = vmatpush1.msra.mxu0 0.0
        %2056 = vmatprep.subr.mxu0 0.0
        %2057 = vmatpush1.msra.mxu0 0.0
        %2058 = vmatprep.subr.mxu0 0.0
        %2059 = vmatpush1.msra.mxu0 0.0
        %2060 = vmatprep.subr.mxu0 0.0
        %2061 = vmatpush1.msra.mxu0 0.0
        %2062 = vmatprep.subr.mxu0 0.0
        %2063 = vmatpush1.msra.mxu0 0.0
        %2064 = vmatprep.subr.mxu0 0.0
        %2065 = vmatpush1.msra.mxu0 0.0
        %2066 = vmatprep.mubr.f32.mxu0 0.0
        %2067 = vmatmul.mubr.f32.gmra.mrb[0].mxu0 %v1996
        %v2068 = vpop.f32.mrb[0].mxu0
        %v2069 = vadd.f32 0.0, %v2068
        %v2070 = vpop.f32.mrb[0].mxu0
        %2071 = vdwg.mxu0
        %v2073 = vsel %vm1169, %v1986, 0
        %2075 = vmatprep.subr.mxu0 0.0
        %2076 = vmatpush1.msra.mxu0 %v1989
        %2077 = vmatprep.subr.mxu0 0.0
        %2078 = vmatpush1.msra.mxu0 %v1990
        %2079 = vmatprep.subr.mxu0 0.0
        %2080 = vmatpush1.msra.mxu0 %v1991
        %2081 = vmatprep.subr.mxu0 0.0
        %2082 = vmatpush1.msra.mxu0 %v1992
        %2083 = vmatprep.subr.mxu0 0.0
        %2084 = vmatpush1.msra.mxu0 0.0
        %2085 = vmatprep.subr.mxu0 0.0
        %2086 = vmatpush1.msra.mxu0 0.0
        %2087 = vmatprep.subr.mxu0 0.0
        %2088 = vmatpush1.msra.mxu0 0.0
        %2089 = vmatprep.subr.mxu0 0.0
        %2090 = vmatpush1.msra.mxu0 0.0
        %2091 = vmatprep.subr.mxu0 0.0
        %2092 = vmatpush1.msra.mxu0 0.0
        %2093 = vmatprep.subr.mxu0 0.0
        %2094 = vmatpush1.msra.mxu0 0.0
        %2095 = vmatprep.subr.mxu0 0.0
        %2096 = vmatpush1.msra.mxu0 0.0
        %2097 = vmatprep.subr.mxu0 0.0
        %2098 = vmatpush1.msra.mxu0 0.0
        %2099 = vmatprep.subr.mxu0 0.0
        %2100 = vmatpush1.msra.mxu0 0.0
        %2101 = vmatprep.subr.mxu0 0.0
        %2102 = vmatpush1.msra.mxu0 0.0
        %2103 = vmatprep.subr.mxu0 0.0
        %2104 = vmatpush1.msra.mxu0 0.0
        %2105 = vmatprep.subr.mxu0 0.0
        %2106 = vmatpush1.msra.mxu0 0.0
        %2107 = vmatprep.subr.mxu0 0.0
        %2108 = vmatpush1.msra.mxu0 0.0
        %2109 = vmatprep.subr.mxu0 0.0
        %2110 = vmatpush1.msra.mxu0 0.0
        %2111 = vmatprep.subr.mxu0 0.0
        %2112 = vmatpush1.msra.mxu0 0.0
        %2113 = vmatprep.subr.mxu0 0.0
        %2114 = vmatpush1.msra.mxu0 0.0
        %2115 = vmatprep.subr.mxu0 0.0
        %2116 = vmatpush1.msra.mxu0 0.0
        %2117 = vmatprep.subr.mxu0 0.0
        %2118 = vmatpush1.msra.mxu0 0.0
        %2119 = vmatprep.subr.mxu0 0.0
        %2120 = vmatpush1.msra.mxu0 0.0
        %2121 = vmatprep.subr.mxu0 0.0
        %2122 = vmatpush1.msra.mxu0 0.0
        %2123 = vmatprep.subr.mxu0 0.0
        %2124 = vmatpush1.msra.mxu0 0.0
        %2125 = vmatprep.subr.mxu0 0.0
        %2126 = vmatpush1.msra.mxu0 0.0
        %2127 = vmatprep.subr.mxu0 0.0
        %2128 = vmatpush1.msra.mxu0 0.0
        %2129 = vmatprep.subr.mxu0 0.0
        %2130 = vmatpush1.msra.mxu0 0.0
        %2131 = vmatprep.subr.mxu0 0.0
        %2132 = vmatpush1.msra.mxu0 0.0
        %2133 = vmatprep.subr.mxu0 0.0
        %2134 = vmatpush1.msra.mxu0 0.0
        %2135 = vmatprep.subr.mxu0 0.0
        %2136 = vmatpush1.msra.mxu0 0.0
        %2137 = vmatprep.subr.mxu0 0.0
        %2138 = vmatpush1.msra.mxu0 0.0
        %2139 = vmatprep.mubr.f32.mxu0 0.0
        %2140 = vmatmul.mubr.f32.gmra.mrb[0].mxu0 %v2073
        %v2141 = vpop.f32.mrb[0].mxu0
        %v2142 = vadd.f32 %v2069, %v2141
        %v2143 = vpop.f32.mrb[0].mxu0
        %2144 = vdwg.mxu0
        %v2145 = vld [vmem:[%s25] sm:$0x1]
        %v2147 = vlaneseq
        %v2148 = vshrl.u32 %v2147, 7
        %v2149 = vsub.s32 0, %v2148
        %v2150 = vrot.slane %v2145, %v2149
        %v2152 = vadd.f32 %v2142, %v2150
        %v2153 = vmax.f32 %v2152, 0.0
        %v2154 = vld [vmem:[%s27] sm:$0xff]
        %v2155 = vld [vmem:[%s27 + $0x8] sm:$0xff]
        %v2156 = vld [vmem:[%s27 + $0x10] sm:$0xff]
        %v2157 = vld [vmem:[%s27 + $0x18] sm:$0xff]
        %v2158 = vld [vmem:[%s27 + $0x20] sm:$0xff]
        %v2159 = vld [vmem:[%s27 + $0x28] sm:$0xff]
        %v2160 = vld [vmem:[%s27 + $0x30] sm:$0xff]
        %v2161 = vld [vmem:[%s27 + $0x38] sm:$0xff]
        %v2162 = vld [vmem:[%s29] sm:$0x1]
        %v2164 = vlaneseq
        %v2165 = vshrl.u32 %v2164, 7
        %v2166 = vsub.s32 0, %v2165
        %v2167 = vrot.slane %v2162, %v2166
        %v2170 = vsel %vm1450, %v2153, 0
        %2172 = vmatprep.subr.mxu0 0.0
        %2173 = vmatpush1.msra.mxu0 %v2154
        %2174 = vmatprep.subr.mxu0 0.0
        %2175 = vmatpush1.msra.mxu0 %v2155
        %2176 = vmatprep.subr.mxu0 0.0
        %2177 = vmatpush1.msra.mxu0 %v2156
        %2178 = vmatprep.subr.mxu0 0.0
        %2179 = vmatpush1.msra.mxu0 %v2157
        %2180 = vmatprep.subr.mxu0 0.0
        %2181 = vmatpush1.msra.mxu0 %v2158
        %2182 = vmatprep.subr.mxu0 0.0
        %2183 = vmatpush1.msra.mxu0 %v2159
        %2184 = vmatprep.subr.mxu0 0.0
        %2185 = vmatpush1.msra.mxu0 %v2160
        %2186 = vmatprep.subr.mxu0 0.0
        %2187 = vmatpush1.msra.mxu0 %v2161
        %2188 = vmatprep.subr.mxu0 0.0
        %2189 = vmatpush1.msra.mxu0 0.0
        %2190 = vmatprep.subr.mxu0 0.0
        %2191 = vmatpush1.msra.mxu0 0.0
        %2192 = vmatprep.subr.mxu0 0.0
        %2193 = vmatpush1.msra.mxu0 0.0
        %2194 = vmatprep.subr.mxu0 0.0
        %2195 = vmatpush1.msra.mxu0 0.0
        %2196 = vmatprep.subr.mxu0 0.0
        %2197 = vmatpush1.msra.mxu0 0.0
        %2198 = vmatprep.subr.mxu0 0.0
        %2199 = vmatpush1.msra.mxu0 0.0
        %2200 = vmatprep.subr.mxu0 0.0
        %2201 = vmatpush1.msra.mxu0 0.0
        %2202 = vmatprep.subr.mxu0 0.0
        %2203 = vmatpush1.msra.mxu0 0.0
        %2204 = vmatprep.subr.mxu0 0.0
        %2205 = vmatpush1.msra.mxu0 0.0
        %2206 = vmatprep.subr.mxu0 0.0
        %2207 = vmatpush1.msra.mxu0 0.0
        %2208 = vmatprep.subr.mxu0 0.0
        %2209 = vmatpush1.msra.mxu0 0.0
        %2210 = vmatprep.subr.mxu0 0.0
        %2211 = vmatpush1.msra.mxu0 0.0
        %2212 = vmatprep.subr.mxu0 0.0
        %2213 = vmatpush1.msra.mxu0 0.0
        %2214 = vmatprep.subr.mxu0 0.0
        %2215 = vmatpush1.msra.mxu0 0.0
        %2216 = vmatprep.subr.mxu0 0.0
        %2217 = vmatpush1.msra.mxu0 0.0
        %2218 = vmatprep.subr.mxu0 0.0
        %2219 = vmatpush1.msra.mxu0 0.0
        %2220 = vmatprep.subr.mxu0 0.0
        %2221 = vmatpush1.msra.mxu0 0.0
        %2222 = vmatprep.subr.mxu0 0.0
        %2223 = vmatpush1.msra.mxu0 0.0
        %2224 = vmatprep.subr.mxu0 0.0
        %2225 = vmatpush1.msra.mxu0 0.0
        %2226 = vmatprep.subr.mxu0 0.0
        %2227 = vmatpush1.msra.mxu0 0.0
        %2228 = vmatprep.subr.mxu0 0.0
        %2229 = vmatpush1.msra.mxu0 0.0
        %2230 = vmatprep.subr.mxu0 0.0
        %2231 = vmatpush1.msra.mxu0 0.0
        %2232 = vmatprep.subr.mxu0 0.0
        %2233 = vmatpush1.msra.mxu0 0.0
        %2234 = vmatprep.subr.mxu0 0.0
        %2235 = vmatpush1.msra.mxu0 0.0
        %2236 = vmatprep.mubr.f32.mxu0 0.0
        %2237 = vmatmul.mubr.f32.gmra.mrb[0].mxu0 %v2170
        %v2238 = vpop.f32.mrb[0].mxu0
        %v2239 = vadd.f32 %v2167, %v2238
        %v2240 = vpop.f32.mrb[0].mxu0
        %2241 = vdwg.mxu0
        %v2242 = vadd.f32 %v2239, %v1013
        %v2243 = vmul.f32 %v2242, 2.0
        %v2244 = vsel %vm1994, %v2243, -inf
        %2245 = vmax.xlane.f32.xlu0 %v2244
        %v2246 = vpop.xlane.xlu0 %2245
        %v2247 = vsub.f32 %v2243, %v2246
        %v2248 = vmul.f32 %v2247, 1.442695
        %v2249 = vpow.pop %v2248
        %v2250 = vsel %vm1994, %v2249, 0.0
        %2251 = vadd.xlane.f32.xlu0 %v2250
        %v2252 = vpop.xlane.xlu0 %2251
        %v2253 = vrcp.pop %v2252
        %v2254 = vmul.f32 %v2249, %v2253
        %v2255 = vld [vmem:[%s31] sm:$0x1]
        %v2257 = vlaneseq
        %v2258 = vshrl.u32 %v2257, 7
        %v2259 = vsub.s32 0, %v2258
        %v2260 = vrot.slane %v2255, %v2259
        %2261 = vrot.lane.b32.xlu0 %v2260, 64
        %v2262 = vpop.permute.xlu0 %2261
        %v2264 = vmul.f32 %v2153, %v2262
        %2266 = vrot.lane.b32.xlu0 %v2264, 64
        %v2267 = vpop.permute.xlu0 %2266
        %v2269 = vsel %vm1450, %v2267, 0.0
        %2270 = vadd.xlane.f32.xlu0 %v2269
        %v2271 = vpop.xlane.xlu0 %2270
        %v2272 = vld [vmem:[#allocation4] sm:$0x1]
        %v2274 = vlaneseq
        %v2275 = vshrl.u32 %v2274, 7
        %v2276 = vsub.s32 0, %v2275
        %v2277 = vrot.slane %v2272, %v2276
        %v2279 = vadd.f32 %v2271, %v2277
        %v2280 = vsub.f32 0.0, %v2279
        %v2281 = vmul.f32 %v2280, 1.442695
        %v2282 = vpow.pop %v2281
        %v2283 = vadd.f32 %v2282, 1.0
        %v2284 = vrcp.pop %v2283
        %v2285 = vmul.f32 1.0, %v2284
        %v2286 = vld [vmem:[%s35] sm:$0xf]
        %v2288 = vsel %vm1994, %v2254, 0
        %v2291 = vsel %vm1998, %v2286, 0
        %2293 = vmatprep.subr.mxu0 0.0
        %2294 = vmatpush1.msra.mxu0 %v2291
        %2295 = vmatprep.subr.mxu0 0.0
        %2296 = vmatpush1.msra.mxu0 0.0
        %2297 = vmatprep.subr.mxu0 0.0
        %2298 = vmatpush1.msra.mxu0 0.0
        %2299 = vmatprep.subr.mxu0 0.0
        %2300 = vmatpush1.msra.mxu0 0.0
        %2301 = vmatprep.subr.mxu0 0.0
        %2302 = vmatpush1.msra.mxu0 0.0
        %2303 = vmatprep.subr.mxu0 0.0
        %2304 = vmatpush1.msra.mxu0 0.0
        %2305 = vmatprep.subr.mxu0 0.0
        %2306 = vmatpush1.msra.mxu0 0.0
        %2307 = vmatprep.subr.mxu0 0.0
        %2308 = vmatpush1.msra.mxu0 0.0
        %2309 = vmatprep.subr.mxu0 0.0
        %2310 = vmatpush1.msra.mxu0 0.0
        %2311 = vmatprep.subr.mxu0 0.0
        %2312 = vmatpush1.msra.mxu0 0.0
        %2313 = vmatprep.subr.mxu0 0.0
        %2314 = vmatpush1.msra.mxu0 0.0
        %2315 = vmatprep.subr.mxu0 0.0
        %2316 = vmatpush1.msra.mxu0 0.0
        %2317 = vmatprep.subr.mxu0 0.0
        %2318 = vmatpush1.msra.mxu0 0.0
        %2319 = vmatprep.subr.mxu0 0.0
        %2320 = vmatpush1.msra.mxu0 0.0
        %2321 = vmatprep.subr.mxu0 0.0
        %2322 = vmatpush1.msra.mxu0 0.0
        %2323 = vmatprep.subr.mxu0 0.0
        %2324 = vmatpush1.msra.mxu0 0.0
        %2325 = vmatprep.subr.mxu0 0.0
        %2326 = vmatpush1.msra.mxu0 0.0
        %2327 = vmatprep.subr.mxu0 0.0
        %2328 = vmatpush1.msra.mxu0 0.0
        %2329 = vmatprep.subr.mxu0 0.0
        %2330 = vmatpush1.msra.mxu0 0.0
        %2331 = vmatprep.subr.mxu0 0.0
        %2332 = vmatpush1.msra.mxu0 0.0
        %2333 = vmatprep.subr.mxu0 0.0
        %2334 = vmatpush1.msra.mxu0 0.0
        %2335 = vmatprep.subr.mxu0 0.0
        %2336 = vmatpush1.msra.mxu0 0.0
        %2337 = vmatprep.subr.mxu0 0.0
        %2338 = vmatpush1.msra.mxu0 0.0
        %2339 = vmatprep.subr.mxu0 0.0
        %2340 = vmatpush1.msra.mxu0 0.0
        %2341 = vmatprep.subr.mxu0 0.0
        %2342 = vmatpush1.msra.mxu0 0.0
        %2343 = vmatprep.subr.mxu0 0.0
        %2344 = vmatpush1.msra.mxu0 0.0
        %2345 = vmatprep.subr.mxu0 0.0
        %2346 = vmatpush1.msra.mxu0 0.0
        %2347 = vmatprep.subr.mxu0 0.0
        %2348 = vmatpush1.msra.mxu0 0.0
        %2349 = vmatprep.subr.mxu0 0.0
        %2350 = vmatpush1.msra.mxu0 0.0
        %2351 = vmatprep.subr.mxu0 0.0
        %2352 = vmatpush1.msra.mxu0 0.0
        %2353 = vmatprep.subr.mxu0 0.0
        %2354 = vmatpush1.msra.mxu0 0.0
        %2355 = vmatprep.subr.mxu0 0.0
        %2356 = vmatpush1.msra.mxu0 0.0
        %2357 = vmatprep.mubr.f32.mxu0 0.0
        %2358 = vmatmul.mubr.f32.gmra.mrb[0].mxu0 %v2288
        %v2359 = vpop.f32.mrb[0].mxu0
        %v2360 = vadd.f32 0.0, %v2359
        %v2361 = vpop.f32.mrb[0].mxu0
        %2362 = vdwg.mxu0
        %2364 = vset.pattern.permute.xlu0 0
        %2365 = vperm.xlu0 %2364, %v2285
        %v2366 = vpop.permute.xlu0 %2365
        %v2368 = vmul.f32 %v2366, %v2360
        %v2370 = vsel %vm1169, %v2368, 0
        %2372 = vmatprep.subr.mxu0 0.0
        %2373 = vmatpush1.msra.mxu0 %v1014
        %2374 = vmatprep.subr.mxu0 0.0
        %2375 = vmatpush1.msra.mxu0 %v1015
        %2376 = vmatprep.subr.mxu0 0.0
        %2377 = vmatpush1.msra.mxu0 %v1016
        %2378 = vmatprep.subr.mxu0 0.0
        %2379 = vmatpush1.msra.mxu0 %v1017
        %2380 = vmatprep.subr.mxu0 0.0
        %2381 = vmatpush1.msra.mxu0 0.0
        %2382 = vmatprep.subr.mxu0 0.0
        %2383 = vmatpush1.msra.mxu0 0.0
        %2384 = vmatprep.subr.mxu0 0.0
        %2385 = vmatpush1.msra.mxu0 0.0
        %2386 = vmatprep.subr.mxu0 0.0
        %2387 = vmatpush1.msra.mxu0 0.0
        %2388 = vmatprep.subr.mxu0 0.0
        %2389 = vmatpush1.msra.mxu0 0.0
        %2390 = vmatprep.subr.mxu0 0.0
        %2391 = vmatpush1.msra.mxu0 0.0
        %2392 = vmatprep.subr.mxu0 0.0
        %2393 = vmatpush1.msra.mxu0 0.0
        %2394 = vmatprep.subr.mxu0 0.0
        %2395 = vmatpush1.msra.mxu0 0.0
        %2396 = vmatprep.subr.mxu0 0.0
        %2397 = vmatpush1.msra.mxu0 0.0
        %2398 = vmatprep.subr.mxu0 0.0
        %2399 = vmatpush1.msra.mxu0 0.0
        %2400 = vmatprep.subr.mxu0 0.0
        %2401 = vmatpush1.msra.mxu0 0.0
        %2402 = vmatprep.subr.mxu0 0.0
        %2403 = vmatpush1.msra.mxu0 0.0
        %2404 = vmatprep.subr.mxu0 0.0
        %2405 = vmatpush1.msra.mxu0 0.0
        %2406 = vmatprep.subr.mxu0 0.0
        %2407 = vmatpush1.msra.mxu0 0.0
        %2408 = vmatprep.subr.mxu0 0.0
        %2409 = vmatpush1.msra.mxu0 0.0
        %2410 = vmatprep.subr.mxu0 0.0
        %2411 = vmatpush1.msra.mxu0 0.0
        %2412 = vmatprep.subr.mxu0 0.0
        %2413 = vmatpush1.msra.mxu0 0.0
        %2414 = vmatprep.subr.mxu0 0.0
        %2415 = vmatpush1.msra.mxu0 0.0
        %2416 = vmatprep.subr.mxu0 0.0
        %2417 = vmatpush1.msra.mxu0 0.0
        %2418 = vmatprep.subr.mxu0 0.0
        %2419 = vmatpush1.msra.mxu0 0.0
        %2420 = vmatprep.subr.mxu0 0.0
        %2421 = vmatpush1.msra.mxu0 0.0
        %2422 = vmatprep.subr.mxu0 0.0
        %2423 = vmatpush1.msra.mxu0 0.0
        %2424 = vmatprep.subr.mxu0 0.0
        %2425 = vmatpush1.msra.mxu0 0.0
        %2426 = vmatprep.subr.mxu0 0.0
        %2427 = vmatpush1.msra.mxu0 0.0
        %2428 = vmatprep.subr.mxu0 0.0
        %2429 = vmatpush1.msra.mxu0 0.0
        %2430 = vmatprep.subr.mxu0 0.0
        %2431 = vmatpush1.msra.mxu0 0.0
        %2432 = vmatprep.subr.mxu0 0.0
        %2433 = vmatpush1.msra.mxu0 0.0
        %2434 = vmatprep.subr.mxu0 0.0
        %2435 = vmatpush1.msra.mxu0 0.0
        %2436 = vmatprep.mubr.f32.mxu0 0.0
        %2437 = vmatmul.mubr.f32.gmra.mrb[0].mxu0 %v2370
        %v2438 = vpop.f32.mrb[0].mxu0
        %v2439 = vadd.f32 0.0, %v2438
        %v2440 = vpop.f32.mrb[0].mxu0
        %2441 = vdwg.mxu0
        %v2442 = vlaneseq
        %v2443 = vshrl.u32 %v2442, 7
        %v2444 = vsub.s32 0, %v2443
        %v2445 = vrot.slane %v1012, %v2444
        %2447 = vbcast.lane.b32.xlu0 %v2445, 256
        %v2448 = vpop.permute.xlu0 %2447
        %v2449 = vlaneseq
        %v2450 = vshrl.u32 %v2449, 7
        %v2451 = vsub.s32 1, %v2450
        %v2452 = vrot.slane %v1012, %v2451
        %2454 = vbcast.lane.b32.xlu0 %v2452, 256
        %v2455 = vpop.permute.xlu0 %2454
        %v2456 = vlaneseq
        %v2457 = vshrl.u32 %v2456, 7
        %v2458 = vsub.s32 2, %v2457
        %v2459 = vrot.slane %v1012, %v2458
        %2461 = vbcast.lane.b32.xlu0 %v2459, 256
        %v2462 = vpop.permute.xlu0 %2461
        %v2463 = vlaneseq
        %v2464 = vshrl.u32 %v2463, 7
        %v2465 = vsub.s32 3, %v2464
        %v2466 = vrot.slane %v1012, %v2465
        %2468 = vbcast.lane.b32.xlu0 %v2466, 256
        %v2469 = vpop.permute.xlu0 %2468
        %v2470 = vlaneseq
        %v2471 = vshrl.u32 %v2470, 7
        %v2472 = vsub.s32 4, %v2471
        %v2473 = vrot.slane %v1012, %v2472
        %2475 = vbcast.lane.b32.xlu0 %v2473, 256
        %v2476 = vpop.permute.xlu0 %2475
        %v2477 = vlaneseq
        %v2478 = vshrl.u32 %v2477, 7
        %v2479 = vsub.s32 5, %v2478
        %v2480 = vrot.slane %v1012, %v2479
        %2482 = vbcast.lane.b32.xlu0 %v2480, 256
        %v2483 = vpop.permute.xlu0 %2482
        %v2484 = vlaneseq
        %v2485 = vshrl.u32 %v2484, 7
        %v2486 = vsub.s32 6, %v2485
        %v2487 = vrot.slane %v1012, %v2486
        %2489 = vbcast.lane.b32.xlu0 %v2487, 256
        %v2490 = vpop.permute.xlu0 %2489
        %v2491 = vlaneseq
        %v2492 = vshrl.u32 %v2491, 7
        %v2493 = vsub.s32 7, %v2492
        %v2494 = vrot.slane %v1012, %v2493
        %2496 = vbcast.lane.b32.xlu0 %v2494, 256
        %v2497 = vpop.permute.xlu0 %2496
        %v2499 = vcombine.high %v2439, %v2439
        %v2501 = vunpack.c.l.s4 1966171168
        %v2502 = vunpack.c.0.s8 %v2501
        %v2503 = vlaneseq
        %v2504 = vshrl.u32 %v2503, 7
        %v2505 = vsub.s32 %v2502, %v2504
        %v2506 = vrot.slane %v2439, %v2505
        %v2508 = vunpack.c.l.s4 1966171168
        %v2509 = vunpack.c.0.s8 %v2508
        %v2510 = vlaneseq
        %v2511 = vshrl.u32 %v2510, 7
        %v2512 = vsub.s32 %v2509, %v2511
        %v2513 = vrot.slane %v2499, %v2512
        %v2514 = vcombine.high %v2506, %v2506
        %v2515 = vcombine.high %v2513, %v2513
        %v2517 = vunpack.c.l.s4 1966171168
        %v2518 = vunpack.c.0.s8 %v2517
        %v2519 = vlaneseq
        %v2520 = vshrl.u32 %v2519, 7
        %v2521 = vsub.s32 %v2518, %v2520
        %v2522 = vrot.slane %v2506, %v2521
        %v2524 = vunpack.c.l.s4 1966171168
        %v2525 = vunpack.c.0.s8 %v2524
        %v2526 = vlaneseq
        %v2527 = vshrl.u32 %v2526, 7
        %v2528 = vsub.s32 %v2525, %v2527
        %v2529 = vrot.slane %v2513, %v2528
        %v2531 = vunpack.c.l.s4 1966171168
        %v2532 = vunpack.c.0.s8 %v2531
        %v2533 = vlaneseq
        %v2534 = vshrl.u32 %v2533, 7
        %v2535 = vsub.s32 %v2532, %v2534
        %v2536 = vrot.slane %v2514, %v2535
        %v2538 = vunpack.c.l.s4 1966171168
        %v2539 = vunpack.c.0.s8 %v2538
        %v2540 = vlaneseq
        %v2541 = vshrl.u32 %v2540, 7
        %v2542 = vsub.s32 %v2539, %v2541
        %v2543 = vrot.slane %v2515, %v2542
        %v2544 = vcombine.high %v2522, %v2522
        %v2545 = vcombine.high %v2529, %v2529
        %v2546 = vcombine.high %v2536, %v2536
        %v2547 = vcombine.high %v2543, %v2543
        %v2548 = vlaneseq
        %v2549 = vshrl.u32 %v2548, 7
        %v2550 = vsub.s32 0, %v2549
        %v2551 = vrot.slane %v2522, %v2550
        %v2552 = vlaneseq
        %v2553 = vshrl.u32 %v2552, 7
        %v2554 = vsub.s32 0, %v2553
        %v2555 = vrot.slane %v2536, %v2554
        %v2556 = vlaneseq
        %v2557 = vshrl.u32 %v2556, 7
        %v2558 = vsub.s32 0, %v2557
        %v2559 = vrot.slane %v2544, %v2558
        %v2560 = vlaneseq
        %v2561 = vshrl.u32 %v2560, 7
        %v2562 = vsub.s32 0, %v2561
        %v2563 = vrot.slane %v2546, %v2562
        %v2564 = vlaneseq
        %v2565 = vshrl.u32 %v2564, 7
        %v2566 = vsub.s32 0, %v2565
        %v2567 = vrot.slane %v2529, %v2566
        %v2568 = vlaneseq
        %v2569 = vshrl.u32 %v2568, 7
        %v2570 = vsub.s32 0, %v2569
        %v2571 = vrot.slane %v2543, %v2570
        %v2572 = vlaneseq
        %v2573 = vshrl.u32 %v2572, 7
        %v2574 = vsub.s32 0, %v2573
        %v2575 = vrot.slane %v2545, %v2574
        %v2576 = vlaneseq
        %v2577 = vshrl.u32 %v2576, 7
        %v2578 = vsub.s32 0, %v2577
        %v2579 = vrot.slane %v2547, %v2578
        %v2588 = vadd.f32 %v2551, %v1240
        %v2589 = vadd.f32 %v2555, %v1240
        %v2590 = vadd.f32 %v2559, %v1240
        %v2591 = vadd.f32 %v2563, %v1240
        %v2592 = vadd.f32 %v2567, %v1240
        %v2593 = vadd.f32 %v2571, %v1240
        %v2594 = vadd.f32 %v2575, %v1240
        %v2595 = vadd.f32 %v2579, %v1240
        %v2596 = vmul.f32 %v2448, %v2588
        %v2597 = vmul.f32 %v2455, %v2589
        %v2598 = vmul.f32 %v2462, %v2590
        %v2599 = vmul.f32 %v2469, %v2591
        %v2600 = vmul.f32 %v2476, %v2592
        %v2601 = vmul.f32 %v2483, %v2593
        %v2602 = vmul.f32 %v2490, %v2594
        %v2603 = vmul.f32 %v2497, %v2595
        %v2604 = vadd.f32 %v2596, %v1418
        %v2605 = vadd.f32 %v2597, %v1418
        %v2606 = vadd.f32 %v2598, %v1418
        %v2607 = vadd.f32 %v2599, %v1418
        %v2608 = vadd.f32 %v2600, %v1418
        %v2609 = vadd.f32 %v2601, %v1418
        %v2610 = vadd.f32 %v2602, %v1418
        %v2611 = vadd.f32 %v2603, %v1418
        %v2612 = vmax.f32 %v2604, 0.0
        %v2613 = vmax.f32 %v2605, 0.0
        %v2614 = vmax.f32 %v2606, 0.0
        %v2615 = vmax.f32 %v2607, 0.0
        %v2616 = vmax.f32 %v2608, 0.0
        %v2617 = vmax.f32 %v2609, 0.0
        %v2618 = vmax.f32 %v2610, 0.0
        %v2619 = vmax.f32 %v2611, 0.0
        %v2620 = vmul.f32 %v2612, %v1440
        %v2621 = vmul.f32 %v2613, %v1440
        %v2622 = vmul.f32 %v2614, %v1440
        %v2623 = vmul.f32 %v2615, %v1440
        %v2624 = vmul.f32 %v2616, %v1440
        %v2625 = vmul.f32 %v2617, %v1440
        %v2626 = vmul.f32 %v2618, %v1440
        %v2627 = vmul.f32 %v2619, %v1440
        %v2628 = vsel %vm1450, %v2620, 0.0
        %2629 = vadd.xlane.f32.xlu0 %v2628
        %v2630 = vpop.xlane.xlu0 %2629
        %v2631 = vsel %vm1450, %v2621, 0.0
        %2632 = vadd.xlane.f32.xlu0 %v2631
        %v2633 = vpop.xlane.xlu0 %2632
        %v2634 = vsel %vm1450, %v2622, 0.0
        %2635 = vadd.xlane.f32.xlu0 %v2634
        %v2636 = vpop.xlane.xlu0 %2635
        %v2637 = vsel %vm1450, %v2623, 0.0
        %2638 = vadd.xlane.f32.xlu0 %v2637
        %v2639 = vpop.xlane.xlu0 %2638
        %v2640 = vsel %vm1450, %v2624, 0.0
        %2641 = vadd.xlane.f32.xlu0 %v2640
        %v2642 = vpop.xlane.xlu0 %2641
        %v2643 = vsel %vm1450, %v2625, 0.0
        %2644 = vadd.xlane.f32.xlu0 %v2643
        %v2645 = vpop.xlane.xlu0 %2644
        %v2646 = vsel %vm1450, %v2626, 0.0
        %2647 = vadd.xlane.f32.xlu0 %v2646
        %v2648 = vpop.xlane.xlu0 %2647
        %v2649 = vsel %vm1450, %v2627, 0.0
        %2650 = vadd.xlane.f32.xlu0 %v2649
        %v2651 = vpop.xlane.xlu0 %2650
        %v2652 = vadd.f32 %v2630, %v1482
        %v2653 = vadd.f32 %v2633, %v1482
        %v2654 = vadd.f32 %v2636, %v1482
        %v2655 = vadd.f32 %v2639, %v1482
        %v2656 = vadd.f32 %v2642, %v1482
        %v2657 = vadd.f32 %v2645, %v1482
        %v2658 = vadd.f32 %v2648, %v1482
        %v2659 = vadd.f32 %v2651, %v1482
        %vm2660 = vcmp.ge.f32.partialorder %v2652, 0.0
        %vm2661 = vcmp.ge.f32.partialorder %v2653, 0.0
        %vm2662 = vcmp.ge.f32.partialorder %v2654, 0.0
        %vm2663 = vcmp.ge.f32.partialorder %v2655, 0.0
        %vm2664 = vcmp.ge.f32.partialorder %v2656, 0.0
        %vm2665 = vcmp.ge.f32.partialorder %v2657, 0.0
        %vm2666 = vcmp.ge.f32.partialorder %v2658, 0.0
        %vm2667 = vcmp.ge.f32.partialorder %v2659, 0.0
        %v2668 = vmul.f32 %v2652, 0.01
        %v2669 = vmul.f32 %v2653, 0.01
        %v2670 = vmul.f32 %v2654, 0.01
        %v2671 = vmul.f32 %v2655, 0.01
        %v2672 = vmul.f32 %v2656, 0.01
        %v2673 = vmul.f32 %v2657, 0.01
        %v2674 = vmul.f32 %v2658, 0.01
        %v2675 = vmul.f32 %v2659, 0.01
        %v2676 = vsel %vm2660, %v2652, %v2668
        %v2677 = vsel %vm2661, %v2653, %v2669
        %v2678 = vsel %vm2662, %v2654, %v2670
        %v2679 = vsel %vm2663, %v2655, %v2671
        %v2680 = vsel %vm2664, %v2656, %v2672
        %v2681 = vsel %vm2665, %v2657, %v2673
        %v2682 = vsel %vm2666, %v2658, %v2674
        %v2683 = vsel %vm2667, %v2659, %v2675
        %v2692 = vlaneseq
        %v2693 = vshrl.u32 %v2692, 7
        %v2694 = vsub.s32 %v1597, %v2693
        %v2695 = vrot.slane %v2676, %v2694
        %v2696 = vlaneseq
        %v2697 = vshrl.u32 %v2696, 7
        %v2698 = vsub.s32 %v1597, %v2697
        %v2699 = vrot.slane %v2677, %v2698
        %v2700 = vlaneseq
        %v2701 = vshrl.u32 %v2700, 7
        %v2702 = vsub.s32 %v1597, %v2701
        %v2703 = vrot.slane %v2678, %v2702
        %v2704 = vlaneseq
        %v2705 = vshrl.u32 %v2704, 7
        %v2706 = vsub.s32 %v1597, %v2705
        %v2707 = vrot.slane %v2679, %v2706
        %v2708 = vlaneseq
        %v2709 = vshrl.u32 %v2708, 7
        %v2710 = vsub.s32 %v1597, %v2709
        %v2711 = vrot.slane %v2680, %v2710
        %v2712 = vlaneseq
        %v2713 = vshrl.u32 %v2712, 7
        %v2714 = vsub.s32 %v1597, %v2713
        %v2715 = vrot.slane %v2681, %v2714
        %v2716 = vlaneseq
        %v2717 = vshrl.u32 %v2716, 7
        %v2718 = vsub.s32 %v1597, %v2717
        %v2719 = vrot.slane %v2682, %v2718
        %v2720 = vlaneseq
        %v2721 = vshrl.u32 %v2720, 7
        %v2722 = vsub.s32 %v1597, %v2721
        %v2723 = vrot.slane %v2683, %v2722
        %v2724 = vsel %vm1630, %v2699, %v2695
        %v2725 = vsel %vm1632, %v2703, %v2724
        %v2726 = vsel %vm1634, %v2707, %v2725
        %v2727 = vsel %vm1636, %v2711, %v2726
        %v2728 = vsel %vm1638, %v2715, %v2727
        %v2729 = vsel %vm1640, %v2719, %v2728
        %v2730 = vsel %vm1642, %v2723, %v2729
        %v2732 = vsel %vm1025, %v2730, -inf
        %2733 = vmax.xlane.f32.xlu0 %v2732
        %v2734 = vpop.xlane.xlu0 %2733
        %v2736 = vlaneseq
        %v2737 = vshrl.u32 %v2736, 7
        %v2738 = vsub.s32 0, %v2737
        %v2739 = vrot.slane %v2734, %v2738
        %v2740 = vlaneseq
        %v2741 = vshrl.u32 %v2740, 7
        %v2742 = vsub.s32 1, %v2741
        %v2743 = vrot.slane %v2734, %v2742
        %v2744 = vlaneseq
        %v2745 = vshrl.u32 %v2744, 7
        %v2746 = vsub.s32 2, %v2745
        %v2747 = vrot.slane %v2734, %v2746
        %v2748 = vlaneseq
        %v2749 = vshrl.u32 %v2748, 7
        %v2750 = vsub.s32 3, %v2749
        %v2751 = vrot.slane %v2734, %v2750
        %v2752 = vlaneseq
        %v2753 = vshrl.u32 %v2752, 7
        %v2754 = vsub.s32 4, %v2753
        %v2755 = vrot.slane %v2734, %v2754
        %v2756 = vlaneseq
        %v2757 = vshrl.u32 %v2756, 7
        %v2758 = vsub.s32 5, %v2757
        %v2759 = vrot.slane %v2734, %v2758
        %v2760 = vlaneseq
        %v2761 = vshrl.u32 %v2760, 7
        %v2762 = vsub.s32 6, %v2761
        %v2763 = vrot.slane %v2734, %v2762
        %v2764 = vlaneseq
        %v2765 = vshrl.u32 %v2764, 7
        %v2766 = vsub.s32 7, %v2765
        %v2767 = vrot.slane %v2734, %v2766
        %v2776 = vsub.f32 %v2676, %v2739
        %v2777 = vsub.f32 %v2677, %v2743
        %v2778 = vsub.f32 %v2678, %v2747
        %v2779 = vsub.f32 %v2679, %v2751
        %v2780 = vsub.f32 %v2680, %v2755
        %v2781 = vsub.f32 %v2681, %v2759
        %v2782 = vsub.f32 %v2682, %v2763
        %v2783 = vsub.f32 %v2683, %v2767
        %v2784 = vmul.f32 %v2776, 1.442695
        %v2785 = vpow.pop %v2784
        %v2786 = vmul.f32 %v2777, 1.442695
        %v2787 = vpow.pop %v2786
        %v2788 = vmul.f32 %v2778, 1.442695
        %v2789 = vpow.pop %v2788
        %v2790 = vmul.f32 %v2779, 1.442695
        %v2791 = vpow.pop %v2790
        %v2792 = vmul.f32 %v2780, 1.442695
        %v2793 = vpow.pop %v2792
        %v2794 = vmul.f32 %v2781, 1.442695
        %v2795 = vpow.pop %v2794
        %v2796 = vmul.f32 %v2782, 1.442695
        %v2797 = vpow.pop %v2796
        %v2798 = vmul.f32 %v2783, 1.442695
        %v2799 = vpow.pop %v2798
        %2808 = vset.pattern.permute.xlu0 0
        %2809 = vperm.xlu0 %2808, %v2785
        %v2810 = vpop.permute.xlu0 %2809
        %2811 = vset.pattern.permute.xlu0 0
        %2812 = vperm.xlu0 %2811, %v2787
        %v2813 = vpop.permute.xlu0 %2812
        %2814 = vset.pattern.permute.xlu0 0
        %2815 = vperm.xlu0 %2814, %v2789
        %v2816 = vpop.permute.xlu0 %2815
        %2817 = vset.pattern.permute.xlu0 0
        %2818 = vperm.xlu0 %2817, %v2791
        %v2819 = vpop.permute.xlu0 %2818
        %2820 = vset.pattern.permute.xlu0 0
        %2821 = vperm.xlu0 %2820, %v2793
        %v2822 = vpop.permute.xlu0 %2821
        %2823 = vset.pattern.permute.xlu0 0
        %2824 = vperm.xlu0 %2823, %v2795
        %v2825 = vpop.permute.xlu0 %2824
        %2826 = vset.pattern.permute.xlu0 0
        %2827 = vperm.xlu0 %2826, %v2797
        %v2828 = vpop.permute.xlu0 %2827
        %2829 = vset.pattern.permute.xlu0 0
        %2830 = vperm.xlu0 %2829, %v2799
        %v2831 = vpop.permute.xlu0 %2830
        %v2832 = vlaneseq
        %v2833 = vshrl.u32 %v2832, 7
        %v2834 = vsub.s32 %v1597, %v2833
        %v2835 = vrot.slane %v2810, %v2834
        %v2836 = vlaneseq
        %v2837 = vshrl.u32 %v2836, 7
        %v2838 = vsub.s32 %v1597, %v2837
        %v2839 = vrot.slane %v2813, %v2838
        %v2840 = vlaneseq
        %v2841 = vshrl.u32 %v2840, 7
        %v2842 = vsub.s32 %v1597, %v2841
        %v2843 = vrot.slane %v2816, %v2842
        %v2844 = vlaneseq
        %v2845 = vshrl.u32 %v2844, 7
        %v2846 = vsub.s32 %v1597, %v2845
        %v2847 = vrot.slane %v2819, %v2846
        %v2848 = vlaneseq
        %v2849 = vshrl.u32 %v2848, 7
        %v2850 = vsub.s32 %v1597, %v2849
        %v2851 = vrot.slane %v2822, %v2850
        %v2852 = vlaneseq
        %v2853 = vshrl.u32 %v2852, 7
        %v2854 = vsub.s32 %v1597, %v2853
        %v2855 = vrot.slane %v2825, %v2854
        %v2856 = vlaneseq
        %v2857 = vshrl.u32 %v2856, 7
        %v2858 = vsub.s32 %v1597, %v2857
        %v2859 = vrot.slane %v2828, %v2858
        %v2860 = vlaneseq
        %v2861 = vshrl.u32 %v2860, 7
        %v2862 = vsub.s32 %v1597, %v2861
        %v2863 = vrot.slane %v2831, %v2862
        %v2864 = vsel %vm1630, %v2839, %v2835
        %v2865 = vsel %vm1632, %v2843, %v2864
        %v2866 = vsel %vm1634, %v2847, %v2865
        %v2867 = vsel %vm1636, %v2851, %v2866
        %v2868 = vsel %vm1638, %v2855, %v2867
        %v2869 = vsel %vm1640, %v2859, %v2868
        %v2870 = vsel %vm1642, %v2863, %v2869
        %v2872 = vsel %vm1025, %v2870, 0.0
        %2873 = vadd.xlane.f32.xlu0 %v2872
        %v2874 = vpop.xlane.xlu0 %2873
        %v2875 = vrcp.pop %v2874
        %v2877 = vlaneseq
        %v2878 = vshrl.u32 %v2877, 7
        %v2879 = vsub.s32 0, %v2878
        %v2880 = vrot.slane %v2875, %v2879
        %v2881 = vlaneseq
        %v2882 = vshrl.u32 %v2881, 7
        %v2883 = vsub.s32 1, %v2882
        %v2884 = vrot.slane %v2875, %v2883
        %v2885 = vlaneseq
        %v2886 = vshrl.u32 %v2885, 7
        %v2887 = vsub.s32 2, %v2886
        %v2888 = vrot.slane %v2875, %v2887
        %v2889 = vlaneseq
        %v2890 = vshrl.u32 %v2889, 7
        %v2891 = vsub.s32 3, %v2890
        %v2892 = vrot.slane %v2875, %v2891
        %v2893 = vlaneseq
        %v2894 = vshrl.u32 %v2893, 7
        %v2895 = vsub.s32 4, %v2894
        %v2896 = vrot.slane %v2875, %v2895
        %v2897 = vlaneseq
        %v2898 = vshrl.u32 %v2897, 7
        %v2899 = vsub.s32 5, %v2898
        %v2900 = vrot.slane %v2875, %v2899
        %v2901 = vlaneseq
        %v2902 = vshrl.u32 %v2901, 7
        %v2903 = vsub.s32 6, %v2902
        %v2904 = vrot.slane %v2875, %v2903
        %v2905 = vlaneseq
        %v2906 = vshrl.u32 %v2905, 7
        %v2907 = vsub.s32 7, %v2906
        %v2908 = vrot.slane %v2875, %v2907
        %v2917 = vmul.f32 %v2785, %v2880
        %v2918 = vmul.f32 %v2787, %v2884
        %v2919 = vmul.f32 %v2789, %v2888
        %v2920 = vmul.f32 %v2791, %v2892
        %v2921 = vmul.f32 %v2793, %v2896
        %v2922 = vmul.f32 %v2795, %v2900
        %v2923 = vmul.f32 %v2797, %v2904
        %v2924 = vmul.f32 %v2799, %v2908
        %v2925 = vmul.f32 %v2917, %v1498
        %v2926 = vmul.f32 %v2918, %v1505
        %v2927 = vmul.f32 %v2919, %v1512
        %v2928 = vmul.f32 %v2920, %v1519
        %v2929 = vmul.f32 %v2921, %v1526
        %v2930 = vmul.f32 %v2922, %v1533
        %v2931 = vmul.f32 %v2923, %v1540
        %v2932 = vmul.f32 %v2924, %v1547
        %2933 = vrot.lane.b32.xlu0 %v2368, 32
        %v2934 = vpop.permute.xlu0 %2933
        %v2936 = vsel %vm1169, %v1986, %v2934
        %2945 = vset.pattern.permute.xlu0 0
        %2946 = vperm.xlu0 %2945, %v2925
        %v2947 = vpop.permute.xlu0 %2946
        %2948 = vset.pattern.permute.xlu0 0
        %2949 = vperm.xlu0 %2948, %v2926
        %v2950 = vpop.permute.xlu0 %2949
        %2951 = vset.pattern.permute.xlu0 0
        %2952 = vperm.xlu0 %2951, %v2927
        %v2953 = vpop.permute.xlu0 %2952
        %2954 = vset.pattern.permute.xlu0 0
        %2955 = vperm.xlu0 %2954, %v2928
        %v2956 = vpop.permute.xlu0 %2955
        %2957 = vset.pattern.permute.xlu0 0
        %2958 = vperm.xlu0 %2957, %v2929
        %v2959 = vpop.permute.xlu0 %2958
        %2960 = vset.pattern.permute.xlu0 0
        %2961 = vperm.xlu0 %2960, %v2930
        %v2962 = vpop.permute.xlu0 %2961
        %2963 = vset.pattern.permute.xlu0 0
        %2964 = vperm.xlu0 %2963, %v2931
        %v2965 = vpop.permute.xlu0 %2964
        %2966 = vset.pattern.permute.xlu0 0
        %2967 = vperm.xlu0 %2966, %v2932
        %v2968 = vpop.permute.xlu0 %2967
        %v2969 = vlaneseq
        %v2970 = vshrl.u32 %v2969, 7
        %v2971 = vsub.s32 %v1597, %v2970
        %v2972 = vrot.slane %v2947, %v2971
        %v2973 = vlaneseq
        %v2974 = vshrl.u32 %v2973, 7
        %v2975 = vsub.s32 %v1597, %v2974
        %v2976 = vrot.slane %v2950, %v2975
        %v2977 = vlaneseq
        %v2978 = vshrl.u32 %v2977, 7
        %v2979 = vsub.s32 %v1597, %v2978
        %v2980 = vrot.slane %v2953, %v2979
        %v2981 = vlaneseq
        %v2982 = vshrl.u32 %v2981, 7
        %v2983 = vsub.s32 %v1597, %v2982
        %v2984 = vrot.slane %v2956, %v2983
        %v2985 = vlaneseq
        %v2986 = vshrl.u32 %v2985, 7
        %v2987 = vsub.s32 %v1597, %v2986
        %v2988 = vrot.slane %v2959, %v2987
        %v2989 = vlaneseq
        %v2990 = vshrl.u32 %v2989, 7
        %v2991 = vsub.s32 %v1597, %v2990
        %v2992 = vrot.slane %v2962, %v2991
        %v2993 = vlaneseq
        %v2994 = vshrl.u32 %v2993, 7
        %v2995 = vsub.s32 %v1597, %v2994
        %v2996 = vrot.slane %v2965, %v2995
        %v2997 = vlaneseq
        %v2998 = vshrl.u32 %v2997, 7
        %v2999 = vsub.s32 %v1597, %v2998
        %v3000 = vrot.slane %v2968, %v2999
        %v3001 = vsel %vm1630, %v2976, %v2972
        %v3002 = vsel %vm1632, %v2980, %v3001
        %v3003 = vsel %vm1634, %v2984, %v3002
        %v3004 = vsel %vm1636, %v2988, %v3003
        %v3005 = vsel %vm1638, %v2992, %v3004
        %v3006 = vsel %vm1640, %v2996, %v3005
        %v3007 = vsel %vm1642, %v3000, %v3006
        %3009 = vxpose.xlu0.b32.start [1/16] %v3007, 128
        %3010 = vxpose.xlu0.b32.cont [2/16] 0.0, 128
        %3011 = vxpose.xlu0.b32.cont [3/16] 0.0, 128
        %3012 = vxpose.xlu0.b32.cont [4/16] 0.0, 128
        %3013 = vxpose.xlu0.b32.cont [5/16] 0.0, 128
        %3014 = vxpose.xlu0.b32.cont [6/16] 0.0, 128
        %3015 = vxpose.xlu0.b32.cont [7/16] 0.0, 128
        %3016 = vxpose.xlu0.b32.cont [8/16] 0.0, 128
        %3017 = vxpose.xlu0.b32.cont [9/16] 0.0, 128
        %3018 = vxpose.xlu0.b32.cont [10/16] 0.0, 128
        %3019 = vxpose.xlu0.b32.cont [11/16] 0.0, 128
        %3020 = vxpose.xlu0.b32.cont [12/16] 0.0, 128
        %3021 = vxpose.xlu0.b32.cont [13/16] 0.0, 128
        %3022 = vxpose.xlu0.b32.cont [14/16] 0.0, 128
        %3023 = vxpose.xlu0.b32.cont [15/16] 0.0, 128
        %3024 = vxpose.xlu0.b32.end [16/16] 0.0, 128
        %v3025 = vpop.trf.xlu0
        %v3026 = vpop.trf.xlu0
        %v3027 = vpop.trf.xlu0
        %v3028 = vpop.trf.xlu0
        %v3029 = vpop.trf.xlu0
        %v3030 = vpop.trf.xlu0
        %v3031 = vpop.trf.xlu0
        %v3032 = vpop.trf.xlu0
        %v3033 = vpop.trf.xlu0
        %v3034 = vpop.trf.xlu0
        %v3035 = vpop.trf.xlu0
        %v3036 = vpop.trf.xlu0
        %v3037 = vpop.trf.xlu0
        %v3038 = vpop.trf.xlu0
        %v3039 = vpop.trf.xlu0
        %v3040 = vpop.trf.xlu0
        %v3042 = vsel %vm1025, %v3025, 0
        %3044 = vmatprep.subr.mxu0 0.0
        %3045 = vmatpush1.msra.mxu0 %v2936
        %3046 = vmatprep.subr.mxu0 0.0
        %3047 = vmatpush1.msra.mxu0 0.0
        %3048 = vmatprep.subr.mxu0 0.0
        %3049 = vmatpush1.msra.mxu0 0.0
        %3050 = vmatprep.subr.mxu0 0.0
        %3051 = vmatpush1.msra.mxu0 0.0
        %3052 = vmatprep.subr.mxu0 0.0
        %3053 = vmatpush1.msra.mxu0 0.0
        %3054 = vmatprep.subr.mxu0 0.0
        %3055 = vmatpush1.msra.mxu0 0.0
        %3056 = vmatprep.subr.mxu0 0.0
        %3057 = vmatpush1.msra.mxu0 0.0
        %3058 = vmatprep.subr.mxu0 0.0
        %3059 = vmatpush1.msra.mxu0 0.0
        %3060 = vmatprep.subr.mxu0 0.0
        %3061 = vmatpush1.msra.mxu0 0.0
        %3062 = vmatprep.subr.mxu0 0.0
        %3063 = vmatpush1.msra.mxu0 0.0
        %3064 = vmatprep.subr.mxu0 0.0
        %3065 = vmatpush1.msra.mxu0 0.0
        %3066 = vmatprep.subr.mxu0 0.0
        %3067 = vmatpush1.msra.mxu0 0.0
        %3068 = vmatprep.subr.mxu0 0.0
        %3069 = vmatpush1.msra.mxu0 0.0
        %3070 = vmatprep.subr.mxu0 0.0
        %3071 = vmatpush1.msra.mxu0 0.0
        %3072 = vmatprep.subr.mxu0 0.0
        %3073 = vmatpush1.msra.mxu0 0.0
        %3074 = vmatprep.subr.mxu0 0.0
        %3075 = vmatpush1.msra.mxu0 0.0
        %3076 = vmatprep.subr.mxu0 0.0
        %3077 = vmatpush1.msra.mxu0 0.0
        %3078 = vmatprep.subr.mxu0 0.0
        %3079 = vmatpush1.msra.mxu0 0.0
        %3080 = vmatprep.subr.mxu0 0.0
        %3081 = vmatpush1.msra.mxu0 0.0
        %3082 = vmatprep.subr.mxu0 0.0
        %3083 = vmatpush1.msra.mxu0 0.0
        %3084 = vmatprep.subr.mxu0 0.0
        %3085 = vmatpush1.msra.mxu0 0.0
        %3086 = vmatprep.subr.mxu0 0.0
        %3087 = vmatpush1.msra.mxu0 0.0
        %3088 = vmatprep.subr.mxu0 0.0
        %3089 = vmatpush1.msra.mxu0 0.0
        %3090 = vmatprep.subr.mxu0 0.0
        %3091 = vmatpush1.msra.mxu0 0.0
        %3092 = vmatprep.subr.mxu0 0.0
        %3093 = vmatpush1.msra.mxu0 0.0
        %3094 = vmatprep.subr.mxu0 0.0
        %3095 = vmatpush1.msra.mxu0 0.0
        %3096 = vmatprep.subr.mxu0 0.0
        %3097 = vmatpush1.msra.mxu0 0.0
        %3098 = vmatprep.subr.mxu0 0.0
        %3099 = vmatpush1.msra.mxu0 0.0
        %3100 = vmatprep.subr.mxu0 0.0
        %3101 = vmatpush1.msra.mxu0 0.0
        %3102 = vmatprep.subr.mxu0 0.0
        %3103 = vmatpush1.msra.mxu0 0.0
        %3104 = vmatprep.subr.mxu0 0.0
        %3105 = vmatpush1.msra.mxu0 0.0
        %3106 = vmatprep.subr.mxu0 0.0
        %3107 = vmatpush1.msra.mxu0 0.0
        %3108 = vmatprep.mubr.f32.mxu0 0.0
        %3109 = vmatmul.mubr.f32.gmra.mrb[0].mxu0 %v3042
        %v3110 = vpop.f32.mrb[0].mxu0
        %v3111 = vadd.f32 0.0, %v3110
        %v3112 = vpop.f32.mrb[0].mxu0
        %3113 = vdwg.mxu0
        %3114 = vrot.lane.b32.xlu0 %v1009, 64
        %v3115 = vpop.permute.xlu0 %3114
        %v3117 = vsel %vm1450, %v3111, %v3115
        %v3118 = vld [vmem:[%s37] sm:$0xff]
        %v3119 = vld [vmem:[%s37 + $0x8] sm:$0xff]
        %v3120 = vld [vmem:[%s37 + $0x10] sm:$0xff]
        %v3121 = vld [vmem:[%s37 + $0x18] sm:$0xff]
        %v3122 = vld [vmem:[%s37 + $0x20] sm:$0xff]
        %v3123 = vld [vmem:[%s37 + $0x28] sm:$0xff]
        %v3124 = vld [vmem:[%s37 + $0x30] sm:$0xff]
        %v3125 = vld [vmem:[%s37 + $0x38] sm:$0xff]
        %v3126 = vld [vmem:[%s37 + $0x40] sm:$0xff]
        %v3127 = vld [vmem:[%s37 + $0x48] sm:$0xff]
        %v3128 = vld [vmem:[%s37 + $0x50] sm:$0xff]
        %v3129 = vld [vmem:[%s37 + $0x58] sm:$0xff]
        %v3130 = vld [vmem:[%s39] sm:$0x1]
        %v3132 = vlaneseq
        %v3133 = vshrl.u32 %v3132, 7
        %v3134 = vsub.s32 0, %v3133
        %v3135 = vrot.slane %v3130, %v3134
        %vm3137 = vcmask 785408
        %v3139 = vsel %vm3137, %v3117, 0
        %3141 = vmatprep.subr.mxu0 0.0
        %3142 = vmatpush1.msra.mxu0 %v3118
        %3143 = vmatprep.subr.mxu0 0.0
        %3144 = vmatpush1.msra.mxu0 %v3119
        %3145 = vmatprep.subr.mxu0 0.0
        %3146 = vmatpush1.msra.mxu0 %v3120
        %3147 = vmatprep.subr.mxu0 0.0
        %3148 = vmatpush1.msra.mxu0 %v3121
        %3149 = vmatprep.subr.mxu0 0.0
        %3150 = vmatpush1.msra.mxu0 %v3122
        %3151 = vmatprep.subr.mxu0 0.0
        %3152 = vmatpush1.msra.mxu0 %v3123
        %3153 = vmatprep.subr.mxu0 0.0
        %3154 = vmatpush1.msra.mxu0 %v3124
        %3155 = vmatprep.subr.mxu0 0.0
        %3156 = vmatpush1.msra.mxu0 %v3125
        %3157 = vmatprep.subr.mxu0 0.0
        %3158 = vmatpush1.msra.mxu0 %v3126
        %3159 = vmatprep.subr.mxu0 0.0
        %3160 = vmatpush1.msra.mxu0 %v3127
        %3161 = vmatprep.subr.mxu0 0.0
        %3162 = vmatpush1.msra.mxu0 %v3128
        %3163 = vmatprep.subr.mxu0 0.0
        %3164 = vmatpush1.msra.mxu0 %v3129
        %3165 = vmatprep.subr.mxu0 0.0
        %3166 = vmatpush1.msra.mxu0 0.0
        %3167 = vmatprep.subr.mxu0 0.0
        %3168 = vmatpush1.msra.mxu0 0.0
        %3169 = vmatprep.subr.mxu0 0.0
        %3170 = vmatpush1.msra.mxu0 0.0
        %3171 = vmatprep.subr.mxu0 0.0
        %3172 = vmatpush1.msra.mxu0 0.0
        %3173 = vmatprep.subr.mxu0 0.0
        %3174 = vmatpush1.msra.mxu0 0.0
        %3175 = vmatprep.subr.mxu0 0.0
        %3176 = vmatpush1.msra.mxu0 0.0
        %3177 = vmatprep.subr.mxu0 0.0
        %3178 = vmatpush1.msra.mxu0 0.0
        %3179 = vmatprep.subr.mxu0 0.0
        %3180 = vmatpush1.msra.mxu0 0.0
        %3181 = vmatprep.subr.mxu0 0.0
        %3182 = vmatpush1.msra.mxu0 0.0
        %3183 = vmatprep.subr.mxu0 0.0
        %3184 = vmatpush1.msra.mxu0 0.0
        %3185 = vmatprep.subr.mxu0 0.0
        %3186 = vmatpush1.msra.mxu0 0.0
        %3187 = vmatprep.subr.mxu0 0.0
        %3188 = vmatpush1.msra.mxu0 0.0
        %3189 = vmatprep.subr.mxu0 0.0
        %3190 = vmatpush1.msra.mxu0 0.0
        %3191 = vmatprep.subr.mxu0 0.0
        %3192 = vmatpush1.msra.mxu0 0.0
        %3193 = vmatprep.subr.mxu0 0.0
        %3194 = vmatpush1.msra.mxu0 0.0
        %3195 = vmatprep.subr.mxu0 0.0
        %3196 = vmatpush1.msra.mxu0 0.0
        %3197 = vmatprep.subr.mxu0 0.0
        %3198 = vmatpush1.msra.mxu0 0.0
        %3199 = vmatprep.subr.mxu0 0.0
        %3200 = vmatpush1.msra.mxu0 0.0
        %3201 = vmatprep.subr.mxu0 0.0
        %3202 = vmatpush1.msra.mxu0 0.0
        %3203 = vmatprep.subr.mxu0 0.0
        %3204 = vmatpush1.msra.mxu0 0.0
        %3205 = vmatprep.mubr.f32.mxu0 0.0
        %3206 = vmatmul.mubr.f32.gmra.mrb[0].mxu0 %v3139
        %v3207 = vpop.f32.mrb[0].mxu0
        %v3208 = vadd.f32 %v3135, %v3207
        %v3209 = vpop.f32.mrb[0].mxu0
        %3210 = vdwg.mxu0
        %v3211 = vld [vmem:[%s41] sm:$0xff]
        %v3212 = vld [vmem:[%s41 + $0x8] sm:$0xff]
        %v3213 = vld [vmem:[%s41 + $0x10] sm:$0xff]
        %v3214 = vld [vmem:[%s41 + $0x18] sm:$0xff]
        %v3215 = vld [vmem:[%s41 + $0x20] sm:$0xff]
        %v3216 = vld [vmem:[%s41 + $0x28] sm:$0xff]
        %v3217 = vld [vmem:[%s41 + $0x30] sm:$0xff]
        %v3218 = vld [vmem:[%s41 + $0x38] sm:$0xff]
        %v3219 = vld [vmem:[%s41 + $0x40] sm:$0xff]
        %v3220 = vld [vmem:[%s41 + $0x48] sm:$0xff]
        %v3221 = vld [vmem:[%s41 + $0x50] sm:$0xff]
        %v3222 = vld [vmem:[%s41 + $0x58] sm:$0xff]
        %v3223 = vld [vmem:[%s43] sm:$0x1]
        %v3225 = vlaneseq
        %v3226 = vshrl.u32 %v3225, 7
        %v3227 = vsub.s32 0, %v3226
        %v3228 = vrot.slane %v3223, %v3227
        %v3231 = vsel %vm3137, %v1011, 0
        %3233 = vmatprep.subr.mxu0 0.0
        %3234 = vmatpush1.msra.mxu0 %v3211
        %3235 = vmatprep.subr.mxu0 0.0
        %3236 = vmatpush1.msra.mxu0 %v3212
        %3237 = vmatprep.subr.mxu0 0.0
        %3238 = vmatpush1.msra.mxu0 %v3213
        %3239 = vmatprep.subr.mxu0 0.0
        %3240 = vmatpush1.msra.mxu0 %v3214
        %3241 = vmatprep.subr.mxu0 0.0
        %3242 = vmatpush1.msra.mxu0 %v3215
        %3243 = vmatprep.subr.mxu0 0.0
        %3244 = vmatpush1.msra.mxu0 %v3216
        %3245 = vmatprep.subr.mxu0 0.0
        %3246 = vmatpush1.msra.mxu0 %v3217
        %3247 = vmatprep.subr.mxu0 0.0
        %3248 = vmatpush1.msra.mxu0 %v3218
        %3249 = vmatprep.subr.mxu0 0.0
        %3250 = vmatpush1.msra.mxu0 %v3219
        %3251 = vmatprep.subr.mxu0 0.0
        %3252 = vmatpush1.msra.mxu0 %v3220
        %3253 = vmatprep.subr.mxu0 0.0
        %3254 = vmatpush1.msra.mxu0 %v3221
        %3255 = vmatprep.subr.mxu0 0.0
        %3256 = vmatpush1.msra.mxu0 %v3222
        %3257 = vmatprep.subr.mxu0 0.0
        %3258 = vmatpush1.msra.mxu0 0.0
        %3259 = vmatprep.subr.mxu0 0.0
        %3260 = vmatpush1.msra.mxu0 0.0
        %3261 = vmatprep.subr.mxu0 0.0
        %3262 = vmatpush1.msra.mxu0 0.0
        %3263 = vmatprep.subr.mxu0 0.0
        %3264 = vmatpush1.msra.mxu0 0.0
        %3265 = vmatprep.subr.mxu0 0.0
        %3266 = vmatpush1.msra.mxu0 0.0
        %3267 = vmatprep.subr.mxu0 0.0
        %3268 = vmatpush1.msra.mxu0 0.0
        %3269 = vmatprep.subr.mxu0 0.0
        %3270 = vmatpush1.msra.mxu0 0.0
        %3271 = vmatprep.subr.mxu0 0.0
        %3272 = vmatpush1.msra.mxu0 0.0
        %3273 = vmatprep.subr.mxu0 0.0
        %3274 = vmatpush1.msra.mxu0 0.0
        %3275 = vmatprep.subr.mxu0 0.0
        %3276 = vmatpush1.msra.mxu0 0.0
        %3277 = vmatprep.subr.mxu0 0.0
        %3278 = vmatpush1.msra.mxu0 0.0
        %3279 = vmatprep.subr.mxu0 0.0
        %3280 = vmatpush1.msra.mxu0 0.0
        %3281 = vmatprep.subr.mxu0 0.0
        %3282 = vmatpush1.msra.mxu0 0.0
        %3283 = vmatprep.subr.mxu0 0.0
        %3284 = vmatpush1.msra.mxu0 0.0
        %3285 = vmatprep.subr.mxu0 0.0
        %3286 = vmatpush1.msra.mxu0 0.0
        %3287 = vmatprep.subr.mxu0 0.0
        %3288 = vmatpush1.msra.mxu0 0.0
        %3289 = vmatprep.subr.mxu0 0.0
        %3290 = vmatpush1.msra.mxu0 0.0
        %3291 = vmatprep.subr.mxu0 0.0
        %3292 = vmatpush1.msra.mxu0 0.0
        %3293 = vmatprep.subr.mxu0 0.0
        %3294 = vmatpush1.msra.mxu0 0.0
        %3295 = vmatprep.subr.mxu0 0.0
        %3296 = vmatpush1.msra.mxu0 0.0
        %3297 = vmatprep.mubr.f32.mxu0 0.0
        %3298 = vmatmul.mubr.f32.gmra.mrb[0].mxu0 %v3231
        %v3299 = vpop.f32.mrb[0].mxu0
        %v3300 = vadd.f32 %v3228, %v3299
        %v3301 = vpop.f32.mrb[0].mxu0
        %3302 = vdwg.mxu0
        %v3304 = vsel %vm1025, %v3208, 0
        %v3307 = vsel %vm1025, %v3300, 0
        %3309 = vmatprep.subr.mxu0 0.0
        %3310 = vmatpush1.xpose.msra.mxu0 %v3307
        %3311 = vmatprep.subr.mxu0 0.0
        %3312 = vmatpush1.xpose.msra.mxu0 0.0
        %3313 = vmatprep.subr.mxu0 0.0
        %3314 = vmatpush1.xpose.msra.mxu0 0.0
        %3315 = vmatprep.subr.mxu0 0.0
        %3316 = vmatpush1.xpose.msra.mxu0 0.0
        %3317 = vmatprep.subr.mxu0 0.0
        %3318 = vmatpush1.xpose.msra.mxu0 0.0
        %3319 = vmatprep.subr.mxu0 0.0
        %3320 = vmatpush1.xpose.msra.mxu0 0.0
        %3321 = vmatprep.subr.mxu0 0.0
        %3322 = vmatpush1.xpose.msra.mxu0 0.0
        %3323 = vmatprep.subr.mxu0 0.0
        %3324 = vmatpush1.xpose.msra.mxu0 0.0
        %3325 = vmatprep.subr.mxu0 0.0
        %3326 = vmatpush1.xpose.msra.mxu0 0.0
        %3327 = vmatprep.subr.mxu0 0.0
        %3328 = vmatpush1.xpose.msra.mxu0 0.0
        %3329 = vmatprep.subr.mxu0 0.0
        %3330 = vmatpush1.xpose.msra.mxu0 0.0
        %3331 = vmatprep.subr.mxu0 0.0
        %3332 = vmatpush1.xpose.msra.mxu0 0.0
        %3333 = vmatprep.subr.mxu0 0.0
        %3334 = vmatpush1.xpose.msra.mxu0 0.0
        %3335 = vmatprep.subr.mxu0 0.0
        %3336 = vmatpush1.xpose.msra.mxu0 0.0
        %3337 = vmatprep.subr.mxu0 0.0
        %3338 = vmatpush1.xpose.msra.mxu0 0.0
        %3339 = vmatprep.subr.mxu0 0.0
        %3340 = vmatpush1.xpose.msra.mxu0 0.0
        %3341 = vmatprep.subr.mxu0 0.0
        %3342 = vmatpush1.xpose.msra.mxu0 0.0
        %3343 = vmatprep.subr.mxu0 0.0
        %3344 = vmatpush1.xpose.msra.mxu0 0.0
        %3345 = vmatprep.subr.mxu0 0.0
        %3346 = vmatpush1.xpose.msra.mxu0 0.0
        %3347 = vmatprep.subr.mxu0 0.0
        %3348 = vmatpush1.xpose.msra.mxu0 0.0
        %3349 = vmatprep.subr.mxu0 0.0
        %3350 = vmatpush1.xpose.msra.mxu0 0.0
        %3351 = vmatprep.subr.mxu0 0.0
        %3352 = vmatpush1.xpose.msra.mxu0 0.0
        %3353 = vmatprep.subr.mxu0 0.0
        %3354 = vmatpush1.xpose.msra.mxu0 0.0
        %3355 = vmatprep.subr.mxu0 0.0
        %3356 = vmatpush1.xpose.msra.mxu0 0.0
        %3357 = vmatprep.subr.mxu0 0.0
        %3358 = vmatpush1.xpose.msra.mxu0 0.0
        %3359 = vmatprep.subr.mxu0 0.0
        %3360 = vmatpush1.xpose.msra.mxu0 0.0
        %3361 = vmatprep.subr.mxu0 0.0
        %3362 = vmatpush1.xpose.msra.mxu0 0.0
        %3363 = vmatprep.subr.mxu0 0.0
        %3364 = vmatpush1.xpose.msra.mxu0 0.0
        %3365 = vmatprep.subr.mxu0 0.0
        %3366 = vmatpush1.xpose.msra.mxu0 0.0
        %3367 = vmatprep.subr.mxu0 0.0
        %3368 = vmatpush1.xpose.msra.mxu0 0.0
        %3369 = vmatprep.subr.mxu0 0.0
        %3370 = vmatpush1.xpose.msra.mxu0 0.0
        %3371 = vmatprep.subr.mxu0 0.0
        %3372 = vmatpush1.xpose.msra.mxu0 0.0
        %3373 = vmatprep.mubr.f32.mxu0 0.0
        %3374 = vmatmul.mubr.f32.gmra.mrb[0].mxu0 %v3304
        %v3375 = vpop.f32.mrb[0].mxu0
        %v3376 = vadd.f32 0.0, %v3375
        %v3377 = vpop.f32.mrb[0].mxu0
        %3378 = vdwg.mxu0
        %v3379 = vmul.f32 %v3376, 0.35355338
        %v3380 = vsel %vm1025, %v3379, -inf
        %3381 = vmax.xlane.f32.xlu0 %v3380
        %v3382 = vpop.xlane.xlu0 %3381
        %v3383 = vsub.f32 %v3379, %v3382
        %v3384 = vmul.f32 %v3383, 1.442695
        %v3385 = vpow.pop %v3384
        %v3386 = vsel %vm1025, %v3385, 0.0
        %3387 = vadd.xlane.f32.xlu0 %v3386
        %v3388 = vpop.xlane.xlu0 %3387
        %v3389 = vrcp.pop %v3388
        %v3390 = vmul.f32 %v3385, %v3389
        %3391 = vrot.lane.b32.xlu0 %v3300, 96
        %v3392 = vpop.permute.xlu0 %3391
        %v3395 = vsel %vm1025, %v3390, 0
        %3397 = vmatprep.subr.mxu0 0.0
        %3398 = vmatpush1.msra.mxu0 %v3392
        %3399 = vmatprep.subr.mxu0 0.0
        %3400 = vmatpush1.msra.mxu0 0.0
        %3401 = vmatprep.subr.mxu0 0.0
        %3402 = vmatpush1.msra.mxu0 0.0
        %3403 = vmatprep.subr.mxu0 0.0
        %3404 = vmatpush1.msra.mxu0 0.0
        %3405 = vmatprep.subr.mxu0 0.0
        %3406 = vmatpush1.msra.mxu0 0.0
        %3407 = vmatprep.subr.mxu0 0.0
        %3408 = vmatpush1.msra.mxu0 0.0
        %3409 = vmatprep.subr.mxu0 0.0
        %3410 = vmatpush1.msra.mxu0 0.0
        %3411 = vmatprep.subr.mxu0 0.0
        %3412 = vmatpush1.msra.mxu0 0.0
        %3413 = vmatprep.subr.mxu0 0.0
        %3414 = vmatpush1.msra.mxu0 0.0
        %3415 = vmatprep.subr.mxu0 0.0
        %3416 = vmatpush1.msra.mxu0 0.0
        %3417 = vmatprep.subr.mxu0 0.0
        %3418 = vmatpush1.msra.mxu0 0.0
        %3419 = vmatprep.subr.mxu0 0.0
        %3420 = vmatpush1.msra.mxu0 0.0
        %3421 = vmatprep.subr.mxu0 0.0
        %3422 = vmatpush1.msra.mxu0 0.0
        %3423 = vmatprep.subr.mxu0 0.0
        %3424 = vmatpush1.msra.mxu0 0.0
        %3425 = vmatprep.subr.mxu0 0.0
        %3426 = vmatpush1.msra.mxu0 0.0
        %3427 = vmatprep.subr.mxu0 0.0
        %3428 = vmatpush1.msra.mxu0 0.0
        %3429 = vmatprep.subr.mxu0 0.0
        %3430 = vmatpush1.msra.mxu0 0.0
        %3431 = vmatprep.subr.mxu0 0.0
        %3432 = vmatpush1.msra.mxu0 0.0
        %3433 = vmatprep.subr.mxu0 0.0
        %3434 = vmatpush1.msra.mxu0 0.0
        %3435 = vmatprep.subr.mxu0 0.0
        %3436 = vmatpush1.msra.mxu0 0.0
        %3437 = vmatprep.subr.mxu0 0.0
        %3438 = vmatpush1.msra.mxu0 0.0
        %3439 = vmatprep.subr.mxu0 0.0
        %3440 = vmatpush1.msra.mxu0 0.0
        %3441 = vmatprep.subr.mxu0 0.0
        %3442 = vmatpush1.msra.mxu0 0.0
        %3443 = vmatprep.subr.mxu0 0.0
        %3444 = vmatpush1.msra.mxu0 0.0
        %3445 = vmatprep.subr.mxu0 0.0
        %3446 = vmatpush1.msra.mxu0 0.0
        %3447 = vmatprep.subr.mxu0 0.0
        %3448 = vmatpush1.msra.mxu0 0.0
        %3449 = vmatprep.subr.mxu0 0.0
        %3450 = vmatpush1.msra.mxu0 0.0
        %3451 = vmatprep.subr.mxu0 0.0
        %3452 = vmatpush1.msra.mxu0 0.0
        %3453 = vmatprep.subr.mxu0 0.0
        %3454 = vmatpush1.msra.mxu0 0.0
        %3455 = vmatprep.subr.mxu0 0.0
        %3456 = vmatpush1.msra.mxu0 0.0
        %3457 = vmatprep.subr.mxu0 0.0
        %3458 = vmatpush1.msra.mxu0 0.0
        %3459 = vmatprep.subr.mxu0 0.0
        %3460 = vmatpush1.msra.mxu0 0.0
        %3461 = vmatprep.mubr.f32.mxu0 0.0
        %3462 = vmatmul.mubr.f32.gmra.mrb[0].mxu0 %v3395
        %v3463 = vpop.f32.mrb[0].mxu0
        %v3464 = vadd.f32 0.0, %v3463
        %v3465 = vpop.f32.mrb[0].mxu0
        %3466 = vdwg.mxu0
        %3467 = vst.msk [vmem:[#allocation2] sm:$0xff] %vm1025, %v3464
        %3468 = vrot.lane.b32.xlu0 %v3208, 120
        %v3469 = vpop.permute.xlu0 %3468
        %3470 = vrot.lane.b32.xlu0 %v3300, 120
        %v3471 = vpop.permute.xlu0 %3470
        %v3472 = vsel %vm1025, %v3469, 0
        %v3474 = vsel %vm1025, %v3471, 0
        %3476 = vmatprep.subr.mxu0 0.0
        %3477 = vmatpush1.xpose.msra.mxu0 %v3474
        %3478 = vmatprep.subr.mxu0 0.0
        %3479 = vmatpush1.xpose.msra.mxu0 0.0
        %3480 = vmatprep.subr.mxu0 0.0
        %3481 = vmatpush1.xpose.msra.mxu0 0.0
        %3482 = vmatprep.subr.mxu0 0.0
        %3483 = vmatpush1.xpose.msra.mxu0 0.0
        %3484 = vmatprep.subr.mxu0 0.0
        %3485 = vmatpush1.xpose.msra.mxu0 0.0
        %3486 = vmatprep.subr.mxu0 0.0
        %3487 = vmatpush1.xpose.msra.mxu0 0.0
        %3488 = vmatprep.subr.mxu0 0.0
        %3489 = vmatpush1.xpose.msra.mxu0 0.0
        %3490 = vmatprep.subr.mxu0 0.0
        %3491 = vmatpush1.xpose.msra.mxu0 0.0
        %3492 = vmatprep.subr.mxu0 0.0
        %3493 = vmatpush1.xpose.msra.mxu0 0.0
        %3494 = vmatprep.subr.mxu0 0.0
        %3495 = vmatpush1.xpose.msra.mxu0 0.0
        %3496 = vmatprep.subr.mxu0 0.0
        %3497 = vmatpush1.xpose.msra.mxu0 0.0
        %3498 = vmatprep.subr.mxu0 0.0
        %3499 = vmatpush1.xpose.msra.mxu0 0.0
        %3500 = vmatprep.subr.mxu0 0.0
        %3501 = vmatpush1.xpose.msra.mxu0 0.0
        %3502 = vmatprep.subr.mxu0 0.0
        %3503 = vmatpush1.xpose.msra.mxu0 0.0
        %3504 = vmatprep.subr.mxu0 0.0
        %3505 = vmatpush1.xpose.msra.mxu0 0.0
        %3506 = vmatprep.subr.mxu0 0.0
        %3507 = vmatpush1.xpose.msra.mxu0 0.0
        %3508 = vmatprep.subr.mxu0 0.0
        %3509 = vmatpush1.xpose.msra.mxu0 0.0
        %3510 = vmatprep.subr.mxu0 0.0
        %3511 = vmatpush1.xpose.msra.mxu0 0.0
        %3512 = vmatprep.subr.mxu0 0.0
        %3513 = vmatpush1.xpose.msra.mxu0 0.0
        %3514 = vmatprep.subr.mxu0 0.0
        %3515 = vmatpush1.xpose.msra.mxu0 0.0
        %3516 = vmatprep.subr.mxu0 0.0
        %3517 = vmatpush1.xpose.msra.mxu0 0.0
        %3518 = vmatprep.subr.mxu0 0.0
        %3519 = vmatpush1.xpose.msra.mxu0 0.0
        %3520 = vmatprep.subr.mxu0 0.0
        %3521 = vmatpush1.xpose.msra.mxu0 0.0
        %3522 = vmatprep.subr.mxu0 0.0
        %3523 = vmatpush1.xpose.msra.mxu0 0.0
        %3524 = vmatprep.subr.mxu0 0.0
        %3525 = vmatpush1.xpose.msra.mxu0 0.0
        %3526 = vmatprep.subr.mxu0 0.0
        %3527 = vmatpush1.xpose.msra.mxu0 0.0
        %3528 = vmatprep.subr.mxu0 0.0
        %3529 = vmatpush1.xpose.msra.mxu0 0.0
        %3530 = vmatprep.subr.mxu0 0.0
        %3531 = vmatpush1.xpose.msra.mxu0 0.0
        %3532 = vmatprep.subr.mxu0 0.0
        %3533 = vmatpush1.xpose.msra.mxu0 0.0
        %3534 = vmatprep.subr.mxu0 0.0
        %3535 = vmatpush1.xpose.msra.mxu0 0.0
        %3536 = vmatprep.subr.mxu0 0.0
        %3537 = vmatpush1.xpose.msra.mxu0 0.0
        %3538 = vmatprep.subr.mxu0 0.0
        %3539 = vmatpush1.xpose.msra.mxu0 0.0
        %3540 = vmatprep.mubr.f32.mxu0 0.0
        %3541 = vmatmul.mubr.f32.gmra.mrb[0].mxu0 %v3472
        %v3542 = vpop.f32.mrb[0].mxu0
        %v3543 = vadd.f32 0.0, %v3542
        %v3544 = vpop.f32.mrb[0].mxu0
        %3545 = vdwg.mxu0
        %v3546 = vmul.f32 %v3543, 0.35355338
        %v3547 = vsel %vm1025, %v3546, -inf
        %3548 = vmax.xlane.f32.xlu0 %v3547
        %v3549 = vpop.xlane.xlu0 %3548
        %v3550 = vsub.f32 %v3546, %v3549
        %v3551 = vmul.f32 %v3550, 1.442695
        %v3552 = vpow.pop %v3551
        %v3553 = vsel %vm1025, %v3552, 0.0
        %3554 = vadd.xlane.f32.xlu0 %v3553
        %v3555 = vpop.xlane.xlu0 %3554
        %v3556 = vrcp.pop %v3555
        %v3557 = vmul.f32 %v3552, %v3556
        %3558 = vrot.lane.b32.xlu0 %v3300, 88
        %v3559 = vpop.permute.xlu0 %3558
        %v3562 = vsel %vm1025, %v3557, 0
        %3564 = vmatprep.subr.mxu0 0.0
        %3565 = vmatpush1.msra.mxu0 %v3559
        %3566 = vmatprep.subr.mxu0 0.0
        %3567 = vmatpush1.msra.mxu0 0.0
        %3568 = vmatprep.subr.mxu0 0.0
        %3569 = vmatpush1.msra.mxu0 0.0
        %3570 = vmatprep.subr.mxu0 0.0
        %3571 = vmatpush1.msra.mxu0 0.0
        %3572 = vmatprep.subr.mxu0 0.0
        %3573 = vmatpush1.msra.mxu0 0.0
        %3574 = vmatprep.subr.mxu0 0.0
        %3575 = vmatpush1.msra.mxu0 0.0
        %3576 = vmatprep.subr.mxu0 0.0
        %3577 = vmatpush1.msra.mxu0 0.0
        %3578 = vmatprep.subr.mxu0 0.0
        %3579 = vmatpush1.msra.mxu0 0.0
        %3580 = vmatprep.subr.mxu0 0.0
        %3581 = vmatpush1.msra.mxu0 0.0
        %3582 = vmatprep.subr.mxu0 0.0
        %3583 = vmatpush1.msra.mxu0 0.0
        %3584 = vmatprep.subr.mxu0 0.0
        %3585 = vmatpush1.msra.mxu0 0.0
        %3586 = vmatprep.subr.mxu0 0.0
        %3587 = vmatpush1.msra.mxu0 0.0
        %3588 = vmatprep.subr.mxu0 0.0
        %3589 = vmatpush1.msra.mxu0 0.0
        %3590 = vmatprep.subr.mxu0 0.0
        %3591 = vmatpush1.msra.mxu0 0.0
        %3592 = vmatprep.subr.mxu0 0.0
        %3593 = vmatpush1.msra.mxu0 0.0
        %3594 = vmatprep.subr.mxu0 0.0
        %3595 = vmatpush1.msra.mxu0 0.0
        %3596 = vmatprep.subr.mxu0 0.0
        %3597 = vmatpush1.msra.mxu0 0.0
        %3598 = vmatprep.subr.mxu0 0.0
        %3599 = vmatpush1.msra.mxu0 0.0
        %3600 = vmatprep.subr.mxu0 0.0
        %3601 = vmatpush1.msra.mxu0 0.0
        %3602 = vmatprep.subr.mxu0 0.0
        %3603 = vmatpush1.msra.mxu0 0.0
        %3604 = vmatprep.subr.mxu0 0.0
        %3605 = vmatpush1.msra.mxu0 0.0
        %3606 = vmatprep.subr.mxu0 0.0
        %3607 = vmatpush1.msra.mxu0 0.0
        %3608 = vmatprep.subr.mxu0 0.0
        %3609 = vmatpush1.msra.mxu0 0.0
        %3610 = vmatprep.subr.mxu0 0.0
        %3611 = vmatpush1.msra.mxu0 0.0
        %3612 = vmatprep.subr.mxu0 0.0
        %3613 = vmatpush1.msra.mxu0 0.0
        %3614 = vmatprep.subr.mxu0 0.0
        %3615 = vmatpush1.msra.mxu0 0.0
        %3616 = vmatprep.subr.mxu0 0.0
        %3617 = vmatpush1.msra.mxu0 0.0
        %3618 = vmatprep.subr.mxu0 0.0
        %3619 = vmatpush1.msra.mxu0 0.0
        %3620 = vmatprep.subr.mxu0 0.0
        %3621 = vmatpush1.msra.mxu0 0.0
        %3622 = vmatprep.subr.mxu0 0.0
        %3623 = vmatpush1.msra.mxu0 0.0
        %3624 = vmatprep.subr.mxu0 0.0
        %3625 = vmatpush1.msra.mxu0 0.0
        %3626 = vmatprep.subr.mxu0 0.0
        %3627 = vmatpush1.msra.mxu0 0.0
        %3628 = vmatprep.mubr.f32.mxu0 0.0
        %3629 = vmatmul.mubr.f32.gmra.mrb[0].mxu0 %v3562
        %v3630 = vpop.f32.mrb[0].mxu0
        %v3631 = vadd.f32 0.0, %v3630
        %v3632 = vpop.f32.mrb[0].mxu0
        %3633 = vdwg.mxu0
        %3635 = vrot.lane.b32.xlu0 %v3631, 8
        %v3636 = vpop.permute.xlu0 %3635
        %vm3638 = vcmask 130112
        %3639 = vst.msk [vmem:[#allocation2] sm:$0xff] %vm3638, %v3636
        %3640 = vrot.lane.b32.xlu0 %v3208, 112
        %v3641 = vpop.permute.xlu0 %3640
        %3642 = vrot.lane.b32.xlu0 %v3300, 112
        %v3643 = vpop.permute.xlu0 %3642
        %v3644 = vsel %vm1025, %v3641, 0
        %v3646 = vsel %vm1025, %v3643, 0
        %3648 = vmatprep.subr.mxu0 0.0
        %3649 = vmatpush1.xpose.msra.mxu0 %v3646
        %3650 = vmatprep.subr.mxu0 0.0
        %3651 = vmatpush1.xpose.msra.mxu0 0.0
        %3652 = vmatprep.subr.mxu0 0.0
        %3653 = vmatpush1.xpose.msra.mxu0 0.0
        %3654 = vmatprep.subr.mxu0 0.0
        %3655 = vmatpush1.xpose.msra.mxu0 0.0
        %3656 = vmatprep.subr.mxu0 0.0
        %3657 = vmatpush1.xpose.msra.mxu0 0.0
        %3658 = vmatprep.subr.mxu0 0.0
        %3659 = vmatpush1.xpose.msra.mxu0 0.0
        %3660 = vmatprep.subr.mxu0 0.0
        %3661 = vmatpush1.xpose.msra.mxu0 0.0
        %3662 = vmatprep.subr.mxu0 0.0
        %3663 = vmatpush1.xpose.msra.mxu0 0.0
        %3664 = vmatprep.subr.mxu0 0.0
        %3665 = vmatpush1.xpose.msra.mxu0 0.0
        %3666 = vmatprep.subr.mxu0 0.0
        %3667 = vmatpush1.xpose.msra.mxu0 0.0
        %3668 = vmatprep.subr.mxu0 0.0
        %3669 = vmatpush1.xpose.msra.mxu0 0.0
        %3670 = vmatprep.subr.mxu0 0.0
        %3671 = vmatpush1.xpose.msra.mxu0 0.0
        %3672 = vmatprep.subr.mxu0 0.0
        %3673 = vmatpush1.xpose.msra.mxu0 0.0
        %3674 = vmatprep.subr.mxu0 0.0
        %3675 = vmatpush1.xpose.msra.mxu0 0.0
        %3676 = vmatprep.subr.mxu0 0.0
        %3677 = vmatpush1.xpose.msra.mxu0 0.0
        %3678 = vmatprep.subr.mxu0 0.0
        %3679 = vmatpush1.xpose.msra.mxu0 0.0
        %3680 = vmatprep.subr.mxu0 0.0
        %3681 = vmatpush1.xpose.msra.mxu0 0.0
        %3682 = vmatprep.subr.mxu0 0.0
        %3683 = vmatpush1.xpose.msra.mxu0 0.0
        %3684 = vmatprep.subr.mxu0 0.0
        %3685 = vmatpush1.xpose.msra.mxu0 0.0
        %3686 = vmatprep.subr.mxu0 0.0
        %3687 = vmatpush1.xpose.msra.mxu0 0.0
        %3688 = vmatprep.subr.mxu0 0.0
        %3689 = vmatpush1.xpose.msra.mxu0 0.0
        %3690 = vmatprep.subr.mxu0 0.0
        %3691 = vmatpush1.xpose.msra.mxu0 0.0
        %3692 = vmatprep.subr.mxu0 0.0
        %3693 = vmatpush1.xpose.msra.mxu0 0.0
        %3694 = vmatprep.subr.mxu0 0.0
        %3695 = vmatpush1.xpose.msra.mxu0 0.0
        %3696 = vmatprep.subr.mxu0 0.0
        %3697 = vmatpush1.xpose.msra.mxu0 0.0
        %3698 = vmatprep.subr.mxu0 0.0
        %3699 = vmatpush1.xpose.msra.mxu0 0.0
        %3700 = vmatprep.subr.mxu0 0.0
        %3701 = vmatpush1.xpose.msra.mxu0 0.0
        %3702 = vmatprep.subr.mxu0 0.0
        %3703 = vmatpush1.xpose.msra.mxu0 0.0
        %3704 = vmatprep.subr.mxu0 0.0
        %3705 = vmatpush1.xpose.msra.mxu0 0.0
        %3706 = vmatprep.subr.mxu0 0.0
        %3707 = vmatpush1.xpose.msra.mxu0 0.0
        %3708 = vmatprep.subr.mxu0 0.0
        %3709 = vmatpush1.xpose.msra.mxu0 0.0
        %3710 = vmatprep.subr.mxu0 0.0
        %3711 = vmatpush1.xpose.msra.mxu0 0.0
        %3712 = vmatprep.mubr.f32.mxu0 0.0
        %3713 = vmatmul.mubr.f32.gmra.mrb[0].mxu0 %v3644
        %v3714 = vpop.f32.mrb[0].mxu0
        %v3715 = vadd.f32 0.0, %v3714
        %v3716 = vpop.f32.mrb[0].mxu0
        %3717 = vdwg.mxu0
        %v3718 = vmul.f32 %v3715, 0.35355338
        %v3719 = vsel %vm1025, %v3718, -inf
        %3720 = vmax.xlane.f32.xlu0 %v3719
        %v3721 = vpop.xlane.xlu0 %3720
        %v3722 = vsub.f32 %v3718, %v3721
        %v3723 = vmul.f32 %v3722, 1.442695
        %v3724 = vpow.pop %v3723
        %v3725 = vsel %vm1025, %v3724, 0.0
        %3726 = vadd.xlane.f32.xlu0 %v3725
        %v3727 = vpop.xlane.xlu0 %3726
        %v3728 = vrcp.pop %v3727
        %v3729 = vmul.f32 %v3724, %v3728
        %3730 = vrot.lane.b32.xlu0 %v3300, 80
        %v3731 = vpop.permute.xlu0 %3730
        %v3734 = vsel %vm1025, %v3729, 0
        %3736 = vmatprep.subr.mxu0 0.0
        %3737 = vmatpush1.msra.mxu0 %v3731
        %3738 = vmatprep.subr.mxu0 0.0
        %3739 = vmatpush1.msra.mxu0 0.0
        %3740 = vmatprep.subr.mxu0 0.0
        %3741 = vmatpush1.msra.mxu0 0.0
        %3742 = vmatprep.subr.mxu0 0.0
        %3743 = vmatpush1.msra.mxu0 0.0
        %3744 = vmatprep.subr.mxu0 0.0
        %3745 = vmatpush1.msra.mxu0 0.0
        %3746 = vmatprep.subr.mxu0 0.0
        %3747 = vmatpush1.msra.mxu0 0.0
        %3748 = vmatprep.subr.mxu0 0.0
        %3749 = vmatpush1.msra.mxu0 0.0
        %3750 = vmatprep.subr.mxu0 0.0
        %3751 = vmatpush1.msra.mxu0 0.0
        %3752 = vmatprep.subr.mxu0 0.0
        %3753 = vmatpush1.msra.mxu0 0.0
        %3754 = vmatprep.subr.mxu0 0.0
        %3755 = vmatpush1.msra.mxu0 0.0
        %3756 = vmatprep.subr.mxu0 0.0
        %3757 = vmatpush1.msra.mxu0 0.0
        %3758 = vmatprep.subr.mxu0 0.0
        %3759 = vmatpush1.msra.mxu0 0.0
        %3760 = vmatprep.subr.mxu0 0.0
        %3761 = vmatpush1.msra.mxu0 0.0
        %3762 = vmatprep.subr.mxu0 0.0
        %3763 = vmatpush1.msra.mxu0 0.0
        %3764 = vmatprep.subr.mxu0 0.0
        %3765 = vmatpush1.msra.mxu0 0.0
        %3766 = vmatprep.subr.mxu0 0.0
        %3767 = vmatpush1.msra.mxu0 0.0
        %3768 = vmatprep.subr.mxu0 0.0
        %3769 = vmatpush1.msra.mxu0 0.0
        %3770 = vmatprep.subr.mxu0 0.0
        %3771 = vmatpush1.msra.mxu0 0.0
        %3772 = vmatprep.subr.mxu0 0.0
        %3773 = vmatpush1.msra.mxu0 0.0
        %3774 = vmatprep.subr.mxu0 0.0
        %3775 = vmatpush1.msra.mxu0 0.0
        %3776 = vmatprep.subr.mxu0 0.0
        %3777 = vmatpush1.msra.mxu0 0.0
        %3778 = vmatprep.subr.mxu0 0.0
        %3779 = vmatpush1.msra.mxu0 0.0
        %3780 = vmatprep.subr.mxu0 0.0
        %3781 = vmatpush1.msra.mxu0 0.0
        %3782 = vmatprep.subr.mxu0 0.0
        %3783 = vmatpush1.msra.mxu0 0.0
        %3784 = vmatprep.subr.mxu0 0.0
        %3785 = vmatpush1.msra.mxu0 0.0
        %3786 = vmatprep.subr.mxu0 0.0
        %3787 = vmatpush1.msra.mxu0 0.0
        %3788 = vmatprep.subr.mxu0 0.0
        %3789 = vmatpush1.msra.mxu0 0.0
        %3790 = vmatprep.subr.mxu0 0.0
        %3791 = vmatpush1.msra.mxu0 0.0
        %3792 = vmatprep.subr.mxu0 0.0
        %3793 = vmatpush1.msra.mxu0 0.0
        %3794 = vmatprep.subr.mxu0 0.0
        %3795 = vmatpush1.msra.mxu0 0.0
        %3796 = vmatprep.subr.mxu0 0.0
        %3797 = vmatpush1.msra.mxu0 0.0
        %3798 = vmatprep.subr.mxu0 0.0
        %3799 = vmatpush1.msra.mxu0 0.0
        %3800 = vmatprep.mubr.f32.mxu0 0.0
        %3801 = vmatmul.mubr.f32.gmra.mrb[0].mxu0 %v3734
        %v3802 = vpop.f32.mrb[0].mxu0
        %v3803 = vadd.f32 0.0, %v3802
        %v3804 = vpop.f32.mrb[0].mxu0
        %3805 = vdwg.mxu0
        %3807 = vrot.lane.b32.xlu0 %v3803, 16
        %v3808 = vpop.permute.xlu0 %3807
        %vm3810 = vcmask 195712
        %3811 = vst.msk [vmem:[#allocation2] sm:$0xff] %vm3810, %v3808
        %3812 = vrot.lane.b32.xlu0 %v3208, 104
        %v3813 = vpop.permute.xlu0 %3812
        %3814 = vrot.lane.b32.xlu0 %v3300, 104
        %v3815 = vpop.permute.xlu0 %3814
        %v3816 = vsel %vm1025, %v3813, 0
        %v3818 = vsel %vm1025, %v3815, 0
        %3820 = vmatprep.subr.mxu0 0.0
        %3821 = vmatpush1.xpose.msra.mxu0 %v3818
        %3822 = vmatprep.subr.mxu0 0.0
        %3823 = vmatpush1.xpose.msra.mxu0 0.0
        %3824 = vmatprep.subr.mxu0 0.0
        %3825 = vmatpush1.xpose.msra.mxu0 0.0
        %3826 = vmatprep.subr.mxu0 0.0
        %3827 = vmatpush1.xpose.msra.mxu0 0.0
        %3828 = vmatprep.subr.mxu0 0.0
        %3829 = vmatpush1.xpose.msra.mxu0 0.0
        %3830 = vmatprep.subr.mxu0 0.0
        %3831 = vmatpush1.xpose.msra.mxu0 0.0
        %3832 = vmatprep.subr.mxu0 0.0
        %3833 = vmatpush1.xpose.msra.mxu0 0.0
        %3834 = vmatprep.subr.mxu0 0.0
        %3835 = vmatpush1.xpose.msra.mxu0 0.0
        %3836 = vmatprep.subr.mxu0 0.0
        %3837 = vmatpush1.xpose.msra.mxu0 0.0
        %3838 = vmatprep.subr.mxu0 0.0
        %3839 = vmatpush1.xpose.msra.mxu0 0.0
        %3840 = vmatprep.subr.mxu0 0.0
        %3841 = vmatpush1.xpose.msra.mxu0 0.0
        %3842 = vmatprep.subr.mxu0 0.0
        %3843 = vmatpush1.xpose.msra.mxu0 0.0
        %3844 = vmatprep.subr.mxu0 0.0
        %3845 = vmatpush1.xpose.msra.mxu0 0.0
        %3846 = vmatprep.subr.mxu0 0.0
        %3847 = vmatpush1.xpose.msra.mxu0 0.0
        %3848 = vmatprep.subr.mxu0 0.0
        %3849 = vmatpush1.xpose.msra.mxu0 0.0
        %3850 = vmatprep.subr.mxu0 0.0
        %3851 = vmatpush1.xpose.msra.mxu0 0.0
        %3852 = vmatprep.subr.mxu0 0.0
        %3853 = vmatpush1.xpose.msra.mxu0 0.0
        %3854 = vmatprep.subr.mxu0 0.0
        %3855 = vmatpush1.xpose.msra.mxu0 0.0
        %3856 = vmatprep.subr.mxu0 0.0
        %3857 = vmatpush1.xpose.msra.mxu0 0.0
        %3858 = vmatprep.subr.mxu0 0.0
        %3859 = vmatpush1.xpose.msra.mxu0 0.0
        %3860 = vmatprep.subr.mxu0 0.0
        %3861 = vmatpush1.xpose.msra.mxu0 0.0
        %3862 = vmatprep.subr.mxu0 0.0
        %3863 = vmatpush1.xpose.msra.mxu0 0.0
        %3864 = vmatprep.subr.mxu0 0.0
        %3865 = vmatpush1.xpose.msra.mxu0 0.0
        %3866 = vmatprep.subr.mxu0 0.0
        %3867 = vmatpush1.xpose.msra.mxu0 0.0
        %3868 = vmatprep.subr.mxu0 0.0
        %3869 = vmatpush1.xpose.msra.mxu0 0.0
        %3870 = vmatprep.subr.mxu0 0.0
        %3871 = vmatpush1.xpose.msra.mxu0 0.0
        %3872 = vmatprep.subr.mxu0 0.0
        %3873 = vmatpush1.xpose.msra.mxu0 0.0
        %3874 = vmatprep.subr.mxu0 0.0
        %3875 = vmatpush1.xpose.msra.mxu0 0.0
        %3876 = vmatprep.subr.mxu0 0.0
        %3877 = vmatpush1.xpose.msra.mxu0 0.0
        %3878 = vmatprep.subr.mxu0 0.0
        %3879 = vmatpush1.xpose.msra.mxu0 0.0
        %3880 = vmatprep.subr.mxu0 0.0
        %3881 = vmatpush1.xpose.msra.mxu0 0.0
        %3882 = vmatprep.subr.mxu0 0.0
        %3883 = vmatpush1.xpose.msra.mxu0 0.0
        %3884 = vmatprep.mubr.f32.mxu0 0.0
        %3885 = vmatmul.mubr.f32.gmra.mrb[0].mxu0 %v3816
        %v3886 = vpop.f32.mrb[0].mxu0
        %v3887 = vadd.f32 0.0, %v3886
        %v3888 = vpop.f32.mrb[0].mxu0
        %3889 = vdwg.mxu0
        %v3890 = vmul.f32 %v3887, 0.35355338
        %v3891 = vsel %vm1025, %v3890, -inf
        %3892 = vmax.xlane.f32.xlu0 %v3891
        %v3893 = vpop.xlane.xlu0 %3892
        %v3894 = vsub.f32 %v3890, %v3893
        %v3895 = vmul.f32 %v3894, 1.442695
        %v3896 = vpow.pop %v3895
        %v3897 = vsel %vm1025, %v3896, 0.0
        %3898 = vadd.xlane.f32.xlu0 %v3897
        %v3899 = vpop.xlane.xlu0 %3898
        %v3900 = vrcp.pop %v3899
        %v3901 = vmul.f32 %v3896, %v3900
        %3902 = vrot.lane.b32.xlu0 %v3300, 72
        %v3903 = vpop.permute.xlu0 %3902
        %v3906 = vsel %vm1025, %v3901, 0
        %3908 = vmatprep.subr.mxu0 0.0
        %3909 = vmatpush1.msra.mxu0 %v3903
        %3910 = vmatprep.subr.mxu0 0.0
        %3911 = vmatpush1.msra.mxu0 0.0
        %3912 = vmatprep.subr.mxu0 0.0
        %3913 = vmatpush1.msra.mxu0 0.0
        %3914 = vmatprep.subr.mxu0 0.0
        %3915 = vmatpush1.msra.mxu0 0.0
        %3916 = vmatprep.subr.mxu0 0.0
        %3917 = vmatpush1.msra.mxu0 0.0
        %3918 = vmatprep.subr.mxu0 0.0
        %3919 = vmatpush1.msra.mxu0 0.0
        %3920 = vmatprep.subr.mxu0 0.0
        %3921 = vmatpush1.msra.mxu0 0.0
        %3922 = vmatprep.subr.mxu0 0.0
        %3923 = vmatpush1.msra.mxu0 0.0
        %3924 = vmatprep.subr.mxu0 0.0
        %3925 = vmatpush1.msra.mxu0 0.0
        %3926 = vmatprep.subr.mxu0 0.0
        %3927 = vmatpush1.msra.mxu0 0.0
        %3928 = vmatprep.subr.mxu0 0.0
        %3929 = vmatpush1.msra.mxu0 0.0
        %3930 = vmatprep.subr.mxu0 0.0
        %3931 = vmatpush1.msra.mxu0 0.0
        %3932 = vmatprep.subr.mxu0 0.0
        %3933 = vmatpush1.msra.mxu0 0.0
        %3934 = vmatprep.subr.mxu0 0.0
        %3935 = vmatpush1.msra.mxu0 0.0
        %3936 = vmatprep.subr.mxu0 0.0
        %3937 = vmatpush1.msra.mxu0 0.0
        %3938 = vmatprep.subr.mxu0 0.0
        %3939 = vmatpush1.msra.mxu0 0.0
        %3940 = vmatprep.subr.mxu0 0.0
        %3941 = vmatpush1.msra.mxu0 0.0
        %3942 = vmatprep.subr.mxu0 0.0
        %3943 = vmatpush1.msra.mxu0 0.0
        %3944 = vmatprep.subr.mxu0 0.0
        %3945 = vmatpush1.msra.mxu0 0.0
        %3946 = vmatprep.subr.mxu0 0.0
        %3947 = vmatpush1.msra.mxu0 0.0
        %3948 = vmatprep.subr.mxu0 0.0
        %3949 = vmatpush1.msra.mxu0 0.0
        %3950 = vmatprep.subr.mxu0 0.0
        %3951 = vmatpush1.msra.mxu0 0.0
        %3952 = vmatprep.subr.mxu0 0.0
        %3953 = vmatpush1.msra.mxu0 0.0
        %3954 = vmatprep.subr.mxu0 0.0
        %3955 = vmatpush1.msra.mxu0 0.0
        %3956 = vmatprep.subr.mxu0 0.0
        %3957 = vmatpush1.msra.mxu0 0.0
        %3958 = vmatprep.subr.mxu0 0.0
        %3959 = vmatpush1.msra.mxu0 0.0
        %3960 = vmatprep.subr.mxu0 0.0
        %3961 = vmatpush1.msra.mxu0 0.0
        %3962 = vmatprep.subr.mxu0 0.0
        %3963 = vmatpush1.msra.mxu0 0.0
        %3964 = vmatprep.subr.mxu0 0.0
        %3965 = vmatpush1.msra.mxu0 0.0
        %3966 = vmatprep.subr.mxu0 0.0
        %3967 = vmatpush1.msra.mxu0 0.0
        %3968 = vmatprep.subr.mxu0 0.0
        %3969 = vmatpush1.msra.mxu0 0.0
        %3970 = vmatprep.subr.mxu0 0.0
        %3971 = vmatpush1.msra.mxu0 0.0
        %3972 = vmatprep.mubr.f32.mxu0 0.0
        %3973 = vmatmul.mubr.f32.gmra.mrb[0].mxu0 %v3906
        %v3974 = vpop.f32.mrb[0].mxu0
        %v3975 = vadd.f32 0.0, %v3974
        %v3976 = vpop.f32.mrb[0].mxu0
        %3977 = vdwg.mxu0
        %3979 = vrot.lane.b32.xlu0 %v3975, 24
        %v3980 = vpop.permute.xlu0 %3979
        %vm3982 = vcmask 261312
        %3983 = vst.msk [vmem:[#allocation2] sm:$0xff] %vm3982, %v3980
        %v3984 = vld [vmem:[#allocation2] sm:$0xff]
        %v3985 = vld [vmem:[%s45] sm:$0xff]
        %v3986 = vld [vmem:[%s45 + $0x8] sm:$0xff]
        %v3987 = vld [vmem:[%s45 + $0x10] sm:$0xff]
        %v3988 = vld [vmem:[%s45 + $0x18] sm:$0xff]
        %v3989 = vld [vmem:[%s47] sm:$0x1]
        %v3991 = vlaneseq
        %v3992 = vshrl.u32 %v3991, 7
        %v3993 = vsub.s32 0, %v3992
        %v3994 = vrot.slane %v3989, %v3993
        %v3997 = vsel %vm1169, %v3984, 0
        %3999 = vmatprep.subr.mxu0 0.0
        %4000 = vmatpush1.msra.mxu0 %v3985
        %4001 = vmatprep.subr.mxu0 0.0
        %4002 = vmatpush1.msra.mxu0 %v3986
        %4003 = vmatprep.subr.mxu0 0.0
        %4004 = vmatpush1.msra.mxu0 %v3987
        %4005 = vmatprep.subr.mxu0 0.0
        %4006 = vmatpush1.msra.mxu0 %v3988
        %4007 = vmatprep.subr.mxu0 0.0
        %4008 = vmatpush1.msra.mxu0 0.0
        %4009 = vmatprep.subr.mxu0 0.0
        %4010 = vmatpush1.msra.mxu0 0.0
        %4011 = vmatprep.subr.mxu0 0.0
        %4012 = vmatpush1.msra.mxu0 0.0
        %4013 = vmatprep.subr.mxu0 0.0
        %4014 = vmatpush1.msra.mxu0 0.0
        %4015 = vmatprep.subr.mxu0 0.0
        %4016 = vmatpush1.msra.mxu0 0.0
        %4017 = vmatprep.subr.mxu0 0.0
        %4018 = vmatpush1.msra.mxu0 0.0
        %4019 = vmatprep.subr.mxu0 0.0
        %4020 = vmatpush1.msra.mxu0 0.0
        %4021 = vmatprep.subr.mxu0 0.0
        %4022 = vmatpush1.msra.mxu0 0.0
        %4023 = vmatprep.subr.mxu0 0.0
        %4024 = vmatpush1.msra.mxu0 0.0
        %4025 = vmatprep.subr.mxu0 0.0
        %4026 = vmatpush1.msra.mxu0 0.0
        %4027 = vmatprep.subr.mxu0 0.0
        %4028 = vmatpush1.msra.mxu0 0.0
        %4029 = vmatprep.subr.mxu0 0.0
        %4030 = vmatpush1.msra.mxu0 0.0
        %4031 = vmatprep.subr.mxu0 0.0
        %4032 = vmatpush1.msra.mxu0 0.0
        %4033 = vmatprep.subr.mxu0 0.0
        %4034 = vmatpush1.msra.mxu0 0.0
        %4035 = vmatprep.subr.mxu0 0.0
        %4036 = vmatpush1.msra.mxu0 0.0
        %4037 = vmatprep.subr.mxu0 0.0
        %4038 = vmatpush1.msra.mxu0 0.0
        %4039 = vmatprep.subr.mxu0 0.0
        %4040 = vmatpush1.msra.mxu0 0.0
        %4041 = vmatprep.subr.mxu0 0.0
        %4042 = vmatpush1.msra.mxu0 0.0
        %4043 = vmatprep.subr.mxu0 0.0
        %4044 = vmatpush1.msra.mxu0 0.0
        %4045 = vmatprep.subr.mxu0 0.0
        %4046 = vmatpush1.msra.mxu0 0.0
        %4047 = vmatprep.subr.mxu0 0.0
        %4048 = vmatpush1.msra.mxu0 0.0
        %4049 = vmatprep.subr.mxu0 0.0
        %4050 = vmatpush1.msra.mxu0 0.0
        %4051 = vmatprep.subr.mxu0 0.0
        %4052 = vmatpush1.msra.mxu0 0.0
        %4053 = vmatprep.subr.mxu0 0.0
        %4054 = vmatpush1.msra.mxu0 0.0
        %4055 = vmatprep.subr.mxu0 0.0
        %4056 = vmatpush1.msra.mxu0 0.0
        %4057 = vmatprep.subr.mxu0 0.0
        %4058 = vmatpush1.msra.mxu0 0.0
        %4059 = vmatprep.subr.mxu0 0.0
        %4060 = vmatpush1.msra.mxu0 0.0
        %4061 = vmatprep.subr.mxu0 0.0
        %4062 = vmatpush1.msra.mxu0 0.0
        %4063 = vmatprep.mubr.f32.mxu0 0.0
        %4064 = vmatmul.mubr.f32.gmra.mrb[0].mxu0 %v3997
        %v4065 = vpop.f32.mrb[0].mxu0
        %v4066 = vadd.f32 %v3994, %v4065
        %v4067 = vpop.f32.mrb[0].mxu0
        %4068 = vdwg.mxu0
        %4069 = vst.msk [vmem:[%s988] sm:$0xff] %vm1169, %v4066
        %v4070 = vld [vmem:[%s49] sm:$0xff]
        %v4071 = vld [vmem:[%s49 + $0x8] sm:$0xff]
        %v4072 = vld [vmem:[%s49 + $0x10] sm:$0xff]
        %v4073 = vld [vmem:[%s49 + $0x18] sm:$0xff]
        %v4074 = vld [vmem:[%s49 + $0x20] sm:$0xff]
        %v4075 = vld [vmem:[%s49 + $0x28] sm:$0xff]
        %v4076 = vld [vmem:[%s49 + $0x30] sm:$0xff]
        %v4077 = vld [vmem:[%s49 + $0x38] sm:$0xff]
        %v4078 = vld [vmem:[%s49 + $0x40] sm:$0xff]
        %v4079 = vld [vmem:[%s49 + $0x48] sm:$0xff]
        %v4080 = vld [vmem:[%s49 + $0x50] sm:$0xff]
        %v4081 = vld [vmem:[%s49 + $0x58] sm:$0xff]
        %v4082 = vld [vmem:[%s51] sm:$0xff]
        %v4083 = vld [vmem:[%s51 + $0x8] sm:$0xff]
        %v4084 = vld [vmem:[%s51 + $0x10] sm:$0xff]
        %v4085 = vld [vmem:[%s51 + $0x18] sm:$0xff]
        %v4087 = vsel %vm1169, %v4066, 0
        %4089 = vmatprep.subr.mxu0 0.0
        %4090 = vmatpush1.msra.mxu0 %v4082
        %4091 = vmatprep.subr.mxu0 0.0
        %4092 = vmatpush1.msra.mxu0 %v4083
        %4093 = vmatprep.subr.mxu0 0.0
        %4094 = vmatpush1.msra.mxu0 %v4084
        %4095 = vmatprep.subr.mxu0 0.0
        %4096 = vmatpush1.msra.mxu0 %v4085
        %4097 = vmatprep.subr.mxu0 0.0
        %4098 = vmatpush1.msra.mxu0 0.0
        %4099 = vmatprep.subr.mxu0 0.0
        %4100 = vmatpush1.msra.mxu0 0.0
        %4101 = vmatprep.subr.mxu0 0.0
        %4102 = vmatpush1.msra.mxu0 0.0
        %4103 = vmatprep.subr.mxu0 0.0
        %4104 = vmatpush1.msra.mxu0 0.0
        %4105 = vmatprep.subr.mxu0 0.0
        %4106 = vmatpush1.msra.mxu0 0.0
        %4107 = vmatprep.subr.mxu0 0.0
        %4108 = vmatpush1.msra.mxu0 0.0
        %4109 = vmatprep.subr.mxu0 0.0
        %4110 = vmatpush1.msra.mxu0 0.0
        %4111 = vmatprep.subr.mxu0 0.0
        %4112 = vmatpush1.msra.mxu0 0.0
        %4113 = vmatprep.subr.mxu0 0.0
        %4114 = vmatpush1.msra.mxu0 0.0
        %4115 = vmatprep.subr.mxu0 0.0
        %4116 = vmatpush1.msra.mxu0 0.0
        %4117 = vmatprep.subr.mxu0 0.0
        %4118 = vmatpush1.msra.mxu0 0.0
        %4119 = vmatprep.subr.mxu0 0.0
        %4120 = vmatpush1.msra.mxu0 0.0
        %4121 = vmatprep.subr.mxu0 0.0
        %4122 = vmatpush1.msra.mxu0 0.0
        %4123 = vmatprep.subr.mxu0 0.0
        %4124 = vmatpush1.msra.mxu0 0.0
        %4125 = vmatprep.subr.mxu0 0.0
        %4126 = vmatpush1.msra.mxu0 0.0
        %4127 = vmatprep.subr.mxu0 0.0
        %4128 = vmatpush1.msra.mxu0 0.0
        %4129 = vmatprep.subr.mxu0 0.0
        %4130 = vmatpush1.msra.mxu0 0.0
        %4131 = vmatprep.subr.mxu0 0.0
        %4132 = vmatpush1.msra.mxu0 0.0
        %4133 = vmatprep.subr.mxu0 0.0
        %4134 = vmatpush1.msra.mxu0 0.0
        %4135 = vmatprep.subr.mxu0 0.0
        %4136 = vmatpush1.msra.mxu0 0.0
        %4137 = vmatprep.subr.mxu0 0.0
        %4138 = vmatpush1.msra.mxu0 0.0
        %4139 = vmatprep.subr.mxu0 0.0
        %4140 = vmatpush1.msra.mxu0 0.0
        %4141 = vmatprep.subr.mxu0 0.0
        %4142 = vmatpush1.msra.mxu0 0.0
        %4143 = vmatprep.subr.mxu0 0.0
        %4144 = vmatpush1.msra.mxu0 0.0
        %4145 = vmatprep.subr.mxu0 0.0
        %4146 = vmatpush1.msra.mxu0 0.0
        %4147 = vmatprep.subr.mxu0 0.0
        %4148 = vmatpush1.msra.mxu0 0.0
        %4149 = vmatprep.subr.mxu0 0.0
        %4150 = vmatpush1.msra.mxu0 0.0
        %4151 = vmatprep.subr.mxu0 0.0
        %4152 = vmatpush1.msra.mxu0 0.0
        %4153 = vmatprep.mubr.f32.mxu0 0.0
        %4154 = vmatmul.mubr.f32.gmra.mrb[0].mxu0 %v4087
        %v4155 = vpop.f32.mrb[0].mxu0
        %v4156 = vadd.f32 0.0, %v4155
        %v4157 = vpop.f32.mrb[0].mxu0
        %4158 = vdwg.mxu0
        %4159 = vmatprep.subr.mxu0 0.0
        %4160 = vmatpush1.msra.mxu0 %v4070
        %4161 = vmatprep.subr.mxu0 0.0
        %4162 = vmatpush1.msra.mxu0 %v4071
        %4163 = vmatprep.subr.mxu0 0.0
        %4164 = vmatpush1.msra.mxu0 %v4072
        %4165 = vmatprep.subr.mxu0 0.0
        %4166 = vmatpush1.msra.mxu0 %v4073
        %4167 = vmatprep.subr.mxu0 0.0
        %4168 = vmatpush1.msra.mxu0 %v4074
        %4169 = vmatprep.subr.mxu0 0.0
        %4170 = vmatpush1.msra.mxu0 %v4075
        %4171 = vmatprep.subr.mxu0 0.0
        %4172 = vmatpush1.msra.mxu0 %v4076
        %4173 = vmatprep.subr.mxu0 0.0
        %4174 = vmatpush1.msra.mxu0 %v4077
        %4175 = vmatprep.subr.mxu0 0.0
        %4176 = vmatpush1.msra.mxu0 %v4078
        %4177 = vmatprep.subr.mxu0 0.0
        %4178 = vmatpush1.msra.mxu0 %v4079
        %4179 = vmatprep.subr.mxu0 0.0
        %4180 = vmatpush1.msra.mxu0 %v4080
        %4181 = vmatprep.subr.mxu0 0.0
        %4182 = vmatpush1.msra.mxu0 %v4081
        %4183 = vmatprep.subr.mxu0 0.0
        %4184 = vmatpush1.msra.mxu0 0.0
        %4185 = vmatprep.subr.mxu0 0.0
        %4186 = vmatpush1.msra.mxu0 0.0
        %4187 = vmatprep.subr.mxu0 0.0
        %4188 = vmatpush1.msra.mxu0 0.0
        %4189 = vmatprep.subr.mxu0 0.0
        %4190 = vmatpush1.msra.mxu0 0.0
        %4191 = vmatprep.subr.mxu0 0.0
        %4192 = vmatpush1.msra.mxu0 0.0
        %4193 = vmatprep.subr.mxu0 0.0
        %4194 = vmatpush1.msra.mxu0 0.0
        %4195 = vmatprep.subr.mxu0 0.0
        %4196 = vmatpush1.msra.mxu0 0.0
        %4197 = vmatprep.subr.mxu0 0.0
        %4198 = vmatpush1.msra.mxu0 0.0
        %4199 = vmatprep.subr.mxu0 0.0
        %4200 = vmatpush1.msra.mxu0 0.0
        %4201 = vmatprep.subr.mxu0 0.0
        %4202 = vmatpush1.msra.mxu0 0.0
        %4203 = vmatprep.subr.mxu0 0.0
        %4204 = vmatpush1.msra.mxu0 0.0
        %4205 = vmatprep.subr.mxu0 0.0
        %4206 = vmatpush1.msra.mxu0 0.0
        %4207 = vmatprep.subr.mxu0 0.0
        %4208 = vmatpush1.msra.mxu0 0.0
        %4209 = vmatprep.subr.mxu0 0.0
        %4210 = vmatpush1.msra.mxu0 0.0
        %4211 = vmatprep.subr.mxu0 0.0
        %4212 = vmatpush1.msra.mxu0 0.0
        %4213 = vmatprep.subr.mxu0 0.0
        %4214 = vmatpush1.msra.mxu0 0.0
        %4215 = vmatprep.subr.mxu0 0.0
        %4216 = vmatpush1.msra.mxu0 0.0
        %4217 = vmatprep.subr.mxu0 0.0
        %4218 = vmatpush1.msra.mxu0 0.0
        %4219 = vmatprep.subr.mxu0 0.0
        %4220 = vmatpush1.msra.mxu0 0.0
        %4221 = vmatprep.subr.mxu0 0.0
        %4222 = vmatpush1.msra.mxu0 0.0
        %4223 = vmatprep.mubr.f32.mxu0 0.0
        %4224 = vmatmul.mubr.f32.gmra.mrb[0].mxu0 %v3139
        %v4225 = vpop.f32.mrb[0].mxu0
        %v4226 = vadd.f32 %v4156, %v4225
        %v4227 = vpop.f32.mrb[0].mxu0
        %4228 = vdwg.mxu0
        %v4229 = vld [vmem:[%s53] sm:$0x1]
        %v4231 = vlaneseq
        %v4232 = vshrl.u32 %v4231, 7
        %v4233 = vsub.s32 0, %v4232
        %v4234 = vrot.slane %v4229, %v4233
        %v4236 = vadd.f32 %v4226, %v4234
        %v4237 = vmax.f32 %v4236, 0.0
        %v4238 = vld [vmem:[%s55] sm:$0xff]
        %v4239 = vld [vmem:[%s55 + $0x8] sm:$0xff]
        %v4240 = vld [vmem:[%s55 + $0x10] sm:$0xff]
        %v4241 = vld [vmem:[%s55 + $0x18] sm:$0xff]
        %v4242 = vld [vmem:[%s55 + $0x20] sm:$0xff]
        %v4243 = vld [vmem:[%s55 + $0x28] sm:$0xff]
        %v4244 = vld [vmem:[%s55 + $0x30] sm:$0xff]
        %v4245 = vld [vmem:[%s55 + $0x38] sm:$0xff]
        %v4246 = vld [vmem:[%s57] sm:$0x1]
        %v4248 = vlaneseq
        %v4249 = vshrl.u32 %v4248, 7
        %v4250 = vsub.s32 0, %v4249
        %v4251 = vrot.slane %v4246, %v4250
        %v4254 = vsel %vm1450, %v4237, 0
        %4256 = vmatprep.subr.mxu0 0.0
        %4257 = vmatpush1.msra.mxu0 %v4238
        %4258 = vmatprep.subr.mxu0 0.0
        %4259 = vmatpush1.msra.mxu0 %v4239
        %4260 = vmatprep.subr.mxu0 0.0
        %4261 = vmatpush1.msra.mxu0 %v4240
        %4262 = vmatprep.subr.mxu0 0.0
        %4263 = vmatpush1.msra.mxu0 %v4241
        %4264 = vmatprep.subr.mxu0 0.0
        %4265 = vmatpush1.msra.mxu0 %v4242
        %4266 = vmatprep.subr.mxu0 0.0
        %4267 = vmatpush1.msra.mxu0 %v4243
        %4268 = vmatprep.subr.mxu0 0.0
        %4269 = vmatpush1.msra.mxu0 %v4244
        %4270 = vmatprep.subr.mxu0 0.0
        %4271 = vmatpush1.msra.mxu0 %v4245
        %4272 = vmatprep.subr.mxu0 0.0
        %4273 = vmatpush1.msra.mxu0 0.0
        %4274 = vmatprep.subr.mxu0 0.0
        %4275 = vmatpush1.msra.mxu0 0.0
        %4276 = vmatprep.subr.mxu0 0.0
        %4277 = vmatpush1.msra.mxu0 0.0
        %4278 = vmatprep.subr.mxu0 0.0
        %4279 = vmatpush1.msra.mxu0 0.0
        %4280 = vmatprep.subr.mxu0 0.0
        %4281 = vmatpush1.msra.mxu0 0.0
        %4282 = vmatprep.subr.mxu0 0.0
        %4283 = vmatpush1.msra.mxu0 0.0
        %4284 = vmatprep.subr.mxu0 0.0
        %4285 = vmatpush1.msra.mxu0 0.0
        %4286 = vmatprep.subr.mxu0 0.0
        %4287 = vmatpush1.msra.mxu0 0.0
        %4288 = vmatprep.subr.mxu0 0.0
        %4289 = vmatpush1.msra.mxu0 0.0
        %4290 = vmatprep.subr.mxu0 0.0
        %4291 = vmatpush1.msra.mxu0 0.0
        %4292 = vmatprep.subr.mxu0 0.0
        %4293 = vmatpush1.msra.mxu0 0.0
        %4294 = vmatprep.subr.mxu0 0.0
        %4295 = vmatpush1.msra.mxu0 0.0
        %4296 = vmatprep.subr.mxu0 0.0
        %4297 = vmatpush1.msra.mxu0 0.0
        %4298 = vmatprep.subr.mxu0 0.0
        %4299 = vmatpush1.msra.mxu0 0.0
        %4300 = vmatprep.subr.mxu0 0.0
        %4301 = vmatpush1.msra.mxu0 0.0
        %4302 = vmatprep.subr.mxu0 0.0
        %4303 = vmatpush1.msra.mxu0 0.0
        %4304 = vmatprep.subr.mxu0 0.0
        %4305 = vmatpush1.msra.mxu0 0.0
        %4306 = vmatprep.subr.mxu0 0.0
        %4307 = vmatpush1.msra.mxu0 0.0
        %4308 = vmatprep.subr.mxu0 0.0
        %4309 = vmatpush1.msra.mxu0 0.0
        %4310 = vmatprep.subr.mxu0 0.0
        %4311 = vmatpush1.msra.mxu0 0.0
        %4312 = vmatprep.subr.mxu0 0.0
        %4313 = vmatpush1.msra.mxu0 0.0
        %4314 = vmatprep.subr.mxu0 0.0
        %4315 = vmatpush1.msra.mxu0 0.0
        %4316 = vmatprep.subr.mxu0 0.0
        %4317 = vmatpush1.msra.mxu0 0.0
        %4318 = vmatprep.subr.mxu0 0.0
        %4319 = vmatpush1.msra.mxu0 0.0
        %4320 = vmatprep.mubr.f32.mxu0 0.0
        %4321 = vmatmul.mubr.f32.gmra.mrb[0].mxu0 %v4254
        %v4322 = vpop.f32.mrb[0].mxu0
        %v4323 = vadd.f32 %v4251, %v4322
        %v4324 = vpop.f32.mrb[0].mxu0
        %4325 = vdwg.mxu0
        %4326 = vst.msk [vmem:[%s981] sm:$0xff] %vm1169, %v4323
        %s4327 = sand.u32 %s725, 1
        %s4328 = scalar_lea.sflag [#allocation6], %s4327
        %s4329 = sand.u32 %s725, 1
        %s4330 = smul.addr %s4329, 8
        %s4331 = scalar_lea.vmem [#allocation5], %s4330
        %s4332 = sand.u32 %s751, 1
        %s4333 = scalar_lea.sflag [#allocation8], %s4332
        %s4334 = sand.u32 %s751, 1
        %s4335 = smul.addr %s4334, 8
        %s4336 = scalar_lea.vmem [#allocation7], %s4335
        // Predicated region
        $region137: #{tatlmp_forward.1} parent=135 // pred_check
          %p4337 = pneg %p735
        $region138: #{tatlmp_forward.1} parent=135 // pred_check_branch
          %4339 = sbr.rel (%p4337) target = $region140
        $region139: #{tatlmp_forward.1} parent=135 // pred_region
          %s4341 = ssub.s32 128, 128
          %4342 = vsyncadd %s4328, %s4341
          %s4343 = smul.addr %s83, 128
          %s4344 = scalar_lea.hbm %s59, %s4343
          %s4346 = sshll.u32 %s4331, 4
          %s4347 = int_to_ptr.vmem [resolvable:$true] %s4346
          %4349 = dma.vmem_to_hbm [thread:$0]  %s4347, 128, %s4344, %s4328
        $region140: #{tatlmp_forward.1} parent=135 // pred_fallthru
          _
        // Predicated region
        $region141: #{tatlmp_forward.1} parent=135 // pred_check
          %p4350 = pneg %p761
        $region142: #{tatlmp_forward.1} parent=135 // pred_check_branch
          %4352 = sbr.rel (%p4350) target = $region144
        $region143: #{tatlmp_forward.1} parent=135 // pred_region
          %s4354 = ssub.s32 128, 128
          %4355 = vsyncadd %s4333, %s4354
          %s4356 = smul.addr %s83, 128
          %s4357 = scalar_lea.hbm %s61, %s4356
          %s4359 = sshll.u32 %s4336, 4
          %s4360 = int_to_ptr.vmem [resolvable:$true] %s4359
          %4362 = dma.vmem_to_hbm [thread:$0]  %s4360, 128, %s4357, %s4333
        $region144: #{tatlmp_forward.1} parent=135 // pred_fallthru
          _
      $region136: #{tatlmp_forward.1} parent=5 // pred_fallthru
        _
      %p4363 = scmp.le.s32.totalorder 2, %s78
      // Predicated region
      $region145: #{tatlmp_forward.1} parent=5 // pred_check
        %p4364 = pneg %p4363
      $region146: #{tatlmp_forward.1} parent=5 // pred_check_branch
        %4366 = sbr.rel (%p4364) target = $region148
      $region147: #{tatlmp_forward.1} parent=5 // pred_region
        %s4367 = ssub.s32 %s78, 2
        // Predicated region
        $region149: #{tatlmp_forward.1} parent=147 // pred_check
          %p4368 = pneg %p741
        $region150: #{tatlmp_forward.1} parent=147 // pred_check_branch
          %4370 = sbr.rel (%p4368) target = $region152
        $region151: #{tatlmp_forward.1} parent=147 // pred_region
          %s4371 = sand.u32 %s726, 1
          %s4372 = scalar_lea.sflag [#allocation6], %s4371
          %s4373 = sand.u32 %s726, 1
          %s4374 = smul.addr %s4373, 8
          %s4375 = scalar_lea.vmem [#allocation5], %s4374
          %4376 = dma.done %s4372, 128
        $region152: #{tatlmp_forward.1} parent=147 // pred_fallthru
          _
        // Predicated region
        $region153: #{tatlmp_forward.1} parent=147 // pred_check
          %p4377 = pneg %p767
        $region154: #{tatlmp_forward.1} parent=147 // pred_check_branch
          %4379 = sbr.rel (%p4377) target = $region156
        $region155: #{tatlmp_forward.1} parent=147 // pred_region
          %s4380 = sand.u32 %s752, 1
          %s4381 = scalar_lea.sflag [#allocation8], %s4380
          %s4382 = sand.u32 %s752, 1
          %s4383 = smul.addr %s4382, 8
          %s4384 = scalar_lea.vmem [#allocation7], %s4383
          %4385 = dma.done %s4381, 128
        $region156: #{tatlmp_forward.1} parent=147 // pred_fallthru
          _
      $region148: #{tatlmp_forward.1} parent=5 // pred_fallthru
        _
    $region6: #{tatlmp_forward.1} parent=1 // loop_footer
      %s82 = sadd.s32 1, %s78
    $region7: #{tatlmp_forward.1} parent=1 // loop_footer_branch
      %77 = sbr.rel target = $region3
    $region8: #{tatlmp_forward.1} parent=1 // loop_exit
      _
    %4386 = vsyncpa [#allocation6], 1
    %s4387 = scalar_lea.sflag [#allocation6], 1
    %4388 = vsyncpa %s4387, 1
    %4389 = vsyncpa [#allocation8], 1
    %s4390 = scalar_lea.sflag [#allocation8], 1
    %4391 = vsyncpa %s4390, 1

</llo_original>
